<compile_context>
chip_gen: v7x
topology: tpu7x:2x2x1
jax: 0.10.0
libtpu: 0.0.40
codegen_flags: <defaults>
</compile_context>

<pallas_src>
import jax
import jax.numpy as jnp
from jax import lax
from jax.experimental import pallas as pl
from jax.experimental.pallas import tpu as pltpu

EMBED_DIM = 300
HIDDEN_DIM = 100
HIDDEN_PAD = 128        # lane-dense padded hidden dim
N_CLASSES = 3
N_CLASSES_PAD = 128     # lane-dense padded class dim
B_TILE = 128            # batch rows per grid step (multiple of 8, MXU-native 128)


def ffnn_kernel(sum_ref, emb_ref, w1_ref, b1_ref, w2_ref, b2_ref, out_ref):
    # --- per-tweet token sum as an MXU matmul ---------------------------------
    # sum_ref: (B_TILE, B_TILE*T) bf16 block-diagonal ones = kron(I, ones(1,T))
    # emb_ref: (B_TILE*T, 300)    bf16 token embeddings, tokens contiguous per tweet
    x = jnp.dot(sum_ref[...], emb_ref[...],
                preferred_element_type=jnp.float32)           # (B_TILE, 300) f32
    x = x.astype(jnp.bfloat16)

    # --- fc1 + relu: (B_TILE, 300) @ (300, 128) + (1, 128) --------------------
    h = jnp.dot(x, w1_ref[...], preferred_element_type=jnp.float32) + b1_ref[...]
    h = jnp.maximum(h, 0.0).astype(jnp.bfloat16)              # kept in registers

    # --- fc2: (B_TILE, 128) @ (128, 128) + (1, 128) ---------------------------
    logits = jnp.dot(h, w2_ref[...], preferred_element_type=jnp.float32) + b2_ref[...]

    # --- masked log_softmax over the valid class lanes ------------------------
    lane = lax.broadcasted_iota(jnp.int32, logits.shape, 1)
    valid = lane < N_CLASSES
    masked = jnp.where(valid, logits, jnp.float32(-1e30))     # finite mask, no inf math
    m = jnp.max(masked, axis=-1, keepdims=True)
    z = masked - m
    ez = jnp.where(valid, jnp.exp(z), 0.0)
    lse = jnp.log(jnp.sum(ez, axis=-1, keepdims=True))
    out_ref[...] = jnp.where(valid, z - lse, 0.0)


def prepare_params(w1, b1, w2, b2):
    """One-time parameter prep: pad to lane-dense dims, cast weights to bf16."""
    w1p = (jnp.zeros((EMBED_DIM, HIDDEN_PAD), jnp.float32)
           .at[:, :HIDDEN_DIM].set(w1).astype(jnp.bfloat16))
    b1p = jnp.zeros((1, HIDDEN_PAD), jnp.float32).at[:, :HIDDEN_DIM].set(b1)
    w2p = (jnp.zeros((HIDDEN_PAD, N_CLASSES_PAD), jnp.float32)
           .at[:HIDDEN_DIM, :N_CLASSES].set(w2).astype(jnp.bfloat16))
    b2p = jnp.zeros((1, N_CLASSES_PAD), jnp.float32).at[:, :N_CLASSES].set(b2)
    return w1p, b1p, w2p, b2p


@jax.jit
def ffnn_forward(token_embeddings, w1p, b1p, w2p, b2p):
    """token_embeddings: (B, T, 300) f32 per-tweet token embeddings.
    Returns (B, 3) log-probabilities."""
    B, T, D = token_embeddings.shape
    assert D == EMBED_DIM

    b_pad = pl.cdiv(B, B_TILE) * B_TILE
    if b_pad != B:
        token_embeddings = jnp.pad(
            token_embeddings, ((0, b_pad - B), (0, 0), (0, 0)))

    # (B_pad*T, 300) bf16 — tokens of each tweet contiguous along the rows.
    emb2d = token_embeddings.reshape(b_pad * T, EMBED_DIM).astype(jnp.bfloat16)
    # Block-diagonal ones matrix: sums T contiguous rows per tweet on the MXU.
    sum_mat = jnp.kron(jnp.eye(B_TILE, dtype=jnp.float32),
                       jnp.ones((1, T), jnp.float32)).astype(jnp.bfloat16)

    out = pl.pallas_call(
        ffnn_kernel,
        out_shape=jax.ShapeDtypeStruct((b_pad, N_CLASSES_PAD), jnp.float32),
        grid_spec=pltpu.PrefetchScalarGridSpec(
            num_scalar_prefetch=0,
            grid=(b_pad // B_TILE,),
            in_specs=[
                pl.BlockSpec((B_TILE, B_TILE * T), lambda i: (0, 0)),       # sum matrix
                pl.BlockSpec((B_TILE * T, EMBED_DIM), lambda i: (i, 0)),    # embeddings
                pl.BlockSpec((EMBED_DIM, HIDDEN_PAD), lambda i: (0, 0)),    # w1
                pl.BlockSpec((1, HIDDEN_PAD), lambda i: (0, 0)),            # b1
                pl.BlockSpec((HIDDEN_PAD, N_CLASSES_PAD), lambda i: (0, 0)),# w2
                pl.BlockSpec((1, N_CLASSES_PAD), lambda i: (0, 0)),         # b2
            ],
            out_specs=pl.BlockSpec((B_TILE, N_CLASSES_PAD), lambda i: (i, 0)),
        ),
        compiler_params=pltpu.CompilerParams(
            dimension_semantics=("parallel",),  # v7x: shard batch tiles across 2 TCs
        ),
    )(sum_mat, emb2d, w1p, b1p, w2p, b2p)

    return out[:B, :N_CLASSES]


def reference_forward_f32(token_embeddings, w1, b1, w2, b2):
    x = jnp.sum(token_embeddings, axis=1)                 # (B, 300)
    h = jnp.maximum(x @ w1 + b1, 0.0)                     # (B, 100)
    logits = h @ w2 + b2                                  # (B, 3)
    return jax.nn.log_softmax(logits, axis=-1)


def reference_forward_matched(token_embeddings, w1p, b1p, w2p, b2p):
    # Same bf16 casts as the kernel (f32 accumulation) for a tight comparison.
    emb = token_embeddings.astype(jnp.bfloat16).astype(jnp.float32)
    x = jnp.sum(emb, axis=1).astype(jnp.bfloat16)
    h = jnp.dot(x, w1p, preferred_element_type=jnp.float32) + b1p
    h = jnp.maximum(h, 0.0).astype(jnp.bfloat16)
    logits = jnp.dot(h, w2p, preferred_element_type=jnp.float32) + b2p
    return jax.nn.log_softmax(logits[:, :N_CLASSES], axis=-1)


if __name__ == "__main__":
    key = jax.random.PRNGKey(0)
    k_embeds, k_w1, k_b1, k_w2, k_b2 = jax.random.split(key, 5)

    # Synthetic "pretrained embeddings" table + a batch of tweets of token indices.
    vocab_size, n_tokens, batch = 64, 8, 200   # batch deliberately not a multiple of B_TILE
    pretrained_embeds = jax.random.normal(k_embeds, (vocab_size, EMBED_DIM), jnp.float32)
    token_indices = (jnp.arange(batch * n_tokens) * 7 + 3) % vocab_size
    # TODO(synk): the word_to_idx dict lookup / OOV skipping of
    # tweet_into_indices_and_embeddings is host-side Python; the embedding
    # gather stays as JAX glue here (it could be fused into the kernel with a
    # PrefetchScalarGridSpec row-gather on the token indices).
    token_embeddings = pretrained_embeds[token_indices].reshape(
        batch, n_tokens, EMBED_DIM)            # (200, 8, 300)

    # Deterministic parameter init (fc1: 300->100, fc2: 100->3), stored (in, out).
    w1 = jax.random.normal(k_w1, (EMBED_DIM, HIDDEN_DIM), jnp.float32) * 0.05
    b1 = jax.random.normal(k_b1, (HIDDEN_DIM,), jnp.float32) * 0.05
    w2 = jax.random.normal(k_w2, (HIDDEN_DIM, N_CLASSES), jnp.float32) * 0.05
    b2 = jax.random.normal(k_b2, (N_CLASSES,), jnp.float32) * 0.05

    # One-time (hoisted out of the call path) parameter padding / bf16 cast.
    w1p, b1p, w2p, b2p = prepare_params(w1, b1, w2, b2)

    out = ffnn_forward(token_embeddings, w1p, b1p, w2p, b2p)
    out = jax.block_until_ready(out)
    assert out.shape == (batch, N_CLASSES)

    # Tight check against a reference with identical bf16/f32 numerics.
    ref_matched = reference_forward_matched(token_embeddings, w1p, b1p, w2p, b2p)
    err_matched = jnp.max(jnp.abs(out - ref_matched))
    assert jnp.allclose(out, ref_matched, atol=5e-3, rtol=5e-3), err_matched

    # Looser sanity check against the pure-f32 PyTorch-equivalent math.
    ref_f32 = reference_forward_f32(token_embeddings, w1, b1, w2, b2)
    err_f32 = jnp.max(jnp.abs(out - ref_f32))
    assert jnp.allclose(out, ref_f32, atol=1e-1, rtol=1e-1), err_f32

    print("KERNEL_OK")
</pallas_src>

<mosaic_0001>
module attributes {stable_mosaic.version = 11 : i64} {
  func.func @ffnn_kernel(%arg0: i32, %arg1: memref<128x1024xbf16, #tpu.memory_space<vmem>>, %arg2: memref<1024x300xbf16, #tpu.memory_space<vmem>>, %arg3: memref<300x128xbf16, #tpu.memory_space<vmem>>, %arg4: memref<1x128xf32, #tpu.memory_space<vmem>>, %arg5: memref<128x128xbf16, #tpu.memory_space<vmem>>, %arg6: memref<1x128xf32, #tpu.memory_space<vmem>>, %arg7: memref<128x128xf32, #tpu.memory_space<vmem>>) attributes {dimension_semantics = [#tpu.dimension_semantics<parallel>], iteration_bounds = array<i64: 2>, scalar_prefetch = 0 : i64, scratch_operands = 0 : i64, tpu.core_type = #tpu.core_type<tc>, window_params = [{pipeline_mode = #tpu.pipeline_mode<synchronous>, transform_indices = @transform_0, window_bounds = array<i64: 128, 1024>}, {transform_indices = @transform_1, window_bounds = array<i64: 1024, 300>}, {pipeline_mode = #tpu.pipeline_mode<synchronous>, transform_indices = @transform_2, window_bounds = array<i64: 300, 128>}, {pipeline_mode = #tpu.pipeline_mode<synchronous>, transform_indices = @transform_3, window_bounds = array<i64: 1, 128>}, {pipeline_mode = #tpu.pipeline_mode<synchronous>, transform_indices = @transform_4, window_bounds = array<i64: 128, 128>}, {pipeline_mode = #tpu.pipeline_mode<synchronous>, transform_indices = @transform_5, window_bounds = array<i64: 1, 128>}, {transform_indices = @transform_6, window_bounds = array<i64: 128, 128>}]} {
    %c0 = arith.constant 0 : index
    %c0_0 = arith.constant 0 : index
    %0 = vector.load %arg1[%c0, %c0_0] : memref<128x1024xbf16, #tpu.memory_space<vmem>>, vector<128x1024xbf16>
    %c0_1 = arith.constant 0 : index
    %c0_2 = arith.constant 0 : index
    %1 = vector.load %arg2[%c0_1, %c0_2] : memref<1024x300xbf16, #tpu.memory_space<vmem>>, vector<1024x300xbf16>
    %cst = arith.constant dense<0.000000e+00> : vector<128x300xf32>
    %2 = tpu.matmul %0, %1, %cst {dimension_numbers = #tpu.dot_dimension_numbers<[1], [0], [0], [1], [0, 0, 1, 1], [], []>} : vector<128x1024xbf16>, vector<1024x300xbf16>, vector<128x300xf32> -> vector<128x300xf32>
    %3 = arith.truncf %2 : vector<128x300xf32> to vector<128x300xbf16>
    %c0_3 = arith.constant 0 : index
    %c0_4 = arith.constant 0 : index
    %4 = vector.load %arg3[%c0_3, %c0_4] : memref<300x128xbf16, #tpu.memory_space<vmem>>, vector<300x128xbf16>
    %cst_5 = arith.constant dense<0.000000e+00> : vector<128x128xf32>
    %5 = tpu.matmul %3, %4, %cst_5 {dimension_numbers = #tpu.dot_dimension_numbers<[1], [0], [0], [1], [0, 0, 1, 1], [], []>} : vector<128x300xbf16>, vector<300x128xbf16>, vector<128x128xf32> -> vector<128x128xf32>
    %c0_6 = arith.constant 0 : index
    %c0_7 = arith.constant 0 : index
    %6 = vector.load %arg4[%c0_6, %c0_7] : memref<1x128xf32, #tpu.memory_space<vmem>>, vector<1x128xf32>
    %7 = vector.broadcast %6 : vector<1x128xf32> to vector<128x128xf32>
    %8 = arith.addf %5, %7 : vector<128x128xf32>
    %cst_8 = arith.constant 0.000000e+00 : f32
    %9 = vector.broadcast %cst_8 : f32 to vector<128x128xf32>
    %10 = arith.maximumf %8, %9 : vector<128x128xf32>
    %11 = arith.truncf %10 : vector<128x128xf32> to vector<128x128xbf16>
    %c0_9 = arith.constant 0 : index
    %c0_10 = arith.constant 0 : index
    %12 = vector.load %arg5[%c0_9, %c0_10] : memref<128x128xbf16, #tpu.memory_space<vmem>>, vector<128x128xbf16>
    %cst_11 = arith.constant dense<0.000000e+00> : vector<128x128xf32>
    %13 = tpu.matmul %11, %12, %cst_11 {dimension_numbers = #tpu.dot_dimension_numbers<[1], [0], [0], [1], [0, 0, 1, 1], [], []>} : vector<128x128xbf16>, vector<128x128xbf16>, vector<128x128xf32> -> vector<128x128xf32>
    %c0_12 = arith.constant 0 : index
    %c0_13 = arith.constant 0 : index
    %14 = vector.load %arg6[%c0_12, %c0_13] : memref<1x128xf32, #tpu.memory_space<vmem>>, vector<1x128xf32>
    %15 = vector.broadcast %14 : vector<1x128xf32> to vector<128x128xf32>
    %16 = arith.addf %13, %15 : vector<128x128xf32>
    %17 = tpu.iota {dimensions = array<i32: 1>} : vector<128x128xi32>
    %c3_i32 = arith.constant 3 : i32
    %18 = vector.broadcast %c3_i32 : i32 to vector<128x128xi32>
    %19 = arith.cmpi slt, %17, %18 : vector<128x128xi32>
    %cst_14 = arith.constant -1.000000e+30 : f32
    %20 = vector.broadcast %cst_14 : f32 to vector<128x128xf32>
    %21 = arith.select %19, %16, %20 : vector<128x128xi1>, vector<128x128xf32>
    %cst_15 = arith.constant dense<0xFF800000> : vector<128xf32>
    %22 = vector.multi_reduction <maximumf>, %21, %cst_15 [1] : vector<128x128xf32> to vector<128xf32>
    %23 = vector.shape_cast %22 : vector<128xf32> to vector<128x1xf32>
    %24 = vector.broadcast %23 : vector<128x1xf32> to vector<128x128xf32>
    %25 = arith.subf %21, %24 : vector<128x128xf32>
    %26 = math.exp %25 : vector<128x128xf32>
    %cst_16 = arith.constant 0.000000e+00 : f32
    %27 = vector.broadcast %cst_16 : f32 to vector<128x128xf32>
    %28 = arith.select %19, %26, %27 : vector<128x128xi1>, vector<128x128xf32>
    %cst_17 = arith.constant dense<0.000000e+00> : vector<128xf32>
    %29 = vector.multi_reduction <add>, %28, %cst_17 [1] : vector<128x128xf32> to vector<128xf32>
    %30 = vector.shape_cast %29 : vector<128xf32> to vector<128x1xf32>
    %31 = math.log %30 : vector<128x1xf32>
    %32 = vector.broadcast %31 : vector<128x1xf32> to vector<128x128xf32>
    %33 = arith.subf %25, %32 : vector<128x128xf32>
    %cst_18 = arith.constant 0.000000e+00 : f32
    %34 = vector.broadcast %cst_18 : f32 to vector<128x128xf32>
    %35 = arith.select %19, %33, %34 : vector<128x128xi1>, vector<128x128xf32>
    %c0_19 = arith.constant 0 : index
    %c0_20 = arith.constant 0 : index
    %36 = vector.load %arg7[%c0_19, %c0_20] : memref<128x128xf32, #tpu.memory_space<vmem>>, vector<128x128xf32>
    tpu.vector_store %arg7[%c0_19, %c0_20], %35 {strides = array<i32>} : memref<128x128xf32, #tpu.memory_space<vmem>>, vector<128x128xf32>,
    return
  }
  func.func @transform_0(%arg0: i32) -> (i32, i32) {
    %c0_i32 = arith.constant 0 : i32
    %c0_i32_0 = arith.constant 0 : i32
    %c0_i32_1 = arith.constant 0 : i32
    return %c0_i32, %c0_i32_0 : i32, i32
  }
  func.func @transform_1(%arg0: i32) -> (i32, i32) {
    %c0_i32 = arith.constant 0 : i32
    %c0_i32_0 = arith.constant 0 : i32
    return %arg0, %c0_i32 : i32, i32
  }
  func.func @transform_2(%arg0: i32) -> (i32, i32) {
    %c0_i32 = arith.constant 0 : i32
    %c0_i32_0 = arith.constant 0 : i32
    %c0_i32_1 = arith.constant 0 : i32
    return %c0_i32, %c0_i32_0 : i32, i32
  }
  func.func @transform_3(%arg0: i32) -> (i32, i32) {
    %c0_i32 = arith.constant 0 : i32
    %c0_i32_0 = arith.constant 0 : i32
    %c0_i32_1 = arith.constant 0 : i32
    return %c0_i32, %c0_i32_0 : i32, i32
  }
  func.func @transform_4(%arg0: i32) -> (i32, i32) {
    %c0_i32 = arith.constant 0 : i32
    %c0_i32_0 = arith.constant 0 : i32
    %c0_i32_1 = arith.constant 0 : i32
    return %c0_i32, %c0_i32_0 : i32, i32
  }
  func.func @transform_5(%arg0: i32) -> (i32, i32) {
    %c0_i32 = arith.constant 0 : i32
    %c0_i32_0 = arith.constant 0 : i32
    %c0_i32_1 = arith.constant 0 : i32
    return %c0_i32, %c0_i32_0 : i32, i32
  }
  func.func @transform_6(%arg0: i32) -> (i32, i32) {
    %c0_i32 = arith.constant 0 : i32
    %c0_i32_0 = arith.constant 0 : i32
    return %arg0, %c0_i32 : i32, i32
  }
}

</mosaic_0001>

<llo_original>
// kernel: ffnn_forward.1
$region0: #{ffnn_forward.1}
  #allocation0 [shape = 'u32[]', space=smem, size = 0x4, offset = 0x4, fixed_abs, tag = 'smem constant byte address 0x4 - core index']
  #allocation1 [shape = 'u32[144,128]{1,0:T(1,128)}', space=vmem, size = 0x12000, scoped, tag = 'internal scratch']
  %s0 = inlined_call_operand.vmem [shape: bf16[128,1024], index: 0, kind: input, shape index: {}]
  %s1 = inlined_call_operand.vmem [shape: bf16[2048,300], index: 1, kind: input, shape index: {}]
  %s2 = inlined_call_operand.vmem [shape: bf16[300,128], index: 2, kind: input, shape index: {}]
  %s3 = inlined_call_operand.vmem [shape: f32[1,128], index: 3, kind: input, shape index: {}]
  %s4 = inlined_call_operand.vmem [shape: bf16[128,128], index: 4, kind: input, shape index: {}]
  %s5 = inlined_call_operand.vmem [shape: f32[1,128], index: 5, kind: input, shape index: {}]
  %s6 = inlined_call_operand.vmem [shape: f32[256,128], index: 6, kind: output, shape index: {}]
  %s7 = sld [smem:[#allocation0]]
  $region57: #{ffnn_forward.1} parent=0
    _
  %s9 = ssub.s32 1, %s7
  %s10 = scalar_select 0, %s9, %s7
  loop: start=0, step=1, limit=4
  $region2: #{ffnn_forward.1} parent=0 // loop_pre_header
    _
  $region3: #{ffnn_forward.1} parent=0 // loop_header
    %s12 = sphi 0, %s16
    %p13 = scmp.ge.s32.totalorder %s12, 4
    %s20 = sphi 0, %s20
    %s22 = sphi 0, %s20
    %s23 = sphi 0, %s22
    %s37 = sphi 0, %s23
    %s43 = sphi 0, %s45
    %s46 = sphi 0, %s43
    %s47 = sphi 0, %s46
    %s63 = sphi 0, %s47
    %s67 = sphi 0, %s67
    %s69 = sphi 0, %s67
    %s70 = sphi 0, %s69
    %s84 = sphi 0, %s70
    %s88 = sphi 0, %s88
    %s90 = sphi 0, %s88
    %s91 = sphi 0, %s90
    %s105 = sphi 0, %s91
    %s109 = sphi 0, %s109
    %s111 = sphi 0, %s109
    %s112 = sphi 0, %s111
    %s126 = sphi 0, %s112
    %s130 = sphi 0, %s130
    %s132 = sphi 0, %s130
    %s133 = sphi 0, %s132
    %s147 = sphi 0, %s133
    %s153 = sphi 0, %s155
    %s156 = sphi 0, %s153
    %s157 = sphi 0, %s156
    %s173 = sphi 0, %s157
  $region4: #{ffnn_forward.1} parent=0 // loop_header_branch
    %15 = sbr.rel (%p13) target = $region8
  $region5: #{ffnn_forward.1} parent=0 // loop_body
    %s17 = ssub.s32 %s12, 1
    %s18 = ssub.s32 %s12, 2
    %s19 = sadd.s32 %s12, 1
    %s21 = sadd.s32 %s20, 1
    %p24 = scmp.eq.s32.totalorder %s12, 1
    %p25 = scmp.ne.s32.totalorder %s20, %s22
    %p26 = scmp.eq.s32.totalorder %s12, 0
    %p27 = por %p25, %p26
    %p28 = scmp.ne.s32.totalorder %s20, %s22
    %p29 = scmp.eq.s32.totalorder %s17, 1
    %p30 = por %p28, %p29
    %p31 = scmp.ne.s32.totalorder %s22, %s23
    %p32 = scmp.eq.s32.totalorder %s17, 0
    %p33 = por %p31, %p32
    %p34 = scmp.ne.s32.totalorder %s22, %s23
    %p35 = scmp.eq.s32.totalorder %s18, 1
    %p36 = por %p34, %p35
    %p38 = scmp.ne.s32.totalorder %s23, %s37
    %p39 = scmp.eq.s32.totalorder %s18, 0
    %p40 = por %p38, %p39
    %s41 = ssub.s32 %s12, %s19
    %p42 = scmp.eq.s32.totalorder %s41, 0
    %s44 = sadd.s32 %s43, 1
    %s45 = scalar_select %p42, %s43, %s44
    %p48 = pneg %p42
    %p49 = scmp.eq.s32.totalorder %s12, 1
    %p50 = por %p48, %p49
    %p51 = scmp.ne.s32.totalorder %s43, %s46
    %p52 = scmp.eq.s32.totalorder %s12, 0
    %p53 = por %p51, %p52
    %p54 = scmp.ne.s32.totalorder %s43, %s46
    %p55 = scmp.eq.s32.totalorder %s17, 1
    %p56 = por %p54, %p55
    %p57 = scmp.ne.s32.totalorder %s46, %s47
    %p58 = scmp.eq.s32.totalorder %s17, 0
    %p59 = por %p57, %p58
    %p60 = scmp.ne.s32.totalorder %s46, %s47
    %p61 = scmp.eq.s32.totalorder %s18, 1
    %p62 = por %p60, %p61
    %p64 = scmp.ne.s32.totalorder %s47, %s63
    %p65 = scmp.eq.s32.totalorder %s18, 0
    %p66 = por %p64, %p65
    %s68 = sadd.s32 %s67, 1
    %p71 = scmp.eq.s32.totalorder %s12, 1
    %p72 = scmp.ne.s32.totalorder %s67, %s69
    %p73 = scmp.eq.s32.totalorder %s12, 0
    %p74 = por %p72, %p73
    %p75 = scmp.ne.s32.totalorder %s67, %s69
    %p76 = scmp.eq.s32.totalorder %s17, 1
    %p77 = por %p75, %p76
    %p78 = scmp.ne.s32.totalorder %s69, %s70
    %p79 = scmp.eq.s32.totalorder %s17, 0
    %p80 = por %p78, %p79
    %p81 = scmp.ne.s32.totalorder %s69, %s70
    %p82 = scmp.eq.s32.totalorder %s18, 1
    %p83 = por %p81, %p82
    %p85 = scmp.ne.s32.totalorder %s70, %s84
    %p86 = scmp.eq.s32.totalorder %s18, 0
    %p87 = por %p85, %p86
    %s89 = sadd.s32 %s88, 1
    %p92 = scmp.eq.s32.totalorder %s12, 1
    %p93 = scmp.ne.s32.totalorder %s88, %s90
    %p94 = scmp.eq.s32.totalorder %s12, 0
    %p95 = por %p93, %p94
    %p96 = scmp.ne.s32.totalorder %s88, %s90
    %p97 = scmp.eq.s32.totalorder %s17, 1
    %p98 = por %p96, %p97
    %p99 = scmp.ne.s32.totalorder %s90, %s91
    %p100 = scmp.eq.s32.totalorder %s17, 0
    %p101 = por %p99, %p100
    %p102 = scmp.ne.s32.totalorder %s90, %s91
    %p103 = scmp.eq.s32.totalorder %s18, 1
    %p104 = por %p102, %p103
    %p106 = scmp.ne.s32.totalorder %s91, %s105
    %p107 = scmp.eq.s32.totalorder %s18, 0
    %p108 = por %p106, %p107
    %s110 = sadd.s32 %s109, 1
    %p113 = scmp.eq.s32.totalorder %s12, 1
    %p114 = scmp.ne.s32.totalorder %s109, %s111
    %p115 = scmp.eq.s32.totalorder %s12, 0
    %p116 = por %p114, %p115
    %p117 = scmp.ne.s32.totalorder %s109, %s111
    %p118 = scmp.eq.s32.totalorder %s17, 1
    %p119 = por %p117, %p118
    %p120 = scmp.ne.s32.totalorder %s111, %s112
    %p121 = scmp.eq.s32.totalorder %s17, 0
    %p122 = por %p120, %p121
    %p123 = scmp.ne.s32.totalorder %s111, %s112
    %p124 = scmp.eq.s32.totalorder %s18, 1
    %p125 = por %p123, %p124
    %p127 = scmp.ne.s32.totalorder %s112, %s126
    %p128 = scmp.eq.s32.totalorder %s18, 0
    %p129 = por %p127, %p128
    %s131 = sadd.s32 %s130, 1
    %p134 = scmp.eq.s32.totalorder %s12, 1
    %p135 = scmp.ne.s32.totalorder %s130, %s132
    %p136 = scmp.eq.s32.totalorder %s12, 0
    %p137 = por %p135, %p136
    %p138 = scmp.ne.s32.totalorder %s130, %s132
    %p139 = scmp.eq.s32.totalorder %s17, 1
    %p140 = por %p138, %p139
    %p141 = scmp.ne.s32.totalorder %s132, %s133
    %p142 = scmp.eq.s32.totalorder %s17, 0
    %p143 = por %p141, %p142
    %p144 = scmp.ne.s32.totalorder %s132, %s133
    %p145 = scmp.eq.s32.totalorder %s18, 1
    %p146 = por %p144, %p145
    %p148 = scmp.ne.s32.totalorder %s133, %s147
    %p149 = scmp.eq.s32.totalorder %s18, 0
    %p150 = por %p148, %p149
    %s151 = ssub.s32 %s12, %s19
    %p152 = scmp.eq.s32.totalorder %s151, 0
    %s154 = sadd.s32 %s153, 1
    %s155 = scalar_select %p152, %s153, %s154
    %p158 = pneg %p152
    %p159 = scmp.eq.s32.totalorder %s12, 1
    %p160 = por %p158, %p159
    %p161 = scmp.ne.s32.totalorder %s153, %s156
    %p162 = scmp.eq.s32.totalorder %s12, 0
    %p163 = por %p161, %p162
    %p164 = scmp.ne.s32.totalorder %s153, %s156
    %p165 = scmp.eq.s32.totalorder %s17, 1
    %p166 = por %p164, %p165
    %p167 = scmp.ne.s32.totalorder %s156, %s157
    %p168 = scmp.eq.s32.totalorder %s17, 0
    %p169 = por %p167, %p168
    %p170 = scmp.ne.s32.totalorder %s156, %s157
    %p171 = scmp.eq.s32.totalorder %s18, 1
    %p172 = por %p170, %p171
    %p174 = scmp.ne.s32.totalorder %s157, %s173
    %p175 = scmp.eq.s32.totalorder %s18, 0
    %p176 = por %p174, %p175
    %p177 = scmp.le.s32.totalorder 1, %s12
    %p178 = scmp.lt.s32.totalorder %s12, 3
    %p179 = pnand %p177, %p178
    %p180 = pneg %p179
    // Predicated region
    $region9: #{ffnn_forward.1} parent=5 // pred_check
      _
    $region10: #{ffnn_forward.1} parent=5 // pred_check_branch
      %182 = sbr.rel (%p179) target = $region12
    $region11: #{ffnn_forward.1} parent=5 // pred_region
      %s183 = ssub.s32 %s12, 1
      // Predicated region
      $region13: #{ffnn_forward.1} parent=11 // pred_check
        %p184 = pneg %p33
      $region14: #{ffnn_forward.1} parent=11 // pred_check_branch
        %186 = sbr.rel (%p184) target = $region16
      $region15: #{ffnn_forward.1} parent=11 // pred_region
        _
      $region16: #{ffnn_forward.1} parent=11 // pred_fallthru
        _
      // Predicated region
      $region17: #{ffnn_forward.1} parent=11 // pred_check
        %p187 = pneg %p80
      $region18: #{ffnn_forward.1} parent=11 // pred_check_branch
        %189 = sbr.rel (%p187) target = $region20
      $region19: #{ffnn_forward.1} parent=11 // pred_region
        _
      $region20: #{ffnn_forward.1} parent=11 // pred_fallthru
        _
      // Predicated region
      $region21: #{ffnn_forward.1} parent=11 // pred_check
        %p190 = pneg %p101
      $region22: #{ffnn_forward.1} parent=11 // pred_check_branch
        %192 = sbr.rel (%p190) target = $region24
      $region23: #{ffnn_forward.1} parent=11 // pred_region
        _
      $region24: #{ffnn_forward.1} parent=11 // pred_fallthru
        _
      // Predicated region
      $region25: #{ffnn_forward.1} parent=11 // pred_check
        %p193 = pneg %p122
      $region26: #{ffnn_forward.1} parent=11 // pred_check_branch
        %195 = sbr.rel (%p193) target = $region28
      $region27: #{ffnn_forward.1} parent=11 // pred_region
        _
      $region28: #{ffnn_forward.1} parent=11 // pred_fallthru
        _
      // Predicated region
      $region29: #{ffnn_forward.1} parent=11 // pred_check
        %p196 = pneg %p143
      $region30: #{ffnn_forward.1} parent=11 // pred_check_branch
        %198 = sbr.rel (%p196) target = $region32
      $region31: #{ffnn_forward.1} parent=11 // pred_region
        _
      $region32: #{ffnn_forward.1} parent=11 // pred_fallthru
        _
    $region12: #{ffnn_forward.1} parent=5 // pred_fallthru
      _
    %p199 = scmp.lt.s32.totalorder %s12, 2
    // Predicated region
    $region33: #{ffnn_forward.1} parent=5 // pred_check
      %p200 = pneg %p199
    $region34: #{ffnn_forward.1} parent=5 // pred_check_branch
      %202 = sbr.rel (%p200) target = $region36
    $region35: #{ffnn_forward.1} parent=5 // pred_region
      // Predicated region
      $region37: #{ffnn_forward.1} parent=35 // pred_check
        %p203 = pneg %p53
      $region38: #{ffnn_forward.1} parent=35 // pred_check_branch
        %205 = sbr.rel (%p203) target = $region40
      $region39: #{ffnn_forward.1} parent=35 // pred_region
        %s206 = smul.u32 128, %s12
        %p207 = scmp.lt.s32.totalorder %s206, 255
        %s208 = scalar_select %p207, %s206, 255
        %s209 = smul.addr %s208, 3
        %s210 = smul.addr %s209, 4
        %s211 = scalar_lea.vmem %s1, %s210
        %s212 = smul.u32 128, %s12
      $region40: #{ffnn_forward.1} parent=35 // pred_fallthru
        _
    $region36: #{ffnn_forward.1} parent=5 // pred_fallthru
      _
    %p213 = scmp.le.s32.totalorder 1, %s12
    %p214 = scmp.lt.s32.totalorder %s12, 3
    %p215 = pnand %p213, %p214
    %p216 = pneg %p215
    // Predicated region
    $region41: #{ffnn_forward.1} parent=5 // pred_check
      _
    $region42: #{ffnn_forward.1} parent=5 // pred_check_branch
      %218 = sbr.rel (%p215) target = $region44
    $region43: #{ffnn_forward.1} parent=5 // pred_region
      %s219 = ssub.s32 %s12, 1
      %p220 = pneg %p33
      %p221 = pneg %p30
      %s222 = smul.u32 128, %s17
      %p223 = scmp.lt.s32.totalorder %s222, 255
      %s224 = scalar_select %p223, %s222, 255
      %s225 = smul.addr %s224, 3
      %s226 = smul.addr %s225, 4
      %s227 = scalar_lea.vmem %s1, %s226
      %p228 = pneg %p59
      %p229 = pneg %p56
      %p230 = pneg %p80
      %p231 = pneg %p77
      %p232 = pneg %p101
      %p233 = pneg %p98
      %p234 = pneg %p122
      %p235 = pneg %p119
      %p236 = pneg %p143
      %p237 = pneg %p140
      %p238 = pneg %p169
      %p239 = pneg %p166
      %s240 = smul.u32 16, %s17
      %p241 = scmp.lt.s32.totalorder %s240, 31
      %s242 = scalar_select %p241, %s240, 31
      %s243 = smul.addr %s242, 8
      %s244 = scalar_lea.vmem %s6, %s243
      %s245 = smul.u32 128, %s17
      %p246 = scmp.lt.s32.totalorder %s245, 255
      %s247 = scalar_select %p246, %s245, 255
      %s248 = smul.addr %s247, 3
      %s249 = smul.addr %s248, 4
      %s250 = scalar_lea.vmem %s1, %s249
      %s251 = smul.u32 128, %s17
      %s252 = smul.u32 16, %s17
      %p253 = scmp.lt.s32.totalorder %s252, 31
      %s254 = scalar_select %p253, %s252, 31
      %s255 = smul.addr %s254, 8
      %s256 = scalar_lea.vmem %s6, %s255
      %s257 = smul.u32 16, %s17
      %v259 = vld [vmem:[%s0] sm:$0xff]
      %v260 = vld [vmem:[%s0 + $0x8] sm:$0xff]
      %v261 = vld [vmem:[%s0 + $0x10] sm:$0xff]
      %v262 = vld [vmem:[%s0 + $0x18] sm:$0xff]
      %v263 = vld [vmem:[%s0 + $0x20] sm:$0xff]
      %v264 = vld [vmem:[%s0 + $0x28] sm:$0xff]
      %v265 = vld [vmem:[%s0 + $0x30] sm:$0xff]
      %v266 = vld [vmem:[%s0 + $0x38] sm:$0xff]
      %v267 = vld [vmem:[%s0 + $0x40] sm:$0xff]
      %v268 = vld [vmem:[%s0 + $0x48] sm:$0xff]
      %v269 = vld [vmem:[%s0 + $0x50] sm:$0xff]
      %v270 = vld [vmem:[%s0 + $0x58] sm:$0xff]
      %v271 = vld [vmem:[%s0 + $0x60] sm:$0xff]
      %v272 = vld [vmem:[%s0 + $0x68] sm:$0xff]
      %v273 = vld [vmem:[%s0 + $0x70] sm:$0xff]
      %v274 = vld [vmem:[%s0 + $0x78] sm:$0xff]
      %v275 = vld [vmem:[%s0 + $0x80] sm:$0xff]
      %v276 = vld [vmem:[%s0 + $0x88] sm:$0xff]
      %v277 = vld [vmem:[%s0 + $0x90] sm:$0xff]
      %v278 = vld [vmem:[%s0 + $0x98] sm:$0xff]
      %v279 = vld [vmem:[%s0 + $0xa0] sm:$0xff]
      %v280 = vld [vmem:[%s0 + $0xa8] sm:$0xff]
      %v281 = vld [vmem:[%s0 + $0xb0] sm:$0xff]
      %v282 = vld [vmem:[%s0 + $0xb8] sm:$0xff]
      %v283 = vld [vmem:[%s0 + $0xc0] sm:$0xff]
      %v284 = vld [vmem:[%s0 + $0xc8] sm:$0xff]
      %v285 = vld [vmem:[%s0 + $0xd0] sm:$0xff]
      %v286 = vld [vmem:[%s0 + $0xd8] sm:$0xff]
      %v287 = vld [vmem:[%s0 + $0xe0] sm:$0xff]
      %v288 = vld [vmem:[%s0 + $0xe8] sm:$0xff]
      %v289 = vld [vmem:[%s0 + $0xf0] sm:$0xff]
      %v290 = vld [vmem:[%s0 + $0xf8] sm:$0xff]
      %v291 = vld [vmem:[%s0 + $0x100] sm:$0xff]
      %v292 = vld [vmem:[%s0 + $0x108] sm:$0xff]
      %v293 = vld [vmem:[%s0 + $0x110] sm:$0xff]
      %v294 = vld [vmem:[%s0 + $0x118] sm:$0xff]
      %v295 = vld [vmem:[%s0 + $0x120] sm:$0xff]
      %v296 = vld [vmem:[%s0 + $0x128] sm:$0xff]
      %v297 = vld [vmem:[%s0 + $0x130] sm:$0xff]
      %v298 = vld [vmem:[%s0 + $0x138] sm:$0xff]
      %v299 = vld [vmem:[%s0 + $0x140] sm:$0xff]
      %v300 = vld [vmem:[%s0 + $0x148] sm:$0xff]
      %v301 = vld [vmem:[%s0 + $0x150] sm:$0xff]
      %v302 = vld [vmem:[%s0 + $0x158] sm:$0xff]
      %v303 = vld [vmem:[%s0 + $0x160] sm:$0xff]
      %v304 = vld [vmem:[%s0 + $0x168] sm:$0xff]
      %v305 = vld [vmem:[%s0 + $0x170] sm:$0xff]
      %v306 = vld [vmem:[%s0 + $0x178] sm:$0xff]
      %v307 = vld [vmem:[%s0 + $0x180] sm:$0xff]
      %v308 = vld [vmem:[%s0 + $0x188] sm:$0xff]
      %v309 = vld [vmem:[%s0 + $0x190] sm:$0xff]
      %v310 = vld [vmem:[%s0 + $0x198] sm:$0xff]
      %v311 = vld [vmem:[%s0 + $0x1a0] sm:$0xff]
      %v312 = vld [vmem:[%s0 + $0x1a8] sm:$0xff]
      %v313 = vld [vmem:[%s0 + $0x1b0] sm:$0xff]
      %v314 = vld [vmem:[%s0 + $0x1b8] sm:$0xff]
      %v315 = vld [vmem:[%s0 + $0x1c0] sm:$0xff]
      %v316 = vld [vmem:[%s0 + $0x1c8] sm:$0xff]
      %v317 = vld [vmem:[%s0 + $0x1d0] sm:$0xff]
      %v318 = vld [vmem:[%s0 + $0x1d8] sm:$0xff]
      %v319 = vld [vmem:[%s0 + $0x1e0] sm:$0xff]
      %v320 = vld [vmem:[%s0 + $0x1e8] sm:$0xff]
      %v321 = vld [vmem:[%s0 + $0x1f0] sm:$0xff]
      %v322 = vld [vmem:[%s0 + $0x1f8] sm:$0xff]
      %v323 = vld [vmem:[%s250] sm:$0xff]
      %v324 = vld [vmem:[%s250 + $0x8] sm:$0xf]
      %v325 = vld [vmem:[%s250 + $0xc] sm:$0xff]
      %v326 = vld [vmem:[%s250 + $0x14] sm:$0xf]
      %v327 = vld [vmem:[%s250 + $0x18] sm:$0xff]
      %v328 = vld [vmem:[%s250 + $0x20] sm:$0xf]
      %v329 = vld [vmem:[%s250 + $0x24] sm:$0xff]
      %v330 = vld [vmem:[%s250 + $0x2c] sm:$0xf]
      %v331 = vld [vmem:[%s250 + $0x30] sm:$0xff]
      %v332 = vld [vmem:[%s250 + $0x38] sm:$0xf]
      %v333 = vld [vmem:[%s250 + $0x3c] sm:$0xff]
      %v334 = vld [vmem:[%s250 + $0x44] sm:$0xf]
      %v335 = vld [vmem:[%s250 + $0x48] sm:$0xff]
      %v336 = vld [vmem:[%s250 + $0x50] sm:$0xf]
      %v337 = vld [vmem:[%s250 + $0x54] sm:$0xff]
      %v338 = vld [vmem:[%s250 + $0x5c] sm:$0xf]
      %v339 = vld [vmem:[%s250 + $0x60] sm:$0xff]
      %v340 = vld [vmem:[%s250 + $0x68] sm:$0xf]
      %v341 = vld [vmem:[%s250 + $0x6c] sm:$0xff]
      %v342 = vld [vmem:[%s250 + $0x74] sm:$0xf]
      %v343 = vld [vmem:[%s250 + $0x78] sm:$0xff]
      %v344 = vld [vmem:[%s250 + $0x80] sm:$0xf]
      %v345 = vld [vmem:[%s250 + $0x84] sm:$0xff]
      %v346 = vld [vmem:[%s250 + $0x8c] sm:$0xf]
      %v347 = vld [vmem:[%s250 + $0x90] sm:$0xff]
      %v348 = vld [vmem:[%s250 + $0x98] sm:$0xf]
      %v349 = vld [vmem:[%s250 + $0x9c] sm:$0xff]
      %v350 = vld [vmem:[%s250 + $0xa4] sm:$0xf]
      %v351 = vld [vmem:[%s250 + $0xa8] sm:$0xff]
      %v352 = vld [vmem:[%s250 + $0xb0] sm:$0xf]
      %v353 = vld [vmem:[%s250 + $0xb4] sm:$0xff]
      %v354 = vld [vmem:[%s250 + $0xbc] sm:$0xf]
      %v355 = vld [vmem:[%s250 + $0xc0] sm:$0xff]
      %v356 = vld [vmem:[%s250 + $0xc8] sm:$0xf]
      %v357 = vld [vmem:[%s250 + $0xcc] sm:$0xff]
      %v358 = vld [vmem:[%s250 + $0xd4] sm:$0xf]
      %v359 = vld [vmem:[%s250 + $0xd8] sm:$0xff]
      %v360 = vld [vmem:[%s250 + $0xe0] sm:$0xf]
      %v361 = vld [vmem:[%s250 + $0xe4] sm:$0xff]
      %v362 = vld [vmem:[%s250 + $0xec] sm:$0xf]
      %v363 = vld [vmem:[%s250 + $0xf0] sm:$0xff]
      %v364 = vld [vmem:[%s250 + $0xf8] sm:$0xf]
      %v365 = vld [vmem:[%s250 + $0xfc] sm:$0xff]
      %v366 = vld [vmem:[%s250 + $0x104] sm:$0xf]
      %v367 = vld [vmem:[%s250 + $0x108] sm:$0xff]
      %v368 = vld [vmem:[%s250 + $0x110] sm:$0xf]
      %v369 = vld [vmem:[%s250 + $0x114] sm:$0xff]
      %v370 = vld [vmem:[%s250 + $0x11c] sm:$0xf]
      %v371 = vld [vmem:[%s250 + $0x120] sm:$0xff]
      %v372 = vld [vmem:[%s250 + $0x128] sm:$0xf]
      %v373 = vld [vmem:[%s250 + $0x12c] sm:$0xff]
      %v374 = vld [vmem:[%s250 + $0x134] sm:$0xf]
      %v375 = vld [vmem:[%s250 + $0x138] sm:$0xff]
      %v376 = vld [vmem:[%s250 + $0x140] sm:$0xf]
      %v377 = vld [vmem:[%s250 + $0x144] sm:$0xff]
      %v378 = vld [vmem:[%s250 + $0x14c] sm:$0xf]
      %v379 = vld [vmem:[%s250 + $0x150] sm:$0xff]
      %v380 = vld [vmem:[%s250 + $0x158] sm:$0xf]
      %v381 = vld [vmem:[%s250 + $0x15c] sm:$0xff]
      %v382 = vld [vmem:[%s250 + $0x164] sm:$0xf]
      %v383 = vld [vmem:[%s250 + $0x168] sm:$0xff]
      %v384 = vld [vmem:[%s250 + $0x170] sm:$0xf]
      %v385 = vld [vmem:[%s250 + $0x174] sm:$0xff]
      %v386 = vld [vmem:[%s250 + $0x17c] sm:$0xf]
      %v387 = vld [vmem:[%s250 + $0x180] sm:$0xff]
      %v388 = vld [vmem:[%s250 + $0x188] sm:$0xf]
      %v389 = vld [vmem:[%s250 + $0x18c] sm:$0xff]
      %v390 = vld [vmem:[%s250 + $0x194] sm:$0xf]
      %v391 = vld [vmem:[%s250 + $0x198] sm:$0xff]
      %v392 = vld [vmem:[%s250 + $0x1a0] sm:$0xf]
      %v393 = vld [vmem:[%s250 + $0x1a4] sm:$0xff]
      %v394 = vld [vmem:[%s250 + $0x1ac] sm:$0xf]
      %v395 = vld [vmem:[%s250 + $0x1b0] sm:$0xff]
      %v396 = vld [vmem:[%s250 + $0x1b8] sm:$0xf]
      %v397 = vld [vmem:[%s250 + $0x1bc] sm:$0xff]
      %v398 = vld [vmem:[%s250 + $0x1c4] sm:$0xf]
      %v399 = vld [vmem:[%s250 + $0x1c8] sm:$0xff]
      %v400 = vld [vmem:[%s250 + $0x1d0] sm:$0xf]
      %v401 = vld [vmem:[%s250 + $0x1d4] sm:$0xff]
      %v402 = vld [vmem:[%s250 + $0x1dc] sm:$0xf]
      %v403 = vld [vmem:[%s250 + $0x1e0] sm:$0xff]
      %v404 = vld [vmem:[%s250 + $0x1e8] sm:$0xf]
      %v405 = vld [vmem:[%s250 + $0x1ec] sm:$0xff]
      %v406 = vld [vmem:[%s250 + $0x1f4] sm:$0xf]
      %v407 = vld [vmem:[%s250 + $0x1f8] sm:$0xff]
      %v408 = vld [vmem:[%s250 + $0x200] sm:$0xf]
      %v409 = vld [vmem:[%s250 + $0x204] sm:$0xff]
      %v410 = vld [vmem:[%s250 + $0x20c] sm:$0xf]
      %v411 = vld [vmem:[%s250 + $0x210] sm:$0xff]
      %v412 = vld [vmem:[%s250 + $0x218] sm:$0xf]
      %v413 = vld [vmem:[%s250 + $0x21c] sm:$0xff]
      %v414 = vld [vmem:[%s250 + $0x224] sm:$0xf]
      %v415 = vld [vmem:[%s250 + $0x228] sm:$0xff]
      %v416 = vld [vmem:[%s250 + $0x230] sm:$0xf]
      %v417 = vld [vmem:[%s250 + $0x234] sm:$0xff]
      %v418 = vld [vmem:[%s250 + $0x23c] sm:$0xf]
      %v419 = vld [vmem:[%s250 + $0x240] sm:$0xff]
      %v420 = vld [vmem:[%s250 + $0x248] sm:$0xf]
      %v421 = vld [vmem:[%s250 + $0x24c] sm:$0xff]
      %v422 = vld [vmem:[%s250 + $0x254] sm:$0xf]
      %v423 = vld [vmem:[%s250 + $0x258] sm:$0xff]
      %v424 = vld [vmem:[%s250 + $0x260] sm:$0xf]
      %v425 = vld [vmem:[%s250 + $0x264] sm:$0xff]
      %v426 = vld [vmem:[%s250 + $0x26c] sm:$0xf]
      %v427 = vld [vmem:[%s250 + $0x270] sm:$0xff]
      %v428 = vld [vmem:[%s250 + $0x278] sm:$0xf]
      %v429 = vld [vmem:[%s250 + $0x27c] sm:$0xff]
      %v430 = vld [vmem:[%s250 + $0x284] sm:$0xf]
      %v431 = vld [vmem:[%s250 + $0x288] sm:$0xff]
      %v432 = vld [vmem:[%s250 + $0x290] sm:$0xf]
      %v433 = vld [vmem:[%s250 + $0x294] sm:$0xff]
      %v434 = vld [vmem:[%s250 + $0x29c] sm:$0xf]
      %v435 = vld [vmem:[%s250 + $0x2a0] sm:$0xff]
      %v436 = vld [vmem:[%s250 + $0x2a8] sm:$0xf]
      %v437 = vld [vmem:[%s250 + $0x2ac] sm:$0xff]
      %v438 = vld [vmem:[%s250 + $0x2b4] sm:$0xf]
      %v439 = vld [vmem:[%s250 + $0x2b8] sm:$0xff]
      %v440 = vld [vmem:[%s250 + $0x2c0] sm:$0xf]
      %v441 = vld [vmem:[%s250 + $0x2c4] sm:$0xff]
      %v442 = vld [vmem:[%s250 + $0x2cc] sm:$0xf]
      %v443 = vld [vmem:[%s250 + $0x2d0] sm:$0xff]
      %v444 = vld [vmem:[%s250 + $0x2d8] sm:$0xf]
      %v445 = vld [vmem:[%s250 + $0x2dc] sm:$0xff]
      %v446 = vld [vmem:[%s250 + $0x2e4] sm:$0xf]
      %v447 = vld [vmem:[%s250 + $0x2e8] sm:$0xff]
      %v448 = vld [vmem:[%s250 + $0x2f0] sm:$0xf]
      %v449 = vld [vmem:[%s250 + $0x2f4] sm:$0xff]
      %v450 = vld [vmem:[%s250 + $0x2fc] sm:$0xf]
      %v451 = vld [vmem:[%s250 + $0x300] sm:$0xff]
      %v452 = vld [vmem:[%s250 + $0x308] sm:$0xf]
      %v453 = vld [vmem:[%s250 + $0x30c] sm:$0xff]
      %v454 = vld [vmem:[%s250 + $0x314] sm:$0xf]
      %v455 = vld [vmem:[%s250 + $0x318] sm:$0xff]
      %v456 = vld [vmem:[%s250 + $0x320] sm:$0xf]
      %v457 = vld [vmem:[%s250 + $0x324] sm:$0xff]
      %v458 = vld [vmem:[%s250 + $0x32c] sm:$0xf]
      %v459 = vld [vmem:[%s250 + $0x330] sm:$0xff]
      %v460 = vld [vmem:[%s250 + $0x338] sm:$0xf]
      %v461 = vld [vmem:[%s250 + $0x33c] sm:$0xff]
      %v462 = vld [vmem:[%s250 + $0x344] sm:$0xf]
      %v463 = vld [vmem:[%s250 + $0x348] sm:$0xff]
      %v464 = vld [vmem:[%s250 + $0x350] sm:$0xf]
      %v465 = vld [vmem:[%s250 + $0x354] sm:$0xff]
      %v466 = vld [vmem:[%s250 + $0x35c] sm:$0xf]
      %v467 = vld [vmem:[%s250 + $0x360] sm:$0xff]
      %v468 = vld [vmem:[%s250 + $0x368] sm:$0xf]
      %v469 = vld [vmem:[%s250 + $0x36c] sm:$0xff]
      %v470 = vld [vmem:[%s250 + $0x374] sm:$0xf]
      %v471 = vld [vmem:[%s250 + $0x378] sm:$0xff]
      %v472 = vld [vmem:[%s250 + $0x380] sm:$0xf]
      %v473 = vld [vmem:[%s250 + $0x384] sm:$0xff]
      %v474 = vld [vmem:[%s250 + $0x38c] sm:$0xf]
      %v475 = vld [vmem:[%s250 + $0x390] sm:$0xff]
      %v476 = vld [vmem:[%s250 + $0x398] sm:$0xf]
      %v477 = vld [vmem:[%s250 + $0x39c] sm:$0xff]
      %v478 = vld [vmem:[%s250 + $0x3a4] sm:$0xf]
      %v479 = vld [vmem:[%s250 + $0x3a8] sm:$0xff]
      %v480 = vld [vmem:[%s250 + $0x3b0] sm:$0xf]
      %v481 = vld [vmem:[%s250 + $0x3b4] sm:$0xff]
      %v482 = vld [vmem:[%s250 + $0x3bc] sm:$0xf]
      %v483 = vld [vmem:[%s250 + $0x3c0] sm:$0xff]
      %v484 = vld [vmem:[%s250 + $0x3c8] sm:$0xf]
      %v485 = vld [vmem:[%s250 + $0x3cc] sm:$0xff]
      %v486 = vld [vmem:[%s250 + $0x3d4] sm:$0xf]
      %v487 = vld [vmem:[%s250 + $0x3d8] sm:$0xff]
      %v488 = vld [vmem:[%s250 + $0x3e0] sm:$0xf]
      %v489 = vld [vmem:[%s250 + $0x3e4] sm:$0xff]
      %v490 = vld [vmem:[%s250 + $0x3ec] sm:$0xf]
      %v491 = vld [vmem:[%s250 + $0x3f0] sm:$0xff]
      %v492 = vld [vmem:[%s250 + $0x3f8] sm:$0xf]
      %v493 = vld [vmem:[%s250 + $0x3fc] sm:$0xff]
      %v494 = vld [vmem:[%s250 + $0x404] sm:$0xf]
      %v495 = vld [vmem:[%s250 + $0x408] sm:$0xff]
      %v496 = vld [vmem:[%s250 + $0x410] sm:$0xf]
      %v497 = vld [vmem:[%s250 + $0x414] sm:$0xff]
      %v498 = vld [vmem:[%s250 + $0x41c] sm:$0xf]
      %v499 = vld [vmem:[%s250 + $0x420] sm:$0xff]
      %v500 = vld [vmem:[%s250 + $0x428] sm:$0xf]
      %v501 = vld [vmem:[%s250 + $0x42c] sm:$0xff]
      %v502 = vld [vmem:[%s250 + $0x434] sm:$0xf]
      %v503 = vld [vmem:[%s250 + $0x438] sm:$0xff]
      %v504 = vld [vmem:[%s250 + $0x440] sm:$0xf]
      %v505 = vld [vmem:[%s250 + $0x444] sm:$0xff]
      %v506 = vld [vmem:[%s250 + $0x44c] sm:$0xf]
      %v507 = vld [vmem:[%s250 + $0x450] sm:$0xff]
      %v508 = vld [vmem:[%s250 + $0x458] sm:$0xf]
      %v509 = vld [vmem:[%s250 + $0x45c] sm:$0xff]
      %v510 = vld [vmem:[%s250 + $0x464] sm:$0xf]
      %v511 = vld [vmem:[%s250 + $0x468] sm:$0xff]
      %v512 = vld [vmem:[%s250 + $0x470] sm:$0xf]
      %v513 = vld [vmem:[%s250 + $0x474] sm:$0xff]
      %v514 = vld [vmem:[%s250 + $0x47c] sm:$0xf]
      %v515 = vld [vmem:[%s250 + $0x480] sm:$0xff]
      %v516 = vld [vmem:[%s250 + $0x488] sm:$0xf]
      %v517 = vld [vmem:[%s250 + $0x48c] sm:$0xff]
      %v518 = vld [vmem:[%s250 + $0x494] sm:$0xf]
      %v519 = vld [vmem:[%s250 + $0x498] sm:$0xff]
      %v520 = vld [vmem:[%s250 + $0x4a0] sm:$0xf]
      %v521 = vld [vmem:[%s250 + $0x4a4] sm:$0xff]
      %v522 = vld [vmem:[%s250 + $0x4ac] sm:$0xf]
      %v523 = vld [vmem:[%s250 + $0x4b0] sm:$0xff]
      %v524 = vld [vmem:[%s250 + $0x4b8] sm:$0xf]
      %v525 = vld [vmem:[%s250 + $0x4bc] sm:$0xff]
      %v526 = vld [vmem:[%s250 + $0x4c4] sm:$0xf]
      %v527 = vld [vmem:[%s250 + $0x4c8] sm:$0xff]
      %v528 = vld [vmem:[%s250 + $0x4d0] sm:$0xf]
      %v529 = vld [vmem:[%s250 + $0x4d4] sm:$0xff]
      %v530 = vld [vmem:[%s250 + $0x4dc] sm:$0xf]
      %v531 = vld [vmem:[%s250 + $0x4e0] sm:$0xff]
      %v532 = vld [vmem:[%s250 + $0x4e8] sm:$0xf]
      %v533 = vld [vmem:[%s250 + $0x4ec] sm:$0xff]
      %v534 = vld [vmem:[%s250 + $0x4f4] sm:$0xf]
      %v535 = vld [vmem:[%s250 + $0x4f8] sm:$0xff]
      %v536 = vld [vmem:[%s250 + $0x500] sm:$0xf]
      %v537 = vld [vmem:[%s250 + $0x504] sm:$0xff]
      %v538 = vld [vmem:[%s250 + $0x50c] sm:$0xf]
      %v539 = vld [vmem:[%s250 + $0x510] sm:$0xff]
      %v540 = vld [vmem:[%s250 + $0x518] sm:$0xf]
      %v541 = vld [vmem:[%s250 + $0x51c] sm:$0xff]
      %v542 = vld [vmem:[%s250 + $0x524] sm:$0xf]
      %v543 = vld [vmem:[%s250 + $0x528] sm:$0xff]
      %v544 = vld [vmem:[%s250 + $0x530] sm:$0xf]
      %v545 = vld [vmem:[%s250 + $0x534] sm:$0xff]
      %v546 = vld [vmem:[%s250 + $0x53c] sm:$0xf]
      %v547 = vld [vmem:[%s250 + $0x540] sm:$0xff]
      %v548 = vld [vmem:[%s250 + $0x548] sm:$0xf]
      %v549 = vld [vmem:[%s250 + $0x54c] sm:$0xff]
      %v550 = vld [vmem:[%s250 + $0x554] sm:$0xf]
      %v551 = vld [vmem:[%s250 + $0x558] sm:$0xff]
      %v552 = vld [vmem:[%s250 + $0x560] sm:$0xf]
      %v553 = vld [vmem:[%s250 + $0x564] sm:$0xff]
      %v554 = vld [vmem:[%s250 + $0x56c] sm:$0xf]
      %v555 = vld [vmem:[%s250 + $0x570] sm:$0xff]
      %v556 = vld [vmem:[%s250 + $0x578] sm:$0xf]
      %v557 = vld [vmem:[%s250 + $0x57c] sm:$0xff]
      %v558 = vld [vmem:[%s250 + $0x584] sm:$0xf]
      %v559 = vld [vmem:[%s250 + $0x588] sm:$0xff]
      %v560 = vld [vmem:[%s250 + $0x590] sm:$0xf]
      %v561 = vld [vmem:[%s250 + $0x594] sm:$0xff]
      %v562 = vld [vmem:[%s250 + $0x59c] sm:$0xf]
      %v563 = vld [vmem:[%s250 + $0x5a0] sm:$0xff]
      %v564 = vld [vmem:[%s250 + $0x5a8] sm:$0xf]
      %v565 = vld [vmem:[%s250 + $0x5ac] sm:$0xff]
      %v566 = vld [vmem:[%s250 + $0x5b4] sm:$0xf]
      %v567 = vld [vmem:[%s250 + $0x5b8] sm:$0xff]
      %v568 = vld [vmem:[%s250 + $0x5c0] sm:$0xf]
      %v569 = vld [vmem:[%s250 + $0x5c4] sm:$0xff]
      %v570 = vld [vmem:[%s250 + $0x5cc] sm:$0xf]
      %v571 = vld [vmem:[%s250 + $0x5d0] sm:$0xff]
      %v572 = vld [vmem:[%s250 + $0x5d8] sm:$0xf]
      %v573 = vld [vmem:[%s250 + $0x5dc] sm:$0xff]
      %v574 = vld [vmem:[%s250 + $0x5e4] sm:$0xf]
      %v575 = vld [vmem:[%s250 + $0x5e8] sm:$0xff]
      %v576 = vld [vmem:[%s250 + $0x5f0] sm:$0xf]
      %v577 = vld [vmem:[%s250 + $0x5f4] sm:$0xff]
      %v578 = vld [vmem:[%s250 + $0x5fc] sm:$0xf]
      %v643 = vunpack.c.l.b16 %v259
      %v644 = vunpack.c.h.b16 %v259
      %v645 = vunpack.c.l.b16 %v260
      %v646 = vunpack.c.h.b16 %v260
      %v647 = vunpack.c.l.b16 %v261
      %v648 = vunpack.c.h.b16 %v261
      %v649 = vunpack.c.l.b16 %v262
      %v650 = vunpack.c.h.b16 %v262
      %v651 = vunpack.c.l.b16 %v263
      %v652 = vunpack.c.h.b16 %v263
      %v653 = vunpack.c.l.b16 %v264
      %v654 = vunpack.c.h.b16 %v264
      %v655 = vunpack.c.l.b16 %v265
      %v656 = vunpack.c.h.b16 %v265
      %v657 = vunpack.c.l.b16 %v266
      %v658 = vunpack.c.h.b16 %v266
      %v659 = vunpack.c.l.b16 %v267
      %v660 = vunpack.c.h.b16 %v267
      %v661 = vunpack.c.l.b16 %v268
      %v662 = vunpack.c.h.b16 %v268
      %v663 = vunpack.c.l.b16 %v269
      %v664 = vunpack.c.h.b16 %v269
      %v665 = vunpack.c.l.b16 %v270
      %v666 = vunpack.c.h.b16 %v270
      %v667 = vunpack.c.l.b16 %v271
      %v668 = vunpack.c.h.b16 %v271
      %v669 = vunpack.c.l.b16 %v272
      %v670 = vunpack.c.h.b16 %v272
      %v671 = vunpack.c.l.b16 %v273
      %v672 = vunpack.c.h.b16 %v273
      %v673 = vunpack.c.l.b16 %v274
      %v674 = vunpack.c.h.b16 %v274
      %v675 = vunpack.c.l.b16 %v275
      %v676 = vunpack.c.h.b16 %v275
      %v677 = vunpack.c.l.b16 %v276
      %v678 = vunpack.c.h.b16 %v276
      %v679 = vunpack.c.l.b16 %v277
      %v680 = vunpack.c.h.b16 %v277
      %v681 = vunpack.c.l.b16 %v278
      %v682 = vunpack.c.h.b16 %v278
      %v683 = vunpack.c.l.b16 %v279
      %v684 = vunpack.c.h.b16 %v279
      %v685 = vunpack.c.l.b16 %v280
      %v686 = vunpack.c.h.b16 %v280
      %v687 = vunpack.c.l.b16 %v281
      %v688 = vunpack.c.h.b16 %v281
      %v689 = vunpack.c.l.b16 %v282
      %v690 = vunpack.c.h.b16 %v282
      %v691 = vunpack.c.l.b16 %v283
      %v692 = vunpack.c.h.b16 %v283
      %v693 = vunpack.c.l.b16 %v284
      %v694 = vunpack.c.h.b16 %v284
      %v695 = vunpack.c.l.b16 %v285
      %v696 = vunpack.c.h.b16 %v285
      %v697 = vunpack.c.l.b16 %v286
      %v698 = vunpack.c.h.b16 %v286
      %v699 = vunpack.c.l.b16 %v287
      %v700 = vunpack.c.h.b16 %v287
      %v701 = vunpack.c.l.b16 %v288
      %v702 = vunpack.c.h.b16 %v288
      %v703 = vunpack.c.l.b16 %v289
      %v704 = vunpack.c.h.b16 %v289
      %v705 = vunpack.c.l.b16 %v290
      %v706 = vunpack.c.h.b16 %v290
      %v707 = vunpack.c.l.b16 %v291
      %v708 = vunpack.c.h.b16 %v291
      %v709 = vunpack.c.l.b16 %v292
      %v710 = vunpack.c.h.b16 %v292
      %v711 = vunpack.c.l.b16 %v293
      %v712 = vunpack.c.h.b16 %v293
      %v713 = vunpack.c.l.b16 %v294
      %v714 = vunpack.c.h.b16 %v294
      %v715 = vunpack.c.l.b16 %v295
      %v716 = vunpack.c.h.b16 %v295
      %v717 = vunpack.c.l.b16 %v296
      %v718 = vunpack.c.h.b16 %v296
      %v719 = vunpack.c.l.b16 %v297
      %v720 = vunpack.c.h.b16 %v297
      %v721 = vunpack.c.l.b16 %v298
      %v722 = vunpack.c.h.b16 %v298
      %v723 = vunpack.c.l.b16 %v299
      %v724 = vunpack.c.h.b16 %v299
      %v725 = vunpack.c.l.b16 %v300
      %v726 = vunpack.c.h.b16 %v300
      %v727 = vunpack.c.l.b16 %v301
      %v728 = vunpack.c.h.b16 %v301
      %v729 = vunpack.c.l.b16 %v302
      %v730 = vunpack.c.h.b16 %v302
      %v731 = vunpack.c.l.b16 %v303
      %v732 = vunpack.c.h.b16 %v303
      %v733 = vunpack.c.l.b16 %v304
      %v734 = vunpack.c.h.b16 %v304
      %v735 = vunpack.c.l.b16 %v305
      %v736 = vunpack.c.h.b16 %v305
      %v737 = vunpack.c.l.b16 %v306
      %v738 = vunpack.c.h.b16 %v306
      %v739 = vunpack.c.l.b16 %v307
      %v740 = vunpack.c.h.b16 %v307
      %v741 = vunpack.c.l.b16 %v308
      %v742 = vunpack.c.h.b16 %v308
      %v743 = vunpack.c.l.b16 %v309
      %v744 = vunpack.c.h.b16 %v309
      %v745 = vunpack.c.l.b16 %v310
      %v746 = vunpack.c.h.b16 %v310
      %v747 = vunpack.c.l.b16 %v311
      %v748 = vunpack.c.h.b16 %v311
      %v749 = vunpack.c.l.b16 %v312
      %v750 = vunpack.c.h.b16 %v312
      %v751 = vunpack.c.l.b16 %v313
      %v752 = vunpack.c.h.b16 %v313
      %v753 = vunpack.c.l.b16 %v314
      %v754 = vunpack.c.h.b16 %v314
      %v755 = vunpack.c.l.b16 %v315
      %v756 = vunpack.c.h.b16 %v315
      %v757 = vunpack.c.l.b16 %v316
      %v758 = vunpack.c.h.b16 %v316
      %v759 = vunpack.c.l.b16 %v317
      %v760 = vunpack.c.h.b16 %v317
      %v761 = vunpack.c.l.b16 %v318
      %v762 = vunpack.c.h.b16 %v318
      %v763 = vunpack.c.l.b16 %v319
      %v764 = vunpack.c.h.b16 %v319
      %v765 = vunpack.c.l.b16 %v320
      %v766 = vunpack.c.h.b16 %v320
      %v767 = vunpack.c.l.b16 %v321
      %v768 = vunpack.c.h.b16 %v321
      %v769 = vunpack.c.l.b16 %v322
      %v770 = vunpack.c.h.b16 %v322
      %v771 = vpack.c.b16 %v651, %v643
      %v772 = vpack.c.b16 %v652, %v644
      %v773 = vpack.c.b16 %v653, %v645
      %v774 = vpack.c.b16 %v654, %v646
      %v775 = vpack.c.b16 %v655, %v647
      %v776 = vpack.c.b16 %v656, %v648
      %v777 = vpack.c.b16 %v657, %v649
      %v778 = vpack.c.b16 %v658, %v650
      %v779 = vpack.c.b16 %v667, %v659
      %v780 = vpack.c.b16 %v668, %v660
      %v781 = vpack.c.b16 %v669, %v661
      %v782 = vpack.c.b16 %v670, %v662
      %v783 = vpack.c.b16 %v671, %v663
      %v784 = vpack.c.b16 %v672, %v664
      %v785 = vpack.c.b16 %v673, %v665
      %v786 = vpack.c.b16 %v674, %v666
      %v787 = vpack.c.b16 %v683, %v675
      %v788 = vpack.c.b16 %v684, %v676
      %v789 = vpack.c.b16 %v685, %v677
      %v790 = vpack.c.b16 %v686, %v678
      %v791 = vpack.c.b16 %v687, %v679
      %v792 = vpack.c.b16 %v688, %v680
      %v793 = vpack.c.b16 %v689, %v681
      %v794 = vpack.c.b16 %v690, %v682
      %v795 = vpack.c.b16 %v699, %v691
      %v796 = vpack.c.b16 %v700, %v692
      %v797 = vpack.c.b16 %v701, %v693
      %v798 = vpack.c.b16 %v702, %v694
      %v799 = vpack.c.b16 %v703, %v695
      %v800 = vpack.c.b16 %v704, %v696
      %v801 = vpack.c.b16 %v705, %v697
      %v802 = vpack.c.b16 %v706, %v698
      %v803 = vpack.c.b16 %v715, %v707
      %v804 = vpack.c.b16 %v716, %v708
      %v805 = vpack.c.b16 %v717, %v709
      %v806 = vpack.c.b16 %v718, %v710
      %v807 = vpack.c.b16 %v719, %v711
      %v808 = vpack.c.b16 %v720, %v712
      %v809 = vpack.c.b16 %v721, %v713
      %v810 = vpack.c.b16 %v722, %v714
      %v811 = vpack.c.b16 %v731, %v723
      %v812 = vpack.c.b16 %v732, %v724
      %v813 = vpack.c.b16 %v733, %v725
      %v814 = vpack.c.b16 %v734, %v726
      %v815 = vpack.c.b16 %v735, %v727
      %v816 = vpack.c.b16 %v736, %v728
      %v817 = vpack.c.b16 %v737, %v729
      %v818 = vpack.c.b16 %v738, %v730
      %v819 = vpack.c.b16 %v747, %v739
      %v820 = vpack.c.b16 %v748, %v740
      %v821 = vpack.c.b16 %v749, %v741
      %v822 = vpack.c.b16 %v750, %v742
      %v823 = vpack.c.b16 %v751, %v743
      %v824 = vpack.c.b16 %v752, %v744
      %v825 = vpack.c.b16 %v753, %v745
      %v826 = vpack.c.b16 %v754, %v746
      %v827 = vpack.c.b16 %v763, %v755
      %v828 = vpack.c.b16 %v764, %v756
      %v829 = vpack.c.b16 %v765, %v757
      %v830 = vpack.c.b16 %v766, %v758
      %v831 = vpack.c.b16 %v767, %v759
      %v832 = vpack.c.b16 %v768, %v760
      %v833 = vpack.c.b16 %v769, %v761
      %v834 = vpack.c.b16 %v770, %v762
      %v1155 = vunpack.c.l.b16 %v323
      %v1156 = vunpack.c.h.b16 %v323
      %v1157 = vunpack.c.l.b16 %v324
      %v1158 = vunpack.c.l.b16 %v325
      %v1159 = vunpack.c.h.b16 %v325
      %v1160 = vunpack.c.l.b16 %v326
      %v1161 = vunpack.c.l.b16 %v327
      %v1162 = vunpack.c.h.b16 %v327
      %v1163 = vunpack.c.l.b16 %v328
      %v1164 = vunpack.c.l.b16 %v329
      %v1165 = vunpack.c.h.b16 %v329
      %v1166 = vunpack.c.l.b16 %v330
      %v1167 = vunpack.c.l.b16 %v331
      %v1168 = vunpack.c.h.b16 %v331
      %v1169 = vunpack.c.l.b16 %v332
      %v1170 = vunpack.c.l.b16 %v333
      %v1171 = vunpack.c.h.b16 %v333
      %v1172 = vunpack.c.l.b16 %v334
      %v1173 = vunpack.c.l.b16 %v335
      %v1174 = vunpack.c.h.b16 %v335
      %v1175 = vunpack.c.l.b16 %v336
      %v1176 = vunpack.c.l.b16 %v337
      %v1177 = vunpack.c.h.b16 %v337
      %v1178 = vunpack.c.l.b16 %v338
      %v1179 = vunpack.c.l.b16 %v339
      %v1180 = vunpack.c.h.b16 %v339
      %v1181 = vunpack.c.l.b16 %v340
      %v1182 = vunpack.c.l.b16 %v341
      %v1183 = vunpack.c.h.b16 %v341
      %v1184 = vunpack.c.l.b16 %v342
      %v1185 = vunpack.c.l.b16 %v343
      %v1186 = vunpack.c.h.b16 %v343
      %v1187 = vunpack.c.l.b16 %v344
      %v1188 = vunpack.c.l.b16 %v345
      %v1189 = vunpack.c.h.b16 %v345
      %v1190 = vunpack.c.l.b16 %v346
      %v1191 = vunpack.c.l.b16 %v347
      %v1192 = vunpack.c.h.b16 %v347
      %v1193 = vunpack.c.l.b16 %v348
      %v1194 = vunpack.c.l.b16 %v349
      %v1195 = vunpack.c.h.b16 %v349
      %v1196 = vunpack.c.l.b16 %v350
      %v1197 = vunpack.c.l.b16 %v351
      %v1198 = vunpack.c.h.b16 %v351
      %v1199 = vunpack.c.l.b16 %v352
      %v1200 = vunpack.c.l.b16 %v353
      %v1201 = vunpack.c.h.b16 %v353
      %v1202 = vunpack.c.l.b16 %v354
      %v1203 = vunpack.c.l.b16 %v355
      %v1204 = vunpack.c.h.b16 %v355
      %v1205 = vunpack.c.l.b16 %v356
      %v1206 = vunpack.c.l.b16 %v357
      %v1207 = vunpack.c.h.b16 %v357
      %v1208 = vunpack.c.l.b16 %v358
      %v1209 = vunpack.c.l.b16 %v359
      %v1210 = vunpack.c.h.b16 %v359
      %v1211 = vunpack.c.l.b16 %v360
      %v1212 = vunpack.c.l.b16 %v361
      %v1213 = vunpack.c.h.b16 %v361
      %v1214 = vunpack.c.l.b16 %v362
      %v1215 = vunpack.c.l.b16 %v363
      %v1216 = vunpack.c.h.b16 %v363
      %v1217 = vunpack.c.l.b16 %v364
      %v1218 = vunpack.c.l.b16 %v365
      %v1219 = vunpack.c.h.b16 %v365
      %v1220 = vunpack.c.l.b16 %v366
      %v1221 = vunpack.c.l.b16 %v367
      %v1222 = vunpack.c.h.b16 %v367
      %v1223 = vunpack.c.l.b16 %v368
      %v1224 = vunpack.c.l.b16 %v369
      %v1225 = vunpack.c.h.b16 %v369
      %v1226 = vunpack.c.l.b16 %v370
      %v1227 = vunpack.c.l.b16 %v371
      %v1228 = vunpack.c.h.b16 %v371
      %v1229 = vunpack.c.l.b16 %v372
      %v1230 = vunpack.c.l.b16 %v373
      %v1231 = vunpack.c.h.b16 %v373
      %v1232 = vunpack.c.l.b16 %v374
      %v1233 = vunpack.c.l.b16 %v375
      %v1234 = vunpack.c.h.b16 %v375
      %v1235 = vunpack.c.l.b16 %v376
      %v1236 = vunpack.c.l.b16 %v377
      %v1237 = vunpack.c.h.b16 %v377
      %v1238 = vunpack.c.l.b16 %v378
      %v1239 = vunpack.c.l.b16 %v379
      %v1240 = vunpack.c.h.b16 %v379
      %v1241 = vunpack.c.l.b16 %v380
      %v1242 = vunpack.c.l.b16 %v381
      %v1243 = vunpack.c.h.b16 %v381
      %v1244 = vunpack.c.l.b16 %v382
      %v1245 = vunpack.c.l.b16 %v383
      %v1246 = vunpack.c.h.b16 %v383
      %v1247 = vunpack.c.l.b16 %v384
      %v1248 = vunpack.c.l.b16 %v385
      %v1249 = vunpack.c.h.b16 %v385
      %v1250 = vunpack.c.l.b16 %v386
      %v1251 = vunpack.c.l.b16 %v387
      %v1252 = vunpack.c.h.b16 %v387
      %v1253 = vunpack.c.l.b16 %v388
      %v1254 = vunpack.c.l.b16 %v389
      %v1255 = vunpack.c.h.b16 %v389
      %v1256 = vunpack.c.l.b16 %v390
      %v1257 = vunpack.c.l.b16 %v391
      %v1258 = vunpack.c.h.b16 %v391
      %v1259 = vunpack.c.l.b16 %v392
      %v1260 = vunpack.c.l.b16 %v393
      %v1261 = vunpack.c.h.b16 %v393
      %v1262 = vunpack.c.l.b16 %v394
      %v1263 = vunpack.c.l.b16 %v395
      %v1264 = vunpack.c.h.b16 %v395
      %v1265 = vunpack.c.l.b16 %v396
      %v1266 = vunpack.c.l.b16 %v397
      %v1267 = vunpack.c.h.b16 %v397
      %v1268 = vunpack.c.l.b16 %v398
      %v1269 = vunpack.c.l.b16 %v399
      %v1270 = vunpack.c.h.b16 %v399
      %v1271 = vunpack.c.l.b16 %v400
      %v1272 = vunpack.c.l.b16 %v401
      %v1273 = vunpack.c.h.b16 %v401
      %v1274 = vunpack.c.l.b16 %v402
      %v1275 = vunpack.c.l.b16 %v403
      %v1276 = vunpack.c.h.b16 %v403
      %v1277 = vunpack.c.l.b16 %v404
      %v1278 = vunpack.c.l.b16 %v405
      %v1279 = vunpack.c.h.b16 %v405
      %v1280 = vunpack.c.l.b16 %v406
      %v1281 = vunpack.c.l.b16 %v407
      %v1282 = vunpack.c.h.b16 %v407
      %v1283 = vunpack.c.l.b16 %v408
      %v1284 = vunpack.c.l.b16 %v409
      %v1285 = vunpack.c.h.b16 %v409
      %v1286 = vunpack.c.l.b16 %v410
      %v1287 = vunpack.c.l.b16 %v411
      %v1288 = vunpack.c.h.b16 %v411
      %v1289 = vunpack.c.l.b16 %v412
      %v1290 = vunpack.c.l.b16 %v413
      %v1291 = vunpack.c.h.b16 %v413
      %v1292 = vunpack.c.l.b16 %v414
      %v1293 = vunpack.c.l.b16 %v415
      %v1294 = vunpack.c.h.b16 %v415
      %v1295 = vunpack.c.l.b16 %v416
      %v1296 = vunpack.c.l.b16 %v417
      %v1297 = vunpack.c.h.b16 %v417
      %v1298 = vunpack.c.l.b16 %v418
      %v1299 = vunpack.c.l.b16 %v419
      %v1300 = vunpack.c.h.b16 %v419
      %v1301 = vunpack.c.l.b16 %v420
      %v1302 = vunpack.c.l.b16 %v421
      %v1303 = vunpack.c.h.b16 %v421
      %v1304 = vunpack.c.l.b16 %v422
      %v1305 = vunpack.c.l.b16 %v423
      %v1306 = vunpack.c.h.b16 %v423
      %v1307 = vunpack.c.l.b16 %v424
      %v1308 = vunpack.c.l.b16 %v425
      %v1309 = vunpack.c.h.b16 %v425
      %v1310 = vunpack.c.l.b16 %v426
      %v1311 = vunpack.c.l.b16 %v427
      %v1312 = vunpack.c.h.b16 %v427
      %v1313 = vunpack.c.l.b16 %v428
      %v1314 = vunpack.c.l.b16 %v429
      %v1315 = vunpack.c.h.b16 %v429
      %v1316 = vunpack.c.l.b16 %v430
      %v1317 = vunpack.c.l.b16 %v431
      %v1318 = vunpack.c.h.b16 %v431
      %v1319 = vunpack.c.l.b16 %v432
      %v1320 = vunpack.c.l.b16 %v433
      %v1321 = vunpack.c.h.b16 %v433
      %v1322 = vunpack.c.l.b16 %v434
      %v1323 = vunpack.c.l.b16 %v435
      %v1324 = vunpack.c.h.b16 %v435
      %v1325 = vunpack.c.l.b16 %v436
      %v1326 = vunpack.c.l.b16 %v437
      %v1327 = vunpack.c.h.b16 %v437
      %v1328 = vunpack.c.l.b16 %v438
      %v1329 = vunpack.c.l.b16 %v439
      %v1330 = vunpack.c.h.b16 %v439
      %v1331 = vunpack.c.l.b16 %v440
      %v1332 = vunpack.c.l.b16 %v441
      %v1333 = vunpack.c.h.b16 %v441
      %v1334 = vunpack.c.l.b16 %v442
      %v1335 = vunpack.c.l.b16 %v443
      %v1336 = vunpack.c.h.b16 %v443
      %v1337 = vunpack.c.l.b16 %v444
      %v1338 = vunpack.c.l.b16 %v445
      %v1339 = vunpack.c.h.b16 %v445
      %v1340 = vunpack.c.l.b16 %v446
      %v1341 = vunpack.c.l.b16 %v447
      %v1342 = vunpack.c.h.b16 %v447
      %v1343 = vunpack.c.l.b16 %v448
      %v1344 = vunpack.c.l.b16 %v449
      %v1345 = vunpack.c.h.b16 %v449
      %v1346 = vunpack.c.l.b16 %v450
      %v1347 = vunpack.c.l.b16 %v451
      %v1348 = vunpack.c.h.b16 %v451
      %v1349 = vunpack.c.l.b16 %v452
      %v1350 = vunpack.c.l.b16 %v453
      %v1351 = vunpack.c.h.b16 %v453
      %v1352 = vunpack.c.l.b16 %v454
      %v1353 = vunpack.c.l.b16 %v455
      %v1354 = vunpack.c.h.b16 %v455
      %v1355 = vunpack.c.l.b16 %v456
      %v1356 = vunpack.c.l.b16 %v457
      %v1357 = vunpack.c.h.b16 %v457
      %v1358 = vunpack.c.l.b16 %v458
      %v1359 = vunpack.c.l.b16 %v459
      %v1360 = vunpack.c.h.b16 %v459
      %v1361 = vunpack.c.l.b16 %v460
      %v1362 = vunpack.c.l.b16 %v461
      %v1363 = vunpack.c.h.b16 %v461
      %v1364 = vunpack.c.l.b16 %v462
      %v1365 = vunpack.c.l.b16 %v463
      %v1366 = vunpack.c.h.b16 %v463
      %v1367 = vunpack.c.l.b16 %v464
      %v1368 = vunpack.c.l.b16 %v465
      %v1369 = vunpack.c.h.b16 %v465
      %v1370 = vunpack.c.l.b16 %v466
      %v1371 = vunpack.c.l.b16 %v467
      %v1372 = vunpack.c.h.b16 %v467
      %v1373 = vunpack.c.l.b16 %v468
      %v1374 = vunpack.c.l.b16 %v469
      %v1375 = vunpack.c.h.b16 %v469
      %v1376 = vunpack.c.l.b16 %v470
      %v1377 = vunpack.c.l.b16 %v471
      %v1378 = vunpack.c.h.b16 %v471
      %v1379 = vunpack.c.l.b16 %v472
      %v1380 = vunpack.c.l.b16 %v473
      %v1381 = vunpack.c.h.b16 %v473
      %v1382 = vunpack.c.l.b16 %v474
      %v1383 = vunpack.c.l.b16 %v475
      %v1384 = vunpack.c.h.b16 %v475
      %v1385 = vunpack.c.l.b16 %v476
      %v1386 = vunpack.c.l.b16 %v477
      %v1387 = vunpack.c.h.b16 %v477
      %v1388 = vunpack.c.l.b16 %v478
      %v1389 = vunpack.c.l.b16 %v479
      %v1390 = vunpack.c.h.b16 %v479
      %v1391 = vunpack.c.l.b16 %v480
      %v1392 = vunpack.c.l.b16 %v481
      %v1393 = vunpack.c.h.b16 %v481
      %v1394 = vunpack.c.l.b16 %v482
      %v1395 = vunpack.c.l.b16 %v483
      %v1396 = vunpack.c.h.b16 %v483
      %v1397 = vunpack.c.l.b16 %v484
      %v1398 = vunpack.c.l.b16 %v485
      %v1399 = vunpack.c.h.b16 %v485
      %v1400 = vunpack.c.l.b16 %v486
      %v1401 = vunpack.c.l.b16 %v487
      %v1402 = vunpack.c.h.b16 %v487
      %v1403 = vunpack.c.l.b16 %v488
      %v1404 = vunpack.c.l.b16 %v489
      %v1405 = vunpack.c.h.b16 %v489
      %v1406 = vunpack.c.l.b16 %v490
      %v1407 = vunpack.c.l.b16 %v491
      %v1408 = vunpack.c.h.b16 %v491
      %v1409 = vunpack.c.l.b16 %v492
      %v1410 = vunpack.c.l.b16 %v493
      %v1411 = vunpack.c.h.b16 %v493
      %v1412 = vunpack.c.l.b16 %v494
      %v1413 = vunpack.c.l.b16 %v495
      %v1414 = vunpack.c.h.b16 %v495
      %v1415 = vunpack.c.l.b16 %v496
      %v1416 = vunpack.c.l.b16 %v497
      %v1417 = vunpack.c.h.b16 %v497
      %v1418 = vunpack.c.l.b16 %v498
      %v1419 = vunpack.c.l.b16 %v499
      %v1420 = vunpack.c.h.b16 %v499
      %v1421 = vunpack.c.l.b16 %v500
      %v1422 = vunpack.c.l.b16 %v501
      %v1423 = vunpack.c.h.b16 %v501
      %v1424 = vunpack.c.l.b16 %v502
      %v1425 = vunpack.c.l.b16 %v503
      %v1426 = vunpack.c.h.b16 %v503
      %v1427 = vunpack.c.l.b16 %v504
      %v1428 = vunpack.c.l.b16 %v505
      %v1429 = vunpack.c.h.b16 %v505
      %v1430 = vunpack.c.l.b16 %v506
      %v1431 = vunpack.c.l.b16 %v507
      %v1432 = vunpack.c.h.b16 %v507
      %v1433 = vunpack.c.l.b16 %v508
      %v1434 = vunpack.c.l.b16 %v509
      %v1435 = vunpack.c.h.b16 %v509
      %v1436 = vunpack.c.l.b16 %v510
      %v1437 = vunpack.c.l.b16 %v511
      %v1438 = vunpack.c.h.b16 %v511
      %v1439 = vunpack.c.l.b16 %v512
      %v1440 = vunpack.c.l.b16 %v513
      %v1441 = vunpack.c.h.b16 %v513
      %v1442 = vunpack.c.l.b16 %v514
      %v1443 = vunpack.c.l.b16 %v515
      %v1444 = vunpack.c.h.b16 %v515
      %v1445 = vunpack.c.l.b16 %v516
      %v1446 = vunpack.c.l.b16 %v517
      %v1447 = vunpack.c.h.b16 %v517
      %v1448 = vunpack.c.l.b16 %v518
      %v1449 = vunpack.c.l.b16 %v519
      %v1450 = vunpack.c.h.b16 %v519
      %v1451 = vunpack.c.l.b16 %v520
      %v1452 = vunpack.c.l.b16 %v521
      %v1453 = vunpack.c.h.b16 %v521
      %v1454 = vunpack.c.l.b16 %v522
      %v1455 = vunpack.c.l.b16 %v523
      %v1456 = vunpack.c.h.b16 %v523
      %v1457 = vunpack.c.l.b16 %v524
      %v1458 = vunpack.c.l.b16 %v525
      %v1459 = vunpack.c.h.b16 %v525
      %v1460 = vunpack.c.l.b16 %v526
      %v1461 = vunpack.c.l.b16 %v527
      %v1462 = vunpack.c.h.b16 %v527
      %v1463 = vunpack.c.l.b16 %v528
      %v1464 = vunpack.c.l.b16 %v529
      %v1465 = vunpack.c.h.b16 %v529
      %v1466 = vunpack.c.l.b16 %v530
      %v1467 = vunpack.c.l.b16 %v531
      %v1468 = vunpack.c.h.b16 %v531
      %v1469 = vunpack.c.l.b16 %v532
      %v1470 = vunpack.c.l.b16 %v533
      %v1471 = vunpack.c.h.b16 %v533
      %v1472 = vunpack.c.l.b16 %v534
      %v1473 = vunpack.c.l.b16 %v535
      %v1474 = vunpack.c.h.b16 %v535
      %v1475 = vunpack.c.l.b16 %v536
      %v1476 = vunpack.c.l.b16 %v537
      %v1477 = vunpack.c.h.b16 %v537
      %v1478 = vunpack.c.l.b16 %v538
      %v1479 = vunpack.c.l.b16 %v539
      %v1480 = vunpack.c.h.b16 %v539
      %v1481 = vunpack.c.l.b16 %v540
      %v1482 = vunpack.c.l.b16 %v541
      %v1483 = vunpack.c.h.b16 %v541
      %v1484 = vunpack.c.l.b16 %v542
      %v1485 = vunpack.c.l.b16 %v543
      %v1486 = vunpack.c.h.b16 %v543
      %v1487 = vunpack.c.l.b16 %v544
      %v1488 = vunpack.c.l.b16 %v545
      %v1489 = vunpack.c.h.b16 %v545
      %v1490 = vunpack.c.l.b16 %v546
      %v1491 = vunpack.c.l.b16 %v547
      %v1492 = vunpack.c.h.b16 %v547
      %v1493 = vunpack.c.l.b16 %v548
      %v1494 = vunpack.c.l.b16 %v549
      %v1495 = vunpack.c.h.b16 %v549
      %v1496 = vunpack.c.l.b16 %v550
      %v1497 = vunpack.c.l.b16 %v551
      %v1498 = vunpack.c.h.b16 %v551
      %v1499 = vunpack.c.l.b16 %v552
      %v1500 = vunpack.c.l.b16 %v553
      %v1501 = vunpack.c.h.b16 %v553
      %v1502 = vunpack.c.l.b16 %v554
      %v1503 = vunpack.c.l.b16 %v555
      %v1504 = vunpack.c.h.b16 %v555
      %v1505 = vunpack.c.l.b16 %v556
      %v1506 = vunpack.c.l.b16 %v557
      %v1507 = vunpack.c.h.b16 %v557
      %v1508 = vunpack.c.l.b16 %v558
      %v1509 = vunpack.c.l.b16 %v559
      %v1510 = vunpack.c.h.b16 %v559
      %v1511 = vunpack.c.l.b16 %v560
      %v1512 = vunpack.c.l.b16 %v561
      %v1513 = vunpack.c.h.b16 %v561
      %v1514 = vunpack.c.l.b16 %v562
      %v1515 = vunpack.c.l.b16 %v563
      %v1516 = vunpack.c.h.b16 %v563
      %v1517 = vunpack.c.l.b16 %v564
      %v1518 = vunpack.c.l.b16 %v565
      %v1519 = vunpack.c.h.b16 %v565
      %v1520 = vunpack.c.l.b16 %v566
      %v1521 = vunpack.c.l.b16 %v567
      %v1522 = vunpack.c.h.b16 %v567
      %v1523 = vunpack.c.l.b16 %v568
      %v1524 = vunpack.c.l.b16 %v569
      %v1525 = vunpack.c.h.b16 %v569
      %v1526 = vunpack.c.l.b16 %v570
      %v1527 = vunpack.c.l.b16 %v571
      %v1528 = vunpack.c.h.b16 %v571
      %v1529 = vunpack.c.l.b16 %v572
      %v1530 = vunpack.c.l.b16 %v573
      %v1531 = vunpack.c.h.b16 %v573
      %v1532 = vunpack.c.l.b16 %v574
      %v1533 = vunpack.c.l.b16 %v575
      %v1534 = vunpack.c.h.b16 %v575
      %v1535 = vunpack.c.l.b16 %v576
      %v1536 = vunpack.c.l.b16 %v577
      %v1537 = vunpack.c.h.b16 %v577
      %v1538 = vunpack.c.l.b16 %v578
      %v1539 = vpack.c.b16 %v1158, %v1155
      %v1540 = vpack.c.b16 %v1159, %v1156
      %v1541 = vpack.c.b16 %v1160, %v1157
      %v1542 = vpack.c.b16 %v1164, %v1161
      %v1543 = vpack.c.b16 %v1165, %v1162
      %v1544 = vpack.c.b16 %v1166, %v1163
      %v1545 = vpack.c.b16 %v1170, %v1167
      %v1546 = vpack.c.b16 %v1171, %v1168
      %v1547 = vpack.c.b16 %v1172, %v1169
      %v1548 = vpack.c.b16 %v1176, %v1173
      %v1549 = vpack.c.b16 %v1177, %v1174
      %v1550 = vpack.c.b16 %v1178, %v1175
      %v1551 = vpack.c.b16 %v1182, %v1179
      %v1552 = vpack.c.b16 %v1183, %v1180
      %v1553 = vpack.c.b16 %v1184, %v1181
      %v1554 = vpack.c.b16 %v1188, %v1185
      %v1555 = vpack.c.b16 %v1189, %v1186
      %v1556 = vpack.c.b16 %v1190, %v1187
      %v1557 = vpack.c.b16 %v1194, %v1191
      %v1558 = vpack.c.b16 %v1195, %v1192
      %v1559 = vpack.c.b16 %v1196, %v1193
      %v1560 = vpack.c.b16 %v1200, %v1197
      %v1561 = vpack.c.b16 %v1201, %v1198
      %v1562 = vpack.c.b16 %v1202, %v1199
      %v1563 = vpack.c.b16 %v1206, %v1203
      %v1564 = vpack.c.b16 %v1207, %v1204
      %v1565 = vpack.c.b16 %v1208, %v1205
      %v1566 = vpack.c.b16 %v1212, %v1209
      %v1567 = vpack.c.b16 %v1213, %v1210
      %v1568 = vpack.c.b16 %v1214, %v1211
      %v1569 = vpack.c.b16 %v1218, %v1215
      %v1570 = vpack.c.b16 %v1219, %v1216
      %v1571 = vpack.c.b16 %v1220, %v1217
      %v1572 = vpack.c.b16 %v1224, %v1221
      %v1573 = vpack.c.b16 %v1225, %v1222
      %v1574 = vpack.c.b16 %v1226, %v1223
      %v1575 = vpack.c.b16 %v1230, %v1227
      %v1576 = vpack.c.b16 %v1231, %v1228
      %v1577 = vpack.c.b16 %v1232, %v1229
      %v1578 = vpack.c.b16 %v1236, %v1233
      %v1579 = vpack.c.b16 %v1237, %v1234
      %v1580 = vpack.c.b16 %v1238, %v1235
      %v1581 = vpack.c.b16 %v1242, %v1239
      %v1582 = vpack.c.b16 %v1243, %v1240
      %v1583 = vpack.c.b16 %v1244, %v1241
      %v1584 = vpack.c.b16 %v1248, %v1245
      %v1585 = vpack.c.b16 %v1249, %v1246
      %v1586 = vpack.c.b16 %v1250, %v1247
      %v1587 = vpack.c.b16 %v1254, %v1251
      %v1588 = vpack.c.b16 %v1255, %v1252
      %v1589 = vpack.c.b16 %v1256, %v1253
      %v1590 = vpack.c.b16 %v1260, %v1257
      %v1591 = vpack.c.b16 %v1261, %v1258
      %v1592 = vpack.c.b16 %v1262, %v1259
      %v1593 = vpack.c.b16 %v1266, %v1263
      %v1594 = vpack.c.b16 %v1267, %v1264
      %v1595 = vpack.c.b16 %v1268, %v1265
      %v1596 = vpack.c.b16 %v1272, %v1269
      %v1597 = vpack.c.b16 %v1273, %v1270
      %v1598 = vpack.c.b16 %v1274, %v1271
      %v1599 = vpack.c.b16 %v1278, %v1275
      %v1600 = vpack.c.b16 %v1279, %v1276
      %v1601 = vpack.c.b16 %v1280, %v1277
      %v1602 = vpack.c.b16 %v1284, %v1281
      %v1603 = vpack.c.b16 %v1285, %v1282
      %v1604 = vpack.c.b16 %v1286, %v1283
      %v1605 = vpack.c.b16 %v1290, %v1287
      %v1606 = vpack.c.b16 %v1291, %v1288
      %v1607 = vpack.c.b16 %v1292, %v1289
      %v1608 = vpack.c.b16 %v1296, %v1293
      %v1609 = vpack.c.b16 %v1297, %v1294
      %v1610 = vpack.c.b16 %v1298, %v1295
      %v1611 = vpack.c.b16 %v1302, %v1299
      %v1612 = vpack.c.b16 %v1303, %v1300
      %v1613 = vpack.c.b16 %v1304, %v1301
      %v1614 = vpack.c.b16 %v1308, %v1305
      %v1615 = vpack.c.b16 %v1309, %v1306
      %v1616 = vpack.c.b16 %v1310, %v1307
      %v1617 = vpack.c.b16 %v1314, %v1311
      %v1618 = vpack.c.b16 %v1315, %v1312
      %v1619 = vpack.c.b16 %v1316, %v1313
      %v1620 = vpack.c.b16 %v1320, %v1317
      %v1621 = vpack.c.b16 %v1321, %v1318
      %v1622 = vpack.c.b16 %v1322, %v1319
      %v1623 = vpack.c.b16 %v1326, %v1323
      %v1624 = vpack.c.b16 %v1327, %v1324
      %v1625 = vpack.c.b16 %v1328, %v1325
      %v1626 = vpack.c.b16 %v1332, %v1329
      %v1627 = vpack.c.b16 %v1333, %v1330
      %v1628 = vpack.c.b16 %v1334, %v1331
      %v1629 = vpack.c.b16 %v1338, %v1335
      %v1630 = vpack.c.b16 %v1339, %v1336
      %v1631 = vpack.c.b16 %v1340, %v1337
      %v1632 = vpack.c.b16 %v1344, %v1341
      %v1633 = vpack.c.b16 %v1345, %v1342
      %v1634 = vpack.c.b16 %v1346, %v1343
      %v1635 = vpack.c.b16 %v1350, %v1347
      %v1636 = vpack.c.b16 %v1351, %v1348
      %v1637 = vpack.c.b16 %v1352, %v1349
      %v1638 = vpack.c.b16 %v1356, %v1353
      %v1639 = vpack.c.b16 %v1357, %v1354
      %v1640 = vpack.c.b16 %v1358, %v1355
      %v1641 = vpack.c.b16 %v1362, %v1359
      %v1642 = vpack.c.b16 %v1363, %v1360
      %v1643 = vpack.c.b16 %v1364, %v1361
      %v1644 = vpack.c.b16 %v1368, %v1365
      %v1645 = vpack.c.b16 %v1369, %v1366
      %v1646 = vpack.c.b16 %v1370, %v1367
      %v1647 = vpack.c.b16 %v1374, %v1371
      %v1648 = vpack.c.b16 %v1375, %v1372
      %v1649 = vpack.c.b16 %v1376, %v1373
      %v1650 = vpack.c.b16 %v1380, %v1377
      %v1651 = vpack.c.b16 %v1381, %v1378
      %v1652 = vpack.c.b16 %v1382, %v1379
      %v1653 = vpack.c.b16 %v1386, %v1383
      %v1654 = vpack.c.b16 %v1387, %v1384
      %v1655 = vpack.c.b16 %v1388, %v1385
      %v1656 = vpack.c.b16 %v1392, %v1389
      %v1657 = vpack.c.b16 %v1393, %v1390
      %v1658 = vpack.c.b16 %v1394, %v1391
      %v1659 = vpack.c.b16 %v1398, %v1395
      %v1660 = vpack.c.b16 %v1399, %v1396
      %v1661 = vpack.c.b16 %v1400, %v1397
      %v1662 = vpack.c.b16 %v1404, %v1401
      %v1663 = vpack.c.b16 %v1405, %v1402
      %v1664 = vpack.c.b16 %v1406, %v1403
      %v1665 = vpack.c.b16 %v1410, %v1407
      %v1666 = vpack.c.b16 %v1411, %v1408
      %v1667 = vpack.c.b16 %v1412, %v1409
      %v1668 = vpack.c.b16 %v1416, %v1413
      %v1669 = vpack.c.b16 %v1417, %v1414
      %v1670 = vpack.c.b16 %v1418, %v1415
      %v1671 = vpack.c.b16 %v1422, %v1419
      %v1672 = vpack.c.b16 %v1423, %v1420
      %v1673 = vpack.c.b16 %v1424, %v1421
      %v1674 = vpack.c.b16 %v1428, %v1425
      %v1675 = vpack.c.b16 %v1429, %v1426
      %v1676 = vpack.c.b16 %v1430, %v1427
      %v1677 = vpack.c.b16 %v1434, %v1431
      %v1678 = vpack.c.b16 %v1435, %v1432
      %v1679 = vpack.c.b16 %v1436, %v1433
      %v1680 = vpack.c.b16 %v1440, %v1437
      %v1681 = vpack.c.b16 %v1441, %v1438
      %v1682 = vpack.c.b16 %v1442, %v1439
      %v1683 = vpack.c.b16 %v1446, %v1443
      %v1684 = vpack.c.b16 %v1447, %v1444
      %v1685 = vpack.c.b16 %v1448, %v1445
      %v1686 = vpack.c.b16 %v1452, %v1449
      %v1687 = vpack.c.b16 %v1453, %v1450
      %v1688 = vpack.c.b16 %v1454, %v1451
      %v1689 = vpack.c.b16 %v1458, %v1455
      %v1690 = vpack.c.b16 %v1459, %v1456
      %v1691 = vpack.c.b16 %v1460, %v1457
      %v1692 = vpack.c.b16 %v1464, %v1461
      %v1693 = vpack.c.b16 %v1465, %v1462
      %v1694 = vpack.c.b16 %v1466, %v1463
      %v1695 = vpack.c.b16 %v1470, %v1467
      %v1696 = vpack.c.b16 %v1471, %v1468
      %v1697 = vpack.c.b16 %v1472, %v1469
      %v1698 = vpack.c.b16 %v1476, %v1473
      %v1699 = vpack.c.b16 %v1477, %v1474
      %v1700 = vpack.c.b16 %v1478, %v1475
      %v1701 = vpack.c.b16 %v1482, %v1479
      %v1702 = vpack.c.b16 %v1483, %v1480
      %v1703 = vpack.c.b16 %v1484, %v1481
      %v1704 = vpack.c.b16 %v1488, %v1485
      %v1705 = vpack.c.b16 %v1489, %v1486
      %v1706 = vpack.c.b16 %v1490, %v1487
      %v1707 = vpack.c.b16 %v1494, %v1491
      %v1708 = vpack.c.b16 %v1495, %v1492
      %v1709 = vpack.c.b16 %v1496, %v1493
      %v1710 = vpack.c.b16 %v1500, %v1497
      %v1711 = vpack.c.b16 %v1501, %v1498
      %v1712 = vpack.c.b16 %v1502, %v1499
      %v1713 = vpack.c.b16 %v1506, %v1503
      %v1714 = vpack.c.b16 %v1507, %v1504
      %v1715 = vpack.c.b16 %v1508, %v1505
      %v1716 = vpack.c.b16 %v1512, %v1509
      %v1717 = vpack.c.b16 %v1513, %v1510
      %v1718 = vpack.c.b16 %v1514, %v1511
      %v1719 = vpack.c.b16 %v1518, %v1515
      %v1720 = vpack.c.b16 %v1519, %v1516
      %v1721 = vpack.c.b16 %v1520, %v1517
      %v1722 = vpack.c.b16 %v1524, %v1521
      %v1723 = vpack.c.b16 %v1525, %v1522
      %v1724 = vpack.c.b16 %v1526, %v1523
      %v1725 = vpack.c.b16 %v1530, %v1527
      %v1726 = vpack.c.b16 %v1531, %v1528
      %v1727 = vpack.c.b16 %v1532, %v1529
      %v1728 = vpack.c.b16 %v1536, %v1533
      %v1729 = vpack.c.b16 %v1537, %v1534
      %v1730 = vpack.c.b16 %v1538, %v1535
      %1923 = vmatprep.subr.bf16.mxu0 %v1540
      %1924 = vmatpush1.bf16.msra.mxu0 %v1539
      %1925 = vmatprep.subr.bf16.mxu0 %v1543
      %1926 = vmatpush1.bf16.msra.mxu0 %v1542
      %1927 = vmatprep.subr.bf16.mxu0 %v1546
      %1928 = vmatpush1.bf16.msra.mxu0 %v1545
      %1929 = vmatprep.subr.bf16.mxu0 %v1549
      %1930 = vmatpush1.bf16.msra.mxu0 %v1548
      %1931 = vmatprep.subr.bf16.mxu0 %v1552
      %1932 = vmatpush1.bf16.msra.mxu0 %v1551
      %1933 = vmatprep.subr.bf16.mxu0 %v1555
      %1934 = vmatpush1.bf16.msra.mxu0 %v1554
      %1935 = vmatprep.subr.bf16.mxu0 %v1558
      %1936 = vmatpush1.bf16.msra.mxu0 %v1557
      %1937 = vmatprep.subr.bf16.mxu0 %v1561
      %1938 = vmatpush1.bf16.msra.mxu0 %v1560
      %1939 = vmatprep.subr.bf16.mxu0 %v1564
      %1940 = vmatpush1.bf16.msra.mxu0 %v1563
      %1941 = vmatprep.subr.bf16.mxu0 %v1567
      %1942 = vmatpush1.bf16.msra.mxu0 %v1566
      %1943 = vmatprep.subr.bf16.mxu0 %v1570
      %1944 = vmatpush1.bf16.msra.mxu0 %v1569
      %1945 = vmatprep.subr.bf16.mxu0 %v1573
      %1946 = vmatpush1.bf16.msra.mxu0 %v1572
      %1947 = vmatprep.subr.bf16.mxu0 %v1576
      %1948 = vmatpush1.bf16.msra.mxu0 %v1575
      %1949 = vmatprep.subr.bf16.mxu0 %v1579
      %1950 = vmatpush1.bf16.msra.mxu0 %v1578
      %1951 = vmatprep.subr.bf16.mxu0 %v1582
      %1952 = vmatpush1.bf16.msra.mxu0 %v1581
      %1953 = vmatprep.subr.bf16.mxu0 %v1585
      %1954 = vmatpush1.bf16.msra.mxu0 %v1584
      %1955 = vmatprep.mubr.bf16.mxu0 %v772
      %1956 = vmatmul.mubr.bf16.gmra.mrb[0].mxu0 %v771
      %v1957 = vpop.f32.mrb[0].mxu0
      %v1958 = vadd.f32 0.0, %v1957
      %v1959 = vpop.f32.mrb[0].mxu0
      %v1960 = vadd.f32 0.0, %v1959
      %v1961 = vpop.f32.mrb[0].mxu0
      %v1962 = vadd.f32 0.0, %v1961
      %v1963 = vpop.f32.mrb[0].mxu0
      %v1964 = vadd.f32 0.0, %v1963
      %1965 = vmatprep.mubr.bf16.mxu0 %v780
      %1966 = vmatmul.mubr.bf16.gmra.mrb[0].mxu0 %v779
      %v1967 = vpop.f32.mrb[0].mxu0
      %v1968 = vadd.f32 0.0, %v1967
      %v1969 = vpop.f32.mrb[0].mxu0
      %v1970 = vadd.f32 0.0, %v1969
      %v1971 = vpop.f32.mrb[0].mxu0
      %v1972 = vadd.f32 0.0, %v1971
      %v1973 = vpop.f32.mrb[0].mxu0
      %v1974 = vadd.f32 0.0, %v1973
      %1975 = vmatprep.mubr.bf16.mxu0 %v788
      %1976 = vmatmul.mubr.bf16.gmra.mrb[0].mxu0 %v787
      %v1977 = vpop.f32.mrb[0].mxu0
      %v1978 = vadd.f32 0.0, %v1977
      %v1979 = vpop.f32.mrb[0].mxu0
      %v1980 = vadd.f32 0.0, %v1979
      %v1981 = vpop.f32.mrb[0].mxu0
      %v1982 = vadd.f32 0.0, %v1981
      %v1983 = vpop.f32.mrb[0].mxu0
      %v1984 = vadd.f32 0.0, %v1983
      %1985 = vmatprep.mubr.bf16.mxu0 %v796
      %1986 = vmatmul.mubr.bf16.gmra.mrb[0].mxu0 %v795
      %v1987 = vpop.f32.mrb[0].mxu0
      %v1988 = vadd.f32 0.0, %v1987
      %v1989 = vpop.f32.mrb[0].mxu0
      %v1990 = vadd.f32 0.0, %v1989
      %v1991 = vpop.f32.mrb[0].mxu0
      %v1992 = vadd.f32 0.0, %v1991
      %v1993 = vpop.f32.mrb[0].mxu0
      %v1994 = vadd.f32 0.0, %v1993
      %1995 = vmatprep.mubr.bf16.mxu0 %v804
      %1996 = vmatmul.mubr.bf16.gmra.mrb[0].mxu0 %v803
      %v1997 = vpop.f32.mrb[0].mxu0
      %v1998 = vadd.f32 0.0, %v1997
      %v1999 = vpop.f32.mrb[0].mxu0
      %v2000 = vadd.f32 0.0, %v1999
      %v2001 = vpop.f32.mrb[0].mxu0
      %v2002 = vadd.f32 0.0, %v2001
      %v2003 = vpop.f32.mrb[0].mxu0
      %v2004 = vadd.f32 0.0, %v2003
      %2005 = vmatprep.mubr.bf16.mxu0 %v812
      %2006 = vmatmul.mubr.bf16.gmra.mrb[0].mxu0 %v811
      %v2007 = vpop.f32.mrb[0].mxu0
      %v2008 = vadd.f32 0.0, %v2007
      %v2009 = vpop.f32.mrb[0].mxu0
      %v2010 = vadd.f32 0.0, %v2009
      %v2011 = vpop.f32.mrb[0].mxu0
      %v2012 = vadd.f32 0.0, %v2011
      %v2013 = vpop.f32.mrb[0].mxu0
      %v2014 = vadd.f32 0.0, %v2013
      %2015 = vmatprep.mubr.bf16.mxu0 %v820
      %2016 = vmatmul.mubr.bf16.gmra.mrb[0].mxu0 %v819
      %v2017 = vpop.f32.mrb[0].mxu0
      %v2018 = vadd.f32 0.0, %v2017
      %v2019 = vpop.f32.mrb[0].mxu0
      %v2020 = vadd.f32 0.0, %v2019
      %v2021 = vpop.f32.mrb[0].mxu0
      %v2022 = vadd.f32 0.0, %v2021
      %v2023 = vpop.f32.mrb[0].mxu0
      %v2024 = vadd.f32 0.0, %v2023
      %2025 = vmatprep.mubr.bf16.mxu0 %v828
      %2026 = vmatmul.mubr.bf16.gmra.mrb[0].mxu0 %v827
      %v2027 = vpop.f32.mrb[0].mxu0
      %v2028 = vadd.f32 0.0, %v2027
      %v2029 = vpop.f32.mrb[0].mxu0
      %v2030 = vadd.f32 0.0, %v2029
      %v2031 = vpop.f32.mrb[0].mxu0
      %v2032 = vadd.f32 0.0, %v2031
      %v2033 = vpop.f32.mrb[0].mxu0
      %v2034 = vadd.f32 0.0, %v2033
      %2035 = vdwg.mxu0
      %2036 = vmatprep.subr.bf16.mxu0 %v1588
      %2037 = vmatpush1.bf16.msra.mxu0 %v1587
      %2038 = vmatprep.subr.bf16.mxu0 %v1591
      %2039 = vmatpush1.bf16.msra.mxu0 %v1590
      %2040 = vmatprep.subr.bf16.mxu0 %v1594
      %2041 = vmatpush1.bf16.msra.mxu0 %v1593
      %2042 = vmatprep.subr.bf16.mxu0 %v1597
      %2043 = vmatpush1.bf16.msra.mxu0 %v1596
      %2044 = vmatprep.subr.bf16.mxu0 %v1600
      %2045 = vmatpush1.bf16.msra.mxu0 %v1599
      %2046 = vmatprep.subr.bf16.mxu0 %v1603
      %2047 = vmatpush1.bf16.msra.mxu0 %v1602
      %2048 = vmatprep.subr.bf16.mxu0 %v1606
      %2049 = vmatpush1.bf16.msra.mxu0 %v1605
      %2050 = vmatprep.subr.bf16.mxu0 %v1609
      %2051 = vmatpush1.bf16.msra.mxu0 %v1608
      %2052 = vmatprep.subr.bf16.mxu0 %v1612
      %2053 = vmatpush1.bf16.msra.mxu0 %v1611
      %2054 = vmatprep.subr.bf16.mxu0 %v1615
      %2055 = vmatpush1.bf16.msra.mxu0 %v1614
      %2056 = vmatprep.subr.bf16.mxu0 %v1618
      %2057 = vmatpush1.bf16.msra.mxu0 %v1617
      %2058 = vmatprep.subr.bf16.mxu0 %v1621
      %2059 = vmatpush1.bf16.msra.mxu0 %v1620
      %2060 = vmatprep.subr.bf16.mxu0 %v1624
      %2061 = vmatpush1.bf16.msra.mxu0 %v1623
      %2062 = vmatprep.subr.bf16.mxu0 %v1627
      %2063 = vmatpush1.bf16.msra.mxu0 %v1626
      %2064 = vmatprep.subr.bf16.mxu0 %v1630
      %2065 = vmatpush1.bf16.msra.mxu0 %v1629
      %2066 = vmatprep.subr.bf16.mxu0 %v1633
      %2067 = vmatpush1.bf16.msra.mxu0 %v1632
      %2068 = vmatprep.mubr.bf16.mxu0 %v774
      %2069 = vmatmul.mubr.bf16.gmra.mrb[0].mxu0 %v773
      %v2070 = vpop.f32.mrb[0].mxu0
      %v2071 = vadd.f32 %v1958, %v2070
      %v2072 = vpop.f32.mrb[0].mxu0
      %v2073 = vadd.f32 %v1960, %v2072
      %v2074 = vpop.f32.mrb[0].mxu0
      %v2075 = vadd.f32 %v1962, %v2074
      %v2076 = vpop.f32.mrb[0].mxu0
      %v2077 = vadd.f32 %v1964, %v2076
      %2078 = vmatprep.mubr.bf16.mxu0 %v782
      %2079 = vmatmul.mubr.bf16.gmra.mrb[0].mxu0 %v781
      %v2080 = vpop.f32.mrb[0].mxu0
      %v2081 = vadd.f32 %v1968, %v2080
      %v2082 = vpop.f32.mrb[0].mxu0
      %v2083 = vadd.f32 %v1970, %v2082
      %v2084 = vpop.f32.mrb[0].mxu0
      %v2085 = vadd.f32 %v1972, %v2084
      %v2086 = vpop.f32.mrb[0].mxu0
      %v2087 = vadd.f32 %v1974, %v2086
      %2088 = vmatprep.mubr.bf16.mxu0 %v790
      %2089 = vmatmul.mubr.bf16.gmra.mrb[0].mxu0 %v789
      %v2090 = vpop.f32.mrb[0].mxu0
      %v2091 = vadd.f32 %v1978, %v2090
      %v2092 = vpop.f32.mrb[0].mxu0
      %v2093 = vadd.f32 %v1980, %v2092
      %v2094 = vpop.f32.mrb[0].mxu0
      %v2095 = vadd.f32 %v1982, %v2094
      %v2096 = vpop.f32.mrb[0].mxu0
      %v2097 = vadd.f32 %v1984, %v2096
      %2098 = vmatprep.mubr.bf16.mxu0 %v798
      %2099 = vmatmul.mubr.bf16.gmra.mrb[0].mxu0 %v797
      %v2100 = vpop.f32.mrb[0].mxu0
      %v2101 = vadd.f32 %v1988, %v2100
      %v2102 = vpop.f32.mrb[0].mxu0
      %v2103 = vadd.f32 %v1990, %v2102
      %v2104 = vpop.f32.mrb[0].mxu0
      %v2105 = vadd.f32 %v1992, %v2104
      %v2106 = vpop.f32.mrb[0].mxu0
      %v2107 = vadd.f32 %v1994, %v2106
      %2108 = vmatprep.mubr.bf16.mxu0 %v806
      %2109 = vmatmul.mubr.bf16.gmra.mrb[0].mxu0 %v805
      %v2110 = vpop.f32.mrb[0].mxu0
      %v2111 = vadd.f32 %v1998, %v2110
      %v2112 = vpop.f32.mrb[0].mxu0
      %v2113 = vadd.f32 %v2000, %v2112
      %v2114 = vpop.f32.mrb[0].mxu0
      %v2115 = vadd.f32 %v2002, %v2114
      %v2116 = vpop.f32.mrb[0].mxu0
      %v2117 = vadd.f32 %v2004, %v2116
      %2118 = vmatprep.mubr.bf16.mxu0 %v814
      %2119 = vmatmul.mubr.bf16.gmra.mrb[0].mxu0 %v813
      %v2120 = vpop.f32.mrb[0].mxu0
      %v2121 = vadd.f32 %v2008, %v2120
      %v2122 = vpop.f32.mrb[0].mxu0
      %v2123 = vadd.f32 %v2010, %v2122
      %v2124 = vpop.f32.mrb[0].mxu0
      %v2125 = vadd.f32 %v2012, %v2124
      %v2126 = vpop.f32.mrb[0].mxu0
      %v2127 = vadd.f32 %v2014, %v2126
      %2128 = vmatprep.mubr.bf16.mxu0 %v822
      %2129 = vmatmul.mubr.bf16.gmra.mrb[0].mxu0 %v821
      %v2130 = vpop.f32.mrb[0].mxu0
      %v2131 = vadd.f32 %v2018, %v2130
      %v2132 = vpop.f32.mrb[0].mxu0
      %v2133 = vadd.f32 %v2020, %v2132
      %v2134 = vpop.f32.mrb[0].mxu0
      %v2135 = vadd.f32 %v2022, %v2134
      %v2136 = vpop.f32.mrb[0].mxu0
      %v2137 = vadd.f32 %v2024, %v2136
      %2138 = vmatprep.mubr.bf16.mxu0 %v830
      %2139 = vmatmul.mubr.bf16.gmra.mrb[0].mxu0 %v829
      %v2140 = vpop.f32.mrb[0].mxu0
      %v2141 = vadd.f32 %v2028, %v2140
      %v2142 = vpop.f32.mrb[0].mxu0
      %v2143 = vadd.f32 %v2030, %v2142
      %v2144 = vpop.f32.mrb[0].mxu0
      %v2145 = vadd.f32 %v2032, %v2144
      %v2146 = vpop.f32.mrb[0].mxu0
      %v2147 = vadd.f32 %v2034, %v2146
      %2148 = vdwg.mxu0
      %2149 = vmatprep.subr.bf16.mxu0 %v1636
      %2150 = vmatpush1.bf16.msra.mxu0 %v1635
      %2151 = vmatprep.subr.bf16.mxu0 %v1639
      %2152 = vmatpush1.bf16.msra.mxu0 %v1638
      %2153 = vmatprep.subr.bf16.mxu0 %v1642
      %2154 = vmatpush1.bf16.msra.mxu0 %v1641
      %2155 = vmatprep.subr.bf16.mxu0 %v1645
      %2156 = vmatpush1.bf16.msra.mxu0 %v1644
      %2157 = vmatprep.subr.bf16.mxu0 %v1648
      %2158 = vmatpush1.bf16.msra.mxu0 %v1647
      %2159 = vmatprep.subr.bf16.mxu0 %v1651
      %2160 = vmatpush1.bf16.msra.mxu0 %v1650
      %2161 = vmatprep.subr.bf16.mxu0 %v1654
      %2162 = vmatpush1.bf16.msra.mxu0 %v1653
      %2163 = vmatprep.subr.bf16.mxu0 %v1657
      %2164 = vmatpush1.bf16.msra.mxu0 %v1656
      %2165 = vmatprep.subr.bf16.mxu0 %v1660
      %2166 = vmatpush1.bf16.msra.mxu0 %v1659
      %2167 = vmatprep.subr.bf16.mxu0 %v1663
      %2168 = vmatpush1.bf16.msra.mxu0 %v1662
      %2169 = vmatprep.subr.bf16.mxu0 %v1666
      %2170 = vmatpush1.bf16.msra.mxu0 %v1665
      %2171 = vmatprep.subr.bf16.mxu0 %v1669
      %2172 = vmatpush1.bf16.msra.mxu0 %v1668
      %2173 = vmatprep.subr.bf16.mxu0 %v1672
      %2174 = vmatpush1.bf16.msra.mxu0 %v1671
      %2175 = vmatprep.subr.bf16.mxu0 %v1675
      %2176 = vmatpush1.bf16.msra.mxu0 %v1674
      %2177 = vmatprep.subr.bf16.mxu0 %v1678
      %2178 = vmatpush1.bf16.msra.mxu0 %v1677
      %2179 = vmatprep.subr.bf16.mxu0 %v1681
      %2180 = vmatpush1.bf16.msra.mxu0 %v1680
      %2181 = vmatprep.mubr.bf16.mxu0 %v776
      %2182 = vmatmul.mubr.bf16.gmra.mrb[0].mxu0 %v775
      %v2183 = vpop.f32.mrb[0].mxu0
      %v2184 = vadd.f32 %v2071, %v2183
      %v2185 = vpop.f32.mrb[0].mxu0
      %v2186 = vadd.f32 %v2073, %v2185
      %v2187 = vpop.f32.mrb[0].mxu0
      %v2188 = vadd.f32 %v2075, %v2187
      %v2189 = vpop.f32.mrb[0].mxu0
      %v2190 = vadd.f32 %v2077, %v2189
      %2191 = vmatprep.mubr.bf16.mxu0 %v784
      %2192 = vmatmul.mubr.bf16.gmra.mrb[0].mxu0 %v783
      %v2193 = vpop.f32.mrb[0].mxu0
      %v2194 = vadd.f32 %v2081, %v2193
      %v2195 = vpop.f32.mrb[0].mxu0
      %v2196 = vadd.f32 %v2083, %v2195
      %v2197 = vpop.f32.mrb[0].mxu0
      %v2198 = vadd.f32 %v2085, %v2197
      %v2199 = vpop.f32.mrb[0].mxu0
      %v2200 = vadd.f32 %v2087, %v2199
      %2201 = vmatprep.mubr.bf16.mxu0 %v792
      %2202 = vmatmul.mubr.bf16.gmra.mrb[0].mxu0 %v791
      %v2203 = vpop.f32.mrb[0].mxu0
      %v2204 = vadd.f32 %v2091, %v2203
      %v2205 = vpop.f32.mrb[0].mxu0
      %v2206 = vadd.f32 %v2093, %v2205
      %v2207 = vpop.f32.mrb[0].mxu0
      %v2208 = vadd.f32 %v2095, %v2207
      %v2209 = vpop.f32.mrb[0].mxu0
      %v2210 = vadd.f32 %v2097, %v2209
      %2211 = vmatprep.mubr.bf16.mxu0 %v800
      %2212 = vmatmul.mubr.bf16.gmra.mrb[0].mxu0 %v799
      %v2213 = vpop.f32.mrb[0].mxu0
      %v2214 = vadd.f32 %v2101, %v2213
      %v2215 = vpop.f32.mrb[0].mxu0
      %v2216 = vadd.f32 %v2103, %v2215
      %v2217 = vpop.f32.mrb[0].mxu0
      %v2218 = vadd.f32 %v2105, %v2217
      %v2219 = vpop.f32.mrb[0].mxu0
      %v2220 = vadd.f32 %v2107, %v2219
      %2221 = vmatprep.mubr.bf16.mxu0 %v808
      %2222 = vmatmul.mubr.bf16.gmra.mrb[0].mxu0 %v807
      %v2223 = vpop.f32.mrb[0].mxu0
      %v2224 = vadd.f32 %v2111, %v2223
      %v2225 = vpop.f32.mrb[0].mxu0
      %v2226 = vadd.f32 %v2113, %v2225
      %v2227 = vpop.f32.mrb[0].mxu0
      %v2228 = vadd.f32 %v2115, %v2227
      %v2229 = vpop.f32.mrb[0].mxu0
      %v2230 = vadd.f32 %v2117, %v2229
      %2231 = vmatprep.mubr.bf16.mxu0 %v816
      %2232 = vmatmul.mubr.bf16.gmra.mrb[0].mxu0 %v815
      %v2233 = vpop.f32.mrb[0].mxu0
      %v2234 = vadd.f32 %v2121, %v2233
      %v2235 = vpop.f32.mrb[0].mxu0
      %v2236 = vadd.f32 %v2123, %v2235
      %v2237 = vpop.f32.mrb[0].mxu0
      %v2238 = vadd.f32 %v2125, %v2237
      %v2239 = vpop.f32.mrb[0].mxu0
      %v2240 = vadd.f32 %v2127, %v2239
      %2241 = vmatprep.mubr.bf16.mxu0 %v824
      %2242 = vmatmul.mubr.bf16.gmra.mrb[0].mxu0 %v823
      %v2243 = vpop.f32.mrb[0].mxu0
      %v2244 = vadd.f32 %v2131, %v2243
      %v2245 = vpop.f32.mrb[0].mxu0
      %v2246 = vadd.f32 %v2133, %v2245
      %v2247 = vpop.f32.mrb[0].mxu0
      %v2248 = vadd.f32 %v2135, %v2247
      %v2249 = vpop.f32.mrb[0].mxu0
      %v2250 = vadd.f32 %v2137, %v2249
      %2251 = vmatprep.mubr.bf16.mxu0 %v832
      %2252 = vmatmul.mubr.bf16.gmra.mrb[0].mxu0 %v831
      %v2253 = vpop.f32.mrb[0].mxu0
      %v2254 = vadd.f32 %v2141, %v2253
      %v2255 = vpop.f32.mrb[0].mxu0
      %v2256 = vadd.f32 %v2143, %v2255
      %v2257 = vpop.f32.mrb[0].mxu0
      %v2258 = vadd.f32 %v2145, %v2257
      %v2259 = vpop.f32.mrb[0].mxu0
      %v2260 = vadd.f32 %v2147, %v2259
      %2261 = vdwg.mxu0
      %2262 = vmatprep.subr.bf16.mxu0 %v1684
      %2263 = vmatpush1.bf16.msra.mxu0 %v1683
      %2264 = vmatprep.subr.bf16.mxu0 %v1687
      %2265 = vmatpush1.bf16.msra.mxu0 %v1686
      %2266 = vmatprep.subr.bf16.mxu0 %v1690
      %2267 = vmatpush1.bf16.msra.mxu0 %v1689
      %2268 = vmatprep.subr.bf16.mxu0 %v1693
      %2269 = vmatpush1.bf16.msra.mxu0 %v1692
      %2270 = vmatprep.subr.bf16.mxu0 %v1696
      %2271 = vmatpush1.bf16.msra.mxu0 %v1695
      %2272 = vmatprep.subr.bf16.mxu0 %v1699
      %2273 = vmatpush1.bf16.msra.mxu0 %v1698
      %2274 = vmatprep.subr.bf16.mxu0 %v1702
      %2275 = vmatpush1.bf16.msra.mxu0 %v1701
      %2276 = vmatprep.subr.bf16.mxu0 %v1705
      %2277 = vmatpush1.bf16.msra.mxu0 %v1704
      %2278 = vmatprep.subr.bf16.mxu0 %v1708
      %2279 = vmatpush1.bf16.msra.mxu0 %v1707
      %2280 = vmatprep.subr.bf16.mxu0 %v1711
      %2281 = vmatpush1.bf16.msra.mxu0 %v1710
      %2282 = vmatprep.subr.bf16.mxu0 %v1714
      %2283 = vmatpush1.bf16.msra.mxu0 %v1713
      %2284 = vmatprep.subr.bf16.mxu0 %v1717
      %2285 = vmatpush1.bf16.msra.mxu0 %v1716
      %2286 = vmatprep.subr.bf16.mxu0 %v1720
      %2287 = vmatpush1.bf16.msra.mxu0 %v1719
      %2288 = vmatprep.subr.bf16.mxu0 %v1723
      %2289 = vmatpush1.bf16.msra.mxu0 %v1722
      %2290 = vmatprep.subr.bf16.mxu0 %v1726
      %2291 = vmatpush1.bf16.msra.mxu0 %v1725
      %2292 = vmatprep.subr.bf16.mxu0 %v1729
      %2293 = vmatpush1.bf16.msra.mxu0 %v1728
      %2294 = vmatprep.mubr.bf16.mxu0 %v778
      %2295 = vmatmul.mubr.bf16.gmra.mrb[0].mxu0 %v777
      %v2296 = vpop.f32.mrb[0].mxu0
      %v2297 = vadd.f32 %v2184, %v2296
      %v2298 = vpop.f32.mrb[0].mxu0
      %v2299 = vadd.f32 %v2186, %v2298
      %v2300 = vpop.f32.mrb[0].mxu0
      %v2301 = vadd.f32 %v2188, %v2300
      %v2302 = vpop.f32.mrb[0].mxu0
      %v2303 = vadd.f32 %v2190, %v2302
      %2304 = vmatprep.mubr.bf16.mxu0 %v786
      %2305 = vmatmul.mubr.bf16.gmra.mrb[0].mxu0 %v785
      %v2306 = vpop.f32.mrb[0].mxu0
      %v2307 = vadd.f32 %v2194, %v2306
      %v2308 = vpop.f32.mrb[0].mxu0
      %v2309 = vadd.f32 %v2196, %v2308
      %v2310 = vpop.f32.mrb[0].mxu0
      %v2311 = vadd.f32 %v2198, %v2310
      %v2312 = vpop.f32.mrb[0].mxu0
      %v2313 = vadd.f32 %v2200, %v2312
      %2314 = vmatprep.mubr.bf16.mxu0 %v794
      %2315 = vmatmul.mubr.bf16.gmra.mrb[0].mxu0 %v793
      %v2316 = vpop.f32.mrb[0].mxu0
      %v2317 = vadd.f32 %v2204, %v2316
      %v2318 = vpop.f32.mrb[0].mxu0
      %v2319 = vadd.f32 %v2206, %v2318
      %v2320 = vpop.f32.mrb[0].mxu0
      %v2321 = vadd.f32 %v2208, %v2320
      %v2322 = vpop.f32.mrb[0].mxu0
      %v2323 = vadd.f32 %v2210, %v2322
      %2324 = vmatprep.mubr.bf16.mxu0 %v802
      %2325 = vmatmul.mubr.bf16.gmra.mrb[0].mxu0 %v801
      %v2326 = vpop.f32.mrb[0].mxu0
      %v2327 = vadd.f32 %v2214, %v2326
      %v2328 = vpop.f32.mrb[0].mxu0
      %v2329 = vadd.f32 %v2216, %v2328
      %v2330 = vpop.f32.mrb[0].mxu0
      %v2331 = vadd.f32 %v2218, %v2330
      %v2332 = vpop.f32.mrb[0].mxu0
      %v2333 = vadd.f32 %v2220, %v2332
      %2334 = vmatprep.mubr.bf16.mxu0 %v810
      %2335 = vmatmul.mubr.bf16.gmra.mrb[0].mxu0 %v809
      %v2336 = vpop.f32.mrb[0].mxu0
      %v2337 = vadd.f32 %v2224, %v2336
      %v2338 = vpop.f32.mrb[0].mxu0
      %v2339 = vadd.f32 %v2226, %v2338
      %v2340 = vpop.f32.mrb[0].mxu0
      %v2341 = vadd.f32 %v2228, %v2340
      %v2342 = vpop.f32.mrb[0].mxu0
      %v2343 = vadd.f32 %v2230, %v2342
      %2344 = vmatprep.mubr.bf16.mxu0 %v818
      %2345 = vmatmul.mubr.bf16.gmra.mrb[0].mxu0 %v817
      %v2346 = vpop.f32.mrb[0].mxu0
      %v2347 = vadd.f32 %v2234, %v2346
      %v2348 = vpop.f32.mrb[0].mxu0
      %v2349 = vadd.f32 %v2236, %v2348
      %v2350 = vpop.f32.mrb[0].mxu0
      %v2351 = vadd.f32 %v2238, %v2350
      %v2352 = vpop.f32.mrb[0].mxu0
      %v2353 = vadd.f32 %v2240, %v2352
      %2354 = vmatprep.mubr.bf16.mxu0 %v826
      %2355 = vmatmul.mubr.bf16.gmra.mrb[0].mxu0 %v825
      %v2356 = vpop.f32.mrb[0].mxu0
      %v2357 = vadd.f32 %v2244, %v2356
      %v2358 = vpop.f32.mrb[0].mxu0
      %v2359 = vadd.f32 %v2246, %v2358
      %v2360 = vpop.f32.mrb[0].mxu0
      %v2361 = vadd.f32 %v2248, %v2360
      %v2362 = vpop.f32.mrb[0].mxu0
      %v2363 = vadd.f32 %v2250, %v2362
      %2364 = vmatprep.mubr.bf16.mxu0 %v834
      %2365 = vmatmul.mubr.bf16.gmra.mrb[0].mxu0 %v833
      %v2366 = vpop.f32.mrb[0].mxu0
      %v2367 = vadd.f32 %v2254, %v2366
      %v2368 = vpop.f32.mrb[0].mxu0
      %v2369 = vadd.f32 %v2256, %v2368
      %v2370 = vpop.f32.mrb[0].mxu0
      %v2371 = vadd.f32 %v2258, %v2370
      %v2372 = vpop.f32.mrb[0].mxu0
      %v2373 = vadd.f32 %v2260, %v2372
      %2374 = vdwg.mxu0
      %2375 = vmatprep.subr.bf16.mxu0 0
      %2376 = vmatpush1.bf16.msra.mxu0 %v1541
      %2377 = vmatprep.subr.bf16.mxu0 0
      %2378 = vmatpush1.bf16.msra.mxu0 %v1544
      %2379 = vmatprep.subr.bf16.mxu0 0
      %2380 = vmatpush1.bf16.msra.mxu0 %v1547
      %2381 = vmatprep.subr.bf16.mxu0 0
      %2382 = vmatpush1.bf16.msra.mxu0 %v1550
      %2383 = vmatprep.subr.bf16.mxu0 0
      %2384 = vmatpush1.bf16.msra.mxu0 %v1553
      %2385 = vmatprep.subr.bf16.mxu0 0
      %2386 = vmatpush1.bf16.msra.mxu0 %v1556
      %2387 = vmatprep.subr.bf16.mxu0 0
      %2388 = vmatpush1.bf16.msra.mxu0 %v1559
      %2389 = vmatprep.subr.bf16.mxu0 0
      %2390 = vmatpush1.bf16.msra.mxu0 %v1562
      %2391 = vmatprep.subr.bf16.mxu0 0
      %2392 = vmatpush1.bf16.msra.mxu0 %v1565
      %2393 = vmatprep.subr.bf16.mxu0 0
      %2394 = vmatpush1.bf16.msra.mxu0 %v1568
      %2395 = vmatprep.subr.bf16.mxu0 0
      %2396 = vmatpush1.bf16.msra.mxu0 %v1571
      %2397 = vmatprep.subr.bf16.mxu0 0
      %2398 = vmatpush1.bf16.msra.mxu0 %v1574
      %2399 = vmatprep.subr.bf16.mxu0 0
      %2400 = vmatpush1.bf16.msra.mxu0 %v1577
      %2401 = vmatprep.subr.bf16.mxu0 0
      %2402 = vmatpush1.bf16.msra.mxu0 %v1580
      %2403 = vmatprep.subr.bf16.mxu0 0
      %2404 = vmatpush1.bf16.msra.mxu0 %v1583
      %2405 = vmatprep.subr.bf16.mxu0 0
      %2406 = vmatpush1.bf16.msra.mxu0 %v1586
      %2407 = vmatprep.mubr.bf16.mxu0 %v772
      %2408 = vmatmul.mubr.bf16.gmra.mrb[0].mxu0 %v771
      %v2409 = vpop.f32.mrb[0].mxu0
      %v2410 = vadd.f32 0.0, %v2409
      %v2411 = vpop.f32.mrb[0].mxu0
      %v2412 = vpop.f32.mrb[0].mxu0
      %v2413 = vadd.f32 0.0, %v2412
      %v2414 = vpop.f32.mrb[0].mxu0
      %2415 = vmatprep.mubr.bf16.mxu0 %v780
      %2416 = vmatmul.mubr.bf16.gmra.mrb[0].mxu0 %v779
      %v2417 = vpop.f32.mrb[0].mxu0
      %v2418 = vadd.f32 0.0, %v2417
      %v2419 = vpop.f32.mrb[0].mxu0
      %v2420 = vpop.f32.mrb[0].mxu0
      %v2421 = vadd.f32 0.0, %v2420
      %v2422 = vpop.f32.mrb[0].mxu0
      %2423 = vmatprep.mubr.bf16.mxu0 %v788
      %2424 = vmatmul.mubr.bf16.gmra.mrb[0].mxu0 %v787
      %v2425 = vpop.f32.mrb[0].mxu0
      %v2426 = vadd.f32 0.0, %v2425
      %v2427 = vpop.f32.mrb[0].mxu0
      %v2428 = vpop.f32.mrb[0].mxu0
      %v2429 = vadd.f32 0.0, %v2428
      %v2430 = vpop.f32.mrb[0].mxu0
      %2431 = vmatprep.mubr.bf16.mxu0 %v796
      %2432 = vmatmul.mubr.bf16.gmra.mrb[0].mxu0 %v795
      %v2433 = vpop.f32.mrb[0].mxu0
      %v2434 = vadd.f32 0.0, %v2433
      %v2435 = vpop.f32.mrb[0].mxu0
      %v2436 = vpop.f32.mrb[0].mxu0
      %v2437 = vadd.f32 0.0, %v2436
      %v2438 = vpop.f32.mrb[0].mxu0
      %2439 = vmatprep.mubr.bf16.mxu0 %v804
      %2440 = vmatmul.mubr.bf16.gmra.mrb[0].mxu0 %v803
      %v2441 = vpop.f32.mrb[0].mxu0
      %v2442 = vadd.f32 0.0, %v2441
      %v2443 = vpop.f32.mrb[0].mxu0
      %v2444 = vpop.f32.mrb[0].mxu0
      %v2445 = vadd.f32 0.0, %v2444
      %v2446 = vpop.f32.mrb[0].mxu0
      %2447 = vmatprep.mubr.bf16.mxu0 %v812
      %2448 = vmatmul.mubr.bf16.gmra.mrb[0].mxu0 %v811
      %v2449 = vpop.f32.mrb[0].mxu0
      %v2450 = vadd.f32 0.0, %v2449
      %v2451 = vpop.f32.mrb[0].mxu0
      %v2452 = vpop.f32.mrb[0].mxu0
      %v2453 = vadd.f32 0.0, %v2452
      %v2454 = vpop.f32.mrb[0].mxu0
      %2455 = vmatprep.mubr.bf16.mxu0 %v820
      %2456 = vmatmul.mubr.bf16.gmra.mrb[0].mxu0 %v819
      %v2457 = vpop.f32.mrb[0].mxu0
      %v2458 = vadd.f32 0.0, %v2457
      %v2459 = vpop.f32.mrb[0].mxu0
      %v2460 = vpop.f32.mrb[0].mxu0
      %v2461 = vadd.f32 0.0, %v2460
      %v2462 = vpop.f32.mrb[0].mxu0
      %2463 = vmatprep.mubr.bf16.mxu0 %v828
      %2464 = vmatmul.mubr.bf16.gmra.mrb[0].mxu0 %v827
      %v2465 = vpop.f32.mrb[0].mxu0
      %v2466 = vadd.f32 0.0, %v2465
      %v2467 = vpop.f32.mrb[0].mxu0
      %v2468 = vpop.f32.mrb[0].mxu0
      %v2469 = vadd.f32 0.0, %v2468
      %v2470 = vpop.f32.mrb[0].mxu0
      %2471 = vdwg.mxu0
      %2472 = vmatprep.subr.bf16.mxu0 0
      %2473 = vmatpush1.bf16.msra.mxu0 %v1589
      %2474 = vmatprep.subr.bf16.mxu0 0
      %2475 = vmatpush1.bf16.msra.mxu0 %v1592
      %2476 = vmatprep.subr.bf16.mxu0 0
      %2477 = vmatpush1.bf16.msra.mxu0 %v1595
      %2478 = vmatprep.subr.bf16.mxu0 0
      %2479 = vmatpush1.bf16.msra.mxu0 %v1598
      %2480 = vmatprep.subr.bf16.mxu0 0
      %2481 = vmatpush1.bf16.msra.mxu0 %v1601
      %2482 = vmatprep.subr.bf16.mxu0 0
      %2483 = vmatpush1.bf16.msra.mxu0 %v1604
      %2484 = vmatprep.subr.bf16.mxu0 0
      %2485 = vmatpush1.bf16.msra.mxu0 %v1607
      %2486 = vmatprep.subr.bf16.mxu0 0
      %2487 = vmatpush1.bf16.msra.mxu0 %v1610
      %2488 = vmatprep.subr.bf16.mxu0 0
      %2489 = vmatpush1.bf16.msra.mxu0 %v1613
      %2490 = vmatprep.subr.bf16.mxu0 0
      %2491 = vmatpush1.bf16.msra.mxu0 %v1616
      %2492 = vmatprep.subr.bf16.mxu0 0
      %2493 = vmatpush1.bf16.msra.mxu0 %v1619
      %2494 = vmatprep.subr.bf16.mxu0 0
      %2495 = vmatpush1.bf16.msra.mxu0 %v1622
      %2496 = vmatprep.subr.bf16.mxu0 0
      %2497 = vmatpush1.bf16.msra.mxu0 %v1625
      %2498 = vmatprep.subr.bf16.mxu0 0
      %2499 = vmatpush1.bf16.msra.mxu0 %v1628
      %2500 = vmatprep.subr.bf16.mxu0 0
      %2501 = vmatpush1.bf16.msra.mxu0 %v1631
      %2502 = vmatprep.subr.bf16.mxu0 0
      %2503 = vmatpush1.bf16.msra.mxu0 %v1634
      %2504 = vmatprep.mubr.bf16.mxu0 %v774
      %2505 = vmatmul.mubr.bf16.gmra.mrb[0].mxu0 %v773
      %v2506 = vpop.f32.mrb[0].mxu0
      %v2507 = vadd.f32 %v2410, %v2506
      %v2508 = vpop.f32.mrb[0].mxu0
      %v2509 = vpop.f32.mrb[0].mxu0
      %v2510 = vadd.f32 %v2413, %v2509
      %v2511 = vpop.f32.mrb[0].mxu0
      %2512 = vmatprep.mubr.bf16.mxu0 %v782
      %2513 = vmatmul.mubr.bf16.gmra.mrb[0].mxu0 %v781
      %v2514 = vpop.f32.mrb[0].mxu0
      %v2515 = vadd.f32 %v2418, %v2514
      %v2516 = vpop.f32.mrb[0].mxu0
      %v2517 = vpop.f32.mrb[0].mxu0
      %v2518 = vadd.f32 %v2421, %v2517
      %v2519 = vpop.f32.mrb[0].mxu0
      %2520 = vmatprep.mubr.bf16.mxu0 %v790
      %2521 = vmatmul.mubr.bf16.gmra.mrb[0].mxu0 %v789
      %v2522 = vpop.f32.mrb[0].mxu0
      %v2523 = vadd.f32 %v2426, %v2522
      %v2524 = vpop.f32.mrb[0].mxu0
      %v2525 = vpop.f32.mrb[0].mxu0
      %v2526 = vadd.f32 %v2429, %v2525
      %v2527 = vpop.f32.mrb[0].mxu0
      %2528 = vmatprep.mubr.bf16.mxu0 %v798
      %2529 = vmatmul.mubr.bf16.gmra.mrb[0].mxu0 %v797
      %v2530 = vpop.f32.mrb[0].mxu0
      %v2531 = vadd.f32 %v2434, %v2530
      %v2532 = vpop.f32.mrb[0].mxu0
      %v2533 = vpop.f32.mrb[0].mxu0
      %v2534 = vadd.f32 %v2437, %v2533
      %v2535 = vpop.f32.mrb[0].mxu0
      %2536 = vmatprep.mubr.bf16.mxu0 %v806
      %2537 = vmatmul.mubr.bf16.gmra.mrb[0].mxu0 %v805
      %v2538 = vpop.f32.mrb[0].mxu0
      %v2539 = vadd.f32 %v2442, %v2538
      %v2540 = vpop.f32.mrb[0].mxu0
      %v2541 = vpop.f32.mrb[0].mxu0
      %v2542 = vadd.f32 %v2445, %v2541
      %v2543 = vpop.f32.mrb[0].mxu0
      %2544 = vmatprep.mubr.bf16.mxu0 %v814
      %2545 = vmatmul.mubr.bf16.gmra.mrb[0].mxu0 %v813
      %v2546 = vpop.f32.mrb[0].mxu0
      %v2547 = vadd.f32 %v2450, %v2546
      %v2548 = vpop.f32.mrb[0].mxu0
      %v2549 = vpop.f32.mrb[0].mxu0
      %v2550 = vadd.f32 %v2453, %v2549
      %v2551 = vpop.f32.mrb[0].mxu0
      %2552 = vmatprep.mubr.bf16.mxu0 %v822
      %2553 = vmatmul.mubr.bf16.gmra.mrb[0].mxu0 %v821
      %v2554 = vpop.f32.mrb[0].mxu0
      %v2555 = vadd.f32 %v2458, %v2554
      %v2556 = vpop.f32.mrb[0].mxu0
      %v2557 = vpop.f32.mrb[0].mxu0
      %v2558 = vadd.f32 %v2461, %v2557
      %v2559 = vpop.f32.mrb[0].mxu0
      %2560 = vmatprep.mubr.bf16.mxu0 %v830
      %2561 = vmatmul.mubr.bf16.gmra.mrb[0].mxu0 %v829
      %v2562 = vpop.f32.mrb[0].mxu0
      %v2563 = vadd.f32 %v2466, %v2562
      %v2564 = vpop.f32.mrb[0].mxu0
      %v2565 = vpop.f32.mrb[0].mxu0
      %v2566 = vadd.f32 %v2469, %v2565
      %v2567 = vpop.f32.mrb[0].mxu0
      %2568 = vdwg.mxu0
      %2569 = vmatprep.subr.bf16.mxu0 0
      %2570 = vmatpush1.bf16.msra.mxu0 %v1637
      %2571 = vmatprep.subr.bf16.mxu0 0
      %2572 = vmatpush1.bf16.msra.mxu0 %v1640
      %2573 = vmatprep.subr.bf16.mxu0 0
      %2574 = vmatpush1.bf16.msra.mxu0 %v1643
      %2575 = vmatprep.subr.bf16.mxu0 0
      %2576 = vmatpush1.bf16.msra.mxu0 %v1646
      %2577 = vmatprep.subr.bf16.mxu0 0
      %2578 = vmatpush1.bf16.msra.mxu0 %v1649
      %2579 = vmatprep.subr.bf16.mxu0 0
      %2580 = vmatpush1.bf16.msra.mxu0 %v1652
      %2581 = vmatprep.subr.bf16.mxu0 0
      %2582 = vmatpush1.bf16.msra.mxu0 %v1655
      %2583 = vmatprep.subr.bf16.mxu0 0
      %2584 = vmatpush1.bf16.msra.mxu0 %v1658
      %2585 = vmatprep.subr.bf16.mxu0 0
      %2586 = vmatpush1.bf16.msra.mxu0 %v1661
      %2587 = vmatprep.subr.bf16.mxu0 0
      %2588 = vmatpush1.bf16.msra.mxu0 %v1664
      %2589 = vmatprep.subr.bf16.mxu0 0
      %2590 = vmatpush1.bf16.msra.mxu0 %v1667
      %2591 = vmatprep.subr.bf16.mxu0 0
      %2592 = vmatpush1.bf16.msra.mxu0 %v1670
      %2593 = vmatprep.subr.bf16.mxu0 0
      %2594 = vmatpush1.bf16.msra.mxu0 %v1673
      %2595 = vmatprep.subr.bf16.mxu0 0
      %2596 = vmatpush1.bf16.msra.mxu0 %v1676
      %2597 = vmatprep.subr.bf16.mxu0 0
      %2598 = vmatpush1.bf16.msra.mxu0 %v1679
      %2599 = vmatprep.subr.bf16.mxu0 0
      %2600 = vmatpush1.bf16.msra.mxu0 %v1682
      %2601 = vmatprep.mubr.bf16.mxu0 %v776
      %2602 = vmatmul.mubr.bf16.gmra.mrb[0].mxu0 %v775
      %v2603 = vpop.f32.mrb[0].mxu0
      %v2604 = vadd.f32 %v2507, %v2603
      %v2605 = vpop.f32.mrb[0].mxu0
      %v2606 = vpop.f32.mrb[0].mxu0
      %v2607 = vadd.f32 %v2510, %v2606
      %v2608 = vpop.f32.mrb[0].mxu0
      %2609 = vmatprep.mubr.bf16.mxu0 %v784
      %2610 = vmatmul.mubr.bf16.gmra.mrb[0].mxu0 %v783
      %v2611 = vpop.f32.mrb[0].mxu0
      %v2612 = vadd.f32 %v2515, %v2611
      %v2613 = vpop.f32.mrb[0].mxu0
      %v2614 = vpop.f32.mrb[0].mxu0
      %v2615 = vadd.f32 %v2518, %v2614
      %v2616 = vpop.f32.mrb[0].mxu0
      %2617 = vmatprep.mubr.bf16.mxu0 %v792
      %2618 = vmatmul.mubr.bf16.gmra.mrb[0].mxu0 %v791
      %v2619 = vpop.f32.mrb[0].mxu0
      %v2620 = vadd.f32 %v2523, %v2619
      %v2621 = vpop.f32.mrb[0].mxu0
      %v2622 = vpop.f32.mrb[0].mxu0
      %v2623 = vadd.f32 %v2526, %v2622
      %v2624 = vpop.f32.mrb[0].mxu0
      %2625 = vmatprep.mubr.bf16.mxu0 %v800
      %2626 = vmatmul.mubr.bf16.gmra.mrb[0].mxu0 %v799
      %v2627 = vpop.f32.mrb[0].mxu0
      %v2628 = vadd.f32 %v2531, %v2627
      %v2629 = vpop.f32.mrb[0].mxu0
      %v2630 = vpop.f32.mrb[0].mxu0
      %v2631 = vadd.f32 %v2534, %v2630
      %v2632 = vpop.f32.mrb[0].mxu0
      %2633 = vmatprep.mubr.bf16.mxu0 %v808
      %2634 = vmatmul.mubr.bf16.gmra.mrb[0].mxu0 %v807
      %v2635 = vpop.f32.mrb[0].mxu0
      %v2636 = vadd.f32 %v2539, %v2635
      %v2637 = vpop.f32.mrb[0].mxu0
      %v2638 = vpop.f32.mrb[0].mxu0
      %v2639 = vadd.f32 %v2542, %v2638
      %v2640 = vpop.f32.mrb[0].mxu0
      %2641 = vmatprep.mubr.bf16.mxu0 %v816
      %2642 = vmatmul.mubr.bf16.gmra.mrb[0].mxu0 %v815
      %v2643 = vpop.f32.mrb[0].mxu0
      %v2644 = vadd.f32 %v2547, %v2643
      %v2645 = vpop.f32.mrb[0].mxu0
      %v2646 = vpop.f32.mrb[0].mxu0
      %v2647 = vadd.f32 %v2550, %v2646
      %v2648 = vpop.f32.mrb[0].mxu0
      %2649 = vmatprep.mubr.bf16.mxu0 %v824
      %2650 = vmatmul.mubr.bf16.gmra.mrb[0].mxu0 %v823
      %v2651 = vpop.f32.mrb[0].mxu0
      %v2652 = vadd.f32 %v2555, %v2651
      %v2653 = vpop.f32.mrb[0].mxu0
      %v2654 = vpop.f32.mrb[0].mxu0
      %v2655 = vadd.f32 %v2558, %v2654
      %v2656 = vpop.f32.mrb[0].mxu0
      %2657 = vmatprep.mubr.bf16.mxu0 %v832
      %2658 = vmatmul.mubr.bf16.gmra.mrb[0].mxu0 %v831
      %v2659 = vpop.f32.mrb[0].mxu0
      %v2660 = vadd.f32 %v2563, %v2659
      %v2661 = vpop.f32.mrb[0].mxu0
      %v2662 = vpop.f32.mrb[0].mxu0
      %v2663 = vadd.f32 %v2566, %v2662
      %v2664 = vpop.f32.mrb[0].mxu0
      %2665 = vdwg.mxu0
      %2666 = vmatprep.subr.bf16.mxu0 0
      %2667 = vmatpush1.bf16.msra.mxu0 %v1685
      %2668 = vmatprep.subr.bf16.mxu0 0
      %2669 = vmatpush1.bf16.msra.mxu0 %v1688
      %2670 = vmatprep.subr.bf16.mxu0 0
      %2671 = vmatpush1.bf16.msra.mxu0 %v1691
      %2672 = vmatprep.subr.bf16.mxu0 0
      %2673 = vmatpush1.bf16.msra.mxu0 %v1694
      %2674 = vmatprep.subr.bf16.mxu0 0
      %2675 = vmatpush1.bf16.msra.mxu0 %v1697
      %2676 = vmatprep.subr.bf16.mxu0 0
      %2677 = vmatpush1.bf16.msra.mxu0 %v1700
      %2678 = vmatprep.subr.bf16.mxu0 0
      %2679 = vmatpush1.bf16.msra.mxu0 %v1703
      %2680 = vmatprep.subr.bf16.mxu0 0
      %2681 = vmatpush1.bf16.msra.mxu0 %v1706
      %2682 = vmatprep.subr.bf16.mxu0 0
      %2683 = vmatpush1.bf16.msra.mxu0 %v1709
      %2684 = vmatprep.subr.bf16.mxu0 0
      %2685 = vmatpush1.bf16.msra.mxu0 %v1712
      %2686 = vmatprep.subr.bf16.mxu0 0
      %2687 = vmatpush1.bf16.msra.mxu0 %v1715
      %2688 = vmatprep.subr.bf16.mxu0 0
      %2689 = vmatpush1.bf16.msra.mxu0 %v1718
      %2690 = vmatprep.subr.bf16.mxu0 0
      %2691 = vmatpush1.bf16.msra.mxu0 %v1721
      %2692 = vmatprep.subr.bf16.mxu0 0
      %2693 = vmatpush1.bf16.msra.mxu0 %v1724
      %2694 = vmatprep.subr.bf16.mxu0 0
      %2695 = vmatpush1.bf16.msra.mxu0 %v1727
      %2696 = vmatprep.subr.bf16.mxu0 0
      %2697 = vmatpush1.bf16.msra.mxu0 %v1730
      %2698 = vmatprep.mubr.bf16.mxu0 %v778
      %2699 = vmatmul.mubr.bf16.gmra.mrb[0].mxu0 %v777
      %v2700 = vpop.f32.mrb[0].mxu0
      %v2701 = vadd.f32 %v2604, %v2700
      %v2702 = vpop.f32.mrb[0].mxu0
      %v2703 = vpop.f32.mrb[0].mxu0
      %v2704 = vadd.f32 %v2607, %v2703
      %v2705 = vpop.f32.mrb[0].mxu0
      %2706 = vmatprep.mubr.bf16.mxu0 %v786
      %2707 = vmatmul.mubr.bf16.gmra.mrb[0].mxu0 %v785
      %v2708 = vpop.f32.mrb[0].mxu0
      %v2709 = vadd.f32 %v2612, %v2708
      %v2710 = vpop.f32.mrb[0].mxu0
      %v2711 = vpop.f32.mrb[0].mxu0
      %v2712 = vadd.f32 %v2615, %v2711
      %v2713 = vpop.f32.mrb[0].mxu0
      %2714 = vmatprep.mubr.bf16.mxu0 %v794
      %2715 = vmatmul.mubr.bf16.gmra.mrb[0].mxu0 %v793
      %v2716 = vpop.f32.mrb[0].mxu0
      %v2717 = vadd.f32 %v2620, %v2716
      %v2718 = vpop.f32.mrb[0].mxu0
      %v2719 = vpop.f32.mrb[0].mxu0
      %v2720 = vadd.f32 %v2623, %v2719
      %v2721 = vpop.f32.mrb[0].mxu0
      %2722 = vmatprep.mubr.bf16.mxu0 %v802
      %2723 = vmatmul.mubr.bf16.gmra.mrb[0].mxu0 %v801
      %v2724 = vpop.f32.mrb[0].mxu0
      %v2725 = vadd.f32 %v2628, %v2724
      %v2726 = vpop.f32.mrb[0].mxu0
      %v2727 = vpop.f32.mrb[0].mxu0
      %v2728 = vadd.f32 %v2631, %v2727
      %v2729 = vpop.f32.mrb[0].mxu0
      %2730 = vmatprep.mubr.bf16.mxu0 %v810
      %2731 = vmatmul.mubr.bf16.gmra.mrb[0].mxu0 %v809
      %v2732 = vpop.f32.mrb[0].mxu0
      %v2733 = vadd.f32 %v2636, %v2732
      %v2734 = vpop.f32.mrb[0].mxu0
      %v2735 = vpop.f32.mrb[0].mxu0
      %v2736 = vadd.f32 %v2639, %v2735
      %v2737 = vpop.f32.mrb[0].mxu0
      %2738 = vmatprep.mubr.bf16.mxu0 %v818
      %2739 = vmatmul.mubr.bf16.gmra.mrb[0].mxu0 %v817
      %v2740 = vpop.f32.mrb[0].mxu0
      %v2741 = vadd.f32 %v2644, %v2740
      %v2742 = vpop.f32.mrb[0].mxu0
      %v2743 = vpop.f32.mrb[0].mxu0
      %v2744 = vadd.f32 %v2647, %v2743
      %v2745 = vpop.f32.mrb[0].mxu0
      %2746 = vmatprep.mubr.bf16.mxu0 %v826
      %2747 = vmatmul.mubr.bf16.gmra.mrb[0].mxu0 %v825
      %v2748 = vpop.f32.mrb[0].mxu0
      %v2749 = vadd.f32 %v2652, %v2748
      %v2750 = vpop.f32.mrb[0].mxu0
      %v2751 = vpop.f32.mrb[0].mxu0
      %v2752 = vadd.f32 %v2655, %v2751
      %v2753 = vpop.f32.mrb[0].mxu0
      %2754 = vmatprep.mubr.bf16.mxu0 %v834
      %2755 = vmatmul.mubr.bf16.gmra.mrb[0].mxu0 %v833
      %v2756 = vpop.f32.mrb[0].mxu0
      %v2757 = vadd.f32 %v2660, %v2756
      %v2758 = vpop.f32.mrb[0].mxu0
      %v2759 = vpop.f32.mrb[0].mxu0
      %v2760 = vadd.f32 %v2663, %v2759
      %v2761 = vpop.f32.mrb[0].mxu0
      %2762 = vdwg.mxu0
      %v2763 = vpack.c.bf16 %v2301, %v2297
      %v2764 = vpack.c.bf16 %v2303, %v2299
      %v2765 = vpack.c.bf16 %v2704, %v2701
      %v2766 = vpack.c.bf16 %v2311, %v2307
      %v2767 = vpack.c.bf16 %v2313, %v2309
      %v2768 = vpack.c.bf16 %v2712, %v2709
      %v2769 = vpack.c.bf16 %v2321, %v2317
      %v2770 = vpack.c.bf16 %v2323, %v2319
      %v2771 = vpack.c.bf16 %v2720, %v2717
      %v2772 = vpack.c.bf16 %v2331, %v2327
      %v2773 = vpack.c.bf16 %v2333, %v2329
      %v2774 = vpack.c.bf16 %v2728, %v2725
      %v2775 = vpack.c.bf16 %v2341, %v2337
      %v2776 = vpack.c.bf16 %v2343, %v2339
      %v2777 = vpack.c.bf16 %v2736, %v2733
      %v2778 = vpack.c.bf16 %v2351, %v2347
      %v2779 = vpack.c.bf16 %v2353, %v2349
      %v2780 = vpack.c.bf16 %v2744, %v2741
      %v2781 = vpack.c.bf16 %v2361, %v2357
      %v2782 = vpack.c.bf16 %v2363, %v2359
      %v2783 = vpack.c.bf16 %v2752, %v2749
      %v2784 = vpack.c.bf16 %v2371, %v2367
      %v2785 = vpack.c.bf16 %v2373, %v2369
      %v2786 = vpack.c.bf16 %v2760, %v2757
      %v2787 = vld [vmem:[%s2] sm:$0xf]
      %v2788 = vld [vmem:[%s2 + $0x4] sm:$0xf]
      %v2789 = vld [vmem:[%s2 + $0x8] sm:$0xf]
      %v2790 = vld [vmem:[%s2 + $0xc] sm:$0xf]
      %v2791 = vld [vmem:[%s2 + $0x10] sm:$0xf]
      %v2792 = vld [vmem:[%s2 + $0x14] sm:$0xf]
      %v2793 = vld [vmem:[%s2 + $0x18] sm:$0xf]
      %v2794 = vld [vmem:[%s2 + $0x1c] sm:$0xf]
      %v2795 = vld [vmem:[%s2 + $0x20] sm:$0xf]
      %v2796 = vld [vmem:[%s2 + $0x24] sm:$0xf]
      %v2797 = vld [vmem:[%s2 + $0x28] sm:$0xf]
      %v2798 = vld [vmem:[%s2 + $0x2c] sm:$0xf]
      %v2799 = vld [vmem:[%s2 + $0x30] sm:$0xf]
      %v2800 = vld [vmem:[%s2 + $0x34] sm:$0xf]
      %v2801 = vld [vmem:[%s2 + $0x38] sm:$0xf]
      %v2802 = vld [vmem:[%s2 + $0x3c] sm:$0xf]
      %v2803 = vld [vmem:[%s2 + $0x40] sm:$0xf]
      %v2804 = vld [vmem:[%s2 + $0x44] sm:$0xf]
      %v2805 = vld [vmem:[%s2 + $0x48] sm:$0xf]
      %v2806 = vld [vmem:[%s2 + $0x4c] sm:$0xf]
      %v2807 = vld [vmem:[%s2 + $0x50] sm:$0xf]
      %v2808 = vld [vmem:[%s2 + $0x54] sm:$0xf]
      %v2809 = vld [vmem:[%s2 + $0x58] sm:$0xf]
      %v2810 = vld [vmem:[%s2 + $0x5c] sm:$0xf]
      %v2811 = vld [vmem:[%s2 + $0x60] sm:$0xf]
      %v2812 = vld [vmem:[%s2 + $0x64] sm:$0xf]
      %v2813 = vld [vmem:[%s2 + $0x68] sm:$0xf]
      %v2814 = vld [vmem:[%s2 + $0x6c] sm:$0xf]
      %v2815 = vld [vmem:[%s2 + $0x70] sm:$0xf]
      %v2816 = vld [vmem:[%s2 + $0x74] sm:$0xf]
      %v2817 = vld [vmem:[%s2 + $0x78] sm:$0xf]
      %v2818 = vld [vmem:[%s2 + $0x7c] sm:$0xf]
      %v2819 = vld [vmem:[%s2 + $0x80] sm:$0xf]
      %v2820 = vld [vmem:[%s2 + $0x84] sm:$0xf]
      %v2821 = vld [vmem:[%s2 + $0x88] sm:$0xf]
      %v2822 = vld [vmem:[%s2 + $0x8c] sm:$0xf]
      %v2823 = vld [vmem:[%s2 + $0x90] sm:$0xf]
      %v2824 = vld [vmem:[%s2 + $0x94] sm:$0x3]
      %v2825 = vld [vmem:[%s3] sm:$0x1]
      %v2827 = vlaneseq
      %v2828 = vshrl.u32 %v2827, 7
      %v2829 = vsub.s32 0, %v2828
      %v2830 = vrot.slane %v2825, %v2829
      %v2870 = vunpack.c.l.b16 %v2787
      %v2871 = vunpack.c.l.b16 %v2788
      %v2872 = vunpack.c.l.b16 %v2789
      %v2873 = vunpack.c.l.b16 %v2790
      %v2874 = vunpack.c.l.b16 %v2791
      %v2875 = vunpack.c.l.b16 %v2792
      %v2876 = vunpack.c.l.b16 %v2793
      %v2877 = vunpack.c.l.b16 %v2794
      %v2878 = vunpack.c.l.b16 %v2795
      %v2879 = vunpack.c.l.b16 %v2796
      %v2880 = vunpack.c.l.b16 %v2797
      %v2881 = vunpack.c.l.b16 %v2798
      %v2882 = vunpack.c.l.b16 %v2799
      %v2883 = vunpack.c.l.b16 %v2800
      %v2884 = vunpack.c.l.b16 %v2801
      %v2885 = vunpack.c.l.b16 %v2802
      %v2886 = vunpack.c.l.b16 %v2803
      %v2887 = vunpack.c.l.b16 %v2804
      %v2888 = vunpack.c.l.b16 %v2805
      %v2889 = vunpack.c.l.b16 %v2806
      %v2890 = vunpack.c.l.b16 %v2807
      %v2891 = vunpack.c.l.b16 %v2808
      %v2892 = vunpack.c.l.b16 %v2809
      %v2893 = vunpack.c.l.b16 %v2810
      %v2894 = vunpack.c.l.b16 %v2811
      %v2895 = vunpack.c.l.b16 %v2812
      %v2896 = vunpack.c.l.b16 %v2813
      %v2897 = vunpack.c.l.b16 %v2814
      %v2898 = vunpack.c.l.b16 %v2815
      %v2899 = vunpack.c.l.b16 %v2816
      %v2900 = vunpack.c.l.b16 %v2817
      %v2901 = vunpack.c.l.b16 %v2818
      %v2902 = vunpack.c.l.b16 %v2819
      %v2903 = vunpack.c.l.b16 %v2820
      %v2904 = vunpack.c.l.b16 %v2821
      %v2905 = vunpack.c.l.b16 %v2822
      %v2906 = vunpack.c.l.b16 %v2823
      %v2907 = vunpack.c.l.b16 %v2824
      %v2908 = vpack.c.b16 %v2871, %v2870
      %v2909 = vpack.c.b16 %v2873, %v2872
      %v2910 = vpack.c.b16 %v2875, %v2874
      %v2911 = vpack.c.b16 %v2877, %v2876
      %v2912 = vpack.c.b16 %v2879, %v2878
      %v2913 = vpack.c.b16 %v2881, %v2880
      %v2914 = vpack.c.b16 %v2883, %v2882
      %v2915 = vpack.c.b16 %v2885, %v2884
      %v2916 = vpack.c.b16 %v2887, %v2886
      %v2917 = vpack.c.b16 %v2889, %v2888
      %v2918 = vpack.c.b16 %v2891, %v2890
      %v2919 = vpack.c.b16 %v2893, %v2892
      %v2920 = vpack.c.b16 %v2895, %v2894
      %v2921 = vpack.c.b16 %v2897, %v2896
      %v2922 = vpack.c.b16 %v2899, %v2898
      %v2923 = vpack.c.b16 %v2901, %v2900
      %v2924 = vpack.c.b16 %v2903, %v2902
      %v2925 = vpack.c.b16 %v2905, %v2904
      %v2926 = vpack.c.b16 %v2907, %v2906
      %vm2945 = vcmask 359424
      %v2947 = vsel %vm2945, %v2765, 0
      %v2950 = vsel %vm2945, %v2768, 0
      %v2953 = vsel %vm2945, %v2771, 0
      %v2956 = vsel %vm2945, %v2774, 0
      %v2959 = vsel %vm2945, %v2777, 0
      %v2962 = vsel %vm2945, %v2780, 0
      %v2965 = vsel %vm2945, %v2783, 0
      %v2968 = vsel %vm2945, %v2786, 0
      %vm2970 = vcmask 1045504
      %v2972 = vsel %vm2970, %v2926, 0
      %2974 = vmatprep.subr.bf16.mxu0 0
      %2975 = vmatpush1.bf16.msra.mxu0 %v2908
      %2976 = vmatprep.subr.bf16.mxu0 0
      %2977 = vmatpush1.bf16.msra.mxu0 %v2909
      %2978 = vmatprep.subr.bf16.mxu0 0
      %2979 = vmatpush1.bf16.msra.mxu0 %v2910
      %2980 = vmatprep.subr.bf16.mxu0 0
      %2981 = vmatpush1.bf16.msra.mxu0 %v2911
      %2982 = vmatprep.subr.bf16.mxu0 0
      %2983 = vmatpush1.bf16.msra.mxu0 %v2912
      %2984 = vmatprep.subr.bf16.mxu0 0
      %2985 = vmatpush1.bf16.msra.mxu0 %v2913
      %2986 = vmatprep.subr.bf16.mxu0 0
      %2987 = vmatpush1.bf16.msra.mxu0 %v2914
      %2988 = vmatprep.subr.bf16.mxu0 0
      %2989 = vmatpush1.bf16.msra.mxu0 %v2915
      %2990 = vmatprep.subr.bf16.mxu0 0
      %2991 = vmatpush1.bf16.msra.mxu0 %v2916
      %2992 = vmatprep.subr.bf16.mxu0 0
      %2993 = vmatpush1.bf16.msra.mxu0 %v2917
      %2994 = vmatprep.subr.bf16.mxu0 0
      %2995 = vmatpush1.bf16.msra.mxu0 %v2918
      %2996 = vmatprep.subr.bf16.mxu0 0
      %2997 = vmatpush1.bf16.msra.mxu0 %v2919
      %2998 = vmatprep.subr.bf16.mxu0 0
      %2999 = vmatpush1.bf16.msra.mxu0 %v2920
      %3000 = vmatprep.subr.bf16.mxu0 0
      %3001 = vmatpush1.bf16.msra.mxu0 %v2921
      %3002 = vmatprep.subr.bf16.mxu0 0
      %3003 = vmatpush1.bf16.msra.mxu0 %v2922
      %3004 = vmatprep.subr.bf16.mxu0 0
      %3005 = vmatpush1.bf16.msra.mxu0 %v2923
      %3006 = vmatprep.mubr.bf16.mxu0 %v2764
      %3007 = vmatmul.mubr.bf16.gmra.mrb[0].mxu0 %v2763
      %v3008 = vpop.f32.mrb[0].mxu0
      %v3009 = vadd.f32 %v2830, %v3008
      %v3010 = vpop.f32.mrb[0].mxu0
      %v3011 = vpop.f32.mrb[0].mxu0
      %v3012 = vadd.f32 %v2830, %v3011
      %v3013 = vpop.f32.mrb[0].mxu0
      %3014 = vmatprep.mubr.bf16.mxu0 %v2767
      %3015 = vmatmul.mubr.bf16.gmra.mrb[0].mxu0 %v2766
      %v3016 = vpop.f32.mrb[0].mxu0
      %v3017 = vadd.f32 %v2830, %v3016
      %v3018 = vpop.f32.mrb[0].mxu0
      %v3019 = vpop.f32.mrb[0].mxu0
      %v3020 = vadd.f32 %v2830, %v3019
      %v3021 = vpop.f32.mrb[0].mxu0
      %3022 = vmatprep.mubr.bf16.mxu0 %v2770
      %3023 = vmatmul.mubr.bf16.gmra.mrb[0].mxu0 %v2769
      %v3024 = vpop.f32.mrb[0].mxu0
      %v3025 = vadd.f32 %v2830, %v3024
      %v3026 = vpop.f32.mrb[0].mxu0
      %v3027 = vpop.f32.mrb[0].mxu0
      %v3028 = vadd.f32 %v2830, %v3027
      %v3029 = vpop.f32.mrb[0].mxu0
      %3030 = vmatprep.mubr.bf16.mxu0 %v2773
      %3031 = vmatmul.mubr.bf16.gmra.mrb[0].mxu0 %v2772
      %v3032 = vpop.f32.mrb[0].mxu0
      %v3033 = vadd.f32 %v2830, %v3032
      %v3034 = vpop.f32.mrb[0].mxu0
      %v3035 = vpop.f32.mrb[0].mxu0
      %v3036 = vadd.f32 %v2830, %v3035
      %v3037 = vpop.f32.mrb[0].mxu0
      %3038 = vmatprep.mubr.bf16.mxu0 %v2776
      %3039 = vmatmul.mubr.bf16.gmra.mrb[0].mxu0 %v2775
      %v3040 = vpop.f32.mrb[0].mxu0
      %v3041 = vadd.f32 %v2830, %v3040
      %v3042 = vpop.f32.mrb[0].mxu0
      %v3043 = vpop.f32.mrb[0].mxu0
      %v3044 = vadd.f32 %v2830, %v3043
      %v3045 = vpop.f32.mrb[0].mxu0
      %3046 = vmatprep.mubr.bf16.mxu0 %v2779
      %3047 = vmatmul.mubr.bf16.gmra.mrb[0].mxu0 %v2778
      %v3048 = vpop.f32.mrb[0].mxu0
      %v3049 = vadd.f32 %v2830, %v3048
      %v3050 = vpop.f32.mrb[0].mxu0
      %v3051 = vpop.f32.mrb[0].mxu0
      %v3052 = vadd.f32 %v2830, %v3051
      %v3053 = vpop.f32.mrb[0].mxu0
      %3054 = vmatprep.mubr.bf16.mxu0 %v2782
      %3055 = vmatmul.mubr.bf16.gmra.mrb[0].mxu0 %v2781
      %v3056 = vpop.f32.mrb[0].mxu0
      %v3057 = vadd.f32 %v2830, %v3056
      %v3058 = vpop.f32.mrb[0].mxu0
      %v3059 = vpop.f32.mrb[0].mxu0
      %v3060 = vadd.f32 %v2830, %v3059
      %v3061 = vpop.f32.mrb[0].mxu0
      %3062 = vmatprep.mubr.bf16.mxu0 %v2785
      %3063 = vmatmul.mubr.bf16.gmra.mrb[0].mxu0 %v2784
      %v3064 = vpop.f32.mrb[0].mxu0
      %v3065 = vadd.f32 %v2830, %v3064
      %v3066 = vpop.f32.mrb[0].mxu0
      %v3067 = vpop.f32.mrb[0].mxu0
      %v3068 = vadd.f32 %v2830, %v3067
      %v3069 = vpop.f32.mrb[0].mxu0
      %3070 = vdwg.mxu0
      %3071 = vmatprep.subr.bf16.mxu0 0
      %3072 = vmatpush1.bf16.msra.mxu0 %v2924
      %3073 = vmatprep.subr.bf16.mxu0 0
      %3074 = vmatpush1.bf16.msra.mxu0 %v2925
      %3075 = vmatprep.subr.bf16.mxu0 0
      %3076 = vmatpush1.bf16.msra.mxu0 %v2972
      %3077 = vmatprep.subr.bf16.mxu0 0
      %3078 = vmatpush1.bf16.msra.mxu0 0
      %3079 = vmatprep.subr.bf16.mxu0 0
      %3080 = vmatpush1.bf16.msra.mxu0 0
      %3081 = vmatprep.subr.bf16.mxu0 0
      %3082 = vmatpush1.bf16.msra.mxu0 0
      %3083 = vmatprep.subr.bf16.mxu0 0
      %3084 = vmatpush1.bf16.msra.mxu0 0
      %3085 = vmatprep.subr.bf16.mxu0 0
      %3086 = vmatpush1.bf16.msra.mxu0 0
      %3087 = vmatprep.subr.bf16.mxu0 0
      %3088 = vmatpush1.bf16.msra.mxu0 0
      %3089 = vmatprep.subr.bf16.mxu0 0
      %3090 = vmatpush1.bf16.msra.mxu0 0
      %3091 = vmatprep.subr.bf16.mxu0 0
      %3092 = vmatpush1.bf16.msra.mxu0 0
      %3093 = vmatprep.subr.bf16.mxu0 0
      %3094 = vmatpush1.bf16.msra.mxu0 0
      %3095 = vmatprep.subr.bf16.mxu0 0
      %3096 = vmatpush1.bf16.msra.mxu0 0
      %3097 = vmatprep.subr.bf16.mxu0 0
      %3098 = vmatpush1.bf16.msra.mxu0 0
      %3099 = vmatprep.subr.bf16.mxu0 0
      %3100 = vmatpush1.bf16.msra.mxu0 0
      %3101 = vmatprep.subr.bf16.mxu0 0
      %3102 = vmatpush1.bf16.msra.mxu0 0
      %3103 = vmatprep.mubr.bf16.mxu0 0
      %3104 = vmatmul.mubr.bf16.gmra.mrb[0].mxu0 %v2947
      %v3105 = vpop.f32.mrb[0].mxu0
      %v3106 = vadd.f32 %v3009, %v3105
      %v3107 = vpop.f32.mrb[0].mxu0
      %v3108 = vpop.f32.mrb[0].mxu0
      %v3109 = vadd.f32 %v3012, %v3108
      %v3110 = vpop.f32.mrb[0].mxu0
      %3111 = vmatprep.mubr.bf16.mxu0 0
      %3112 = vmatmul.mubr.bf16.gmra.mrb[0].mxu0 %v2950
      %v3113 = vpop.f32.mrb[0].mxu0
      %v3114 = vadd.f32 %v3017, %v3113
      %v3115 = vpop.f32.mrb[0].mxu0
      %v3116 = vpop.f32.mrb[0].mxu0
      %v3117 = vadd.f32 %v3020, %v3116
      %v3118 = vpop.f32.mrb[0].mxu0
      %3119 = vmatprep.mubr.bf16.mxu0 0
      %3120 = vmatmul.mubr.bf16.gmra.mrb[0].mxu0 %v2953
      %v3121 = vpop.f32.mrb[0].mxu0
      %v3122 = vadd.f32 %v3025, %v3121
      %v3123 = vpop.f32.mrb[0].mxu0
      %v3124 = vpop.f32.mrb[0].mxu0
      %v3125 = vadd.f32 %v3028, %v3124
      %v3126 = vpop.f32.mrb[0].mxu0
      %3127 = vmatprep.mubr.bf16.mxu0 0
      %3128 = vmatmul.mubr.bf16.gmra.mrb[0].mxu0 %v2956
      %v3129 = vpop.f32.mrb[0].mxu0
      %v3130 = vadd.f32 %v3033, %v3129
      %v3131 = vpop.f32.mrb[0].mxu0
      %v3132 = vpop.f32.mrb[0].mxu0
      %v3133 = vadd.f32 %v3036, %v3132
      %v3134 = vpop.f32.mrb[0].mxu0
      %3135 = vmatprep.mubr.bf16.mxu0 0
      %3136 = vmatmul.mubr.bf16.gmra.mrb[0].mxu0 %v2959
      %v3137 = vpop.f32.mrb[0].mxu0
      %v3138 = vadd.f32 %v3041, %v3137
      %v3139 = vpop.f32.mrb[0].mxu0
      %v3140 = vpop.f32.mrb[0].mxu0
      %v3141 = vadd.f32 %v3044, %v3140
      %v3142 = vpop.f32.mrb[0].mxu0
      %3143 = vmatprep.mubr.bf16.mxu0 0
      %3144 = vmatmul.mubr.bf16.gmra.mrb[0].mxu0 %v2962
      %v3145 = vpop.f32.mrb[0].mxu0
      %v3146 = vadd.f32 %v3049, %v3145
      %v3147 = vpop.f32.mrb[0].mxu0
      %v3148 = vpop.f32.mrb[0].mxu0
      %v3149 = vadd.f32 %v3052, %v3148
      %v3150 = vpop.f32.mrb[0].mxu0
      %3151 = vmatprep.mubr.bf16.mxu0 0
      %3152 = vmatmul.mubr.bf16.gmra.mrb[0].mxu0 %v2965
      %v3153 = vpop.f32.mrb[0].mxu0
      %v3154 = vadd.f32 %v3057, %v3153
      %v3155 = vpop.f32.mrb[0].mxu0
      %v3156 = vpop.f32.mrb[0].mxu0
      %v3157 = vadd.f32 %v3060, %v3156
      %v3158 = vpop.f32.mrb[0].mxu0
      %3159 = vmatprep.mubr.bf16.mxu0 0
      %3160 = vmatmul.mubr.bf16.gmra.mrb[0].mxu0 %v2968
      %v3161 = vpop.f32.mrb[0].mxu0
      %v3162 = vadd.f32 %v3065, %v3161
      %v3163 = vpop.f32.mrb[0].mxu0
      %v3164 = vpop.f32.mrb[0].mxu0
      %v3165 = vadd.f32 %v3068, %v3164
      %v3166 = vpop.f32.mrb[0].mxu0
      %3167 = vdwg.mxu0
      %v3168 = vmax.f32 %v3106, 0.0
      %v3169 = vmax.f32 %v3109, 0.0
      %v3170 = vmax.f32 %v3114, 0.0
      %v3171 = vmax.f32 %v3117, 0.0
      %v3172 = vmax.f32 %v3122, 0.0
      %v3173 = vmax.f32 %v3125, 0.0
      %v3174 = vmax.f32 %v3130, 0.0
      %v3175 = vmax.f32 %v3133, 0.0
      %v3176 = vmax.f32 %v3138, 0.0
      %v3177 = vmax.f32 %v3141, 0.0
      %v3178 = vmax.f32 %v3146, 0.0
      %v3179 = vmax.f32 %v3149, 0.0
      %v3180 = vmax.f32 %v3154, 0.0
      %v3181 = vmax.f32 %v3157, 0.0
      %v3182 = vmax.f32 %v3162, 0.0
      %v3183 = vmax.f32 %v3165, 0.0
      %v3184 = vpack.c.bf16 %v3169, %v3168
      %v3185 = vpack.c.bf16 %v3171, %v3170
      %v3186 = vpack.c.bf16 %v3173, %v3172
      %v3187 = vpack.c.bf16 %v3175, %v3174
      %v3188 = vpack.c.bf16 %v3177, %v3176
      %v3189 = vpack.c.bf16 %v3179, %v3178
      %v3190 = vpack.c.bf16 %v3181, %v3180
      %v3191 = vpack.c.bf16 %v3183, %v3182
      %v3192 = vld [vmem:[%s4] sm:$0xf]
      %v3193 = vld [vmem:[%s4 + $0x4] sm:$0xf]
      %v3194 = vld [vmem:[%s4 + $0x8] sm:$0xf]
      %v3195 = vld [vmem:[%s4 + $0xc] sm:$0xf]
      %v3196 = vld [vmem:[%s4 + $0x10] sm:$0xf]
      %v3197 = vld [vmem:[%s4 + $0x14] sm:$0xf]
      %v3198 = vld [vmem:[%s4 + $0x18] sm:$0xf]
      %v3199 = vld [vmem:[%s4 + $0x1c] sm:$0xf]
      %v3200 = vld [vmem:[%s4 + $0x20] sm:$0xf]
      %v3201 = vld [vmem:[%s4 + $0x24] sm:$0xf]
      %v3202 = vld [vmem:[%s4 + $0x28] sm:$0xf]
      %v3203 = vld [vmem:[%s4 + $0x2c] sm:$0xf]
      %v3204 = vld [vmem:[%s4 + $0x30] sm:$0xf]
      %v3205 = vld [vmem:[%s4 + $0x34] sm:$0xf]
      %v3206 = vld [vmem:[%s4 + $0x38] sm:$0xf]
      %v3207 = vld [vmem:[%s4 + $0x3c] sm:$0xf]
      %v3208 = vld [vmem:[%s5] sm:$0x1]
      %v3210 = vlaneseq
      %v3211 = vshrl.u32 %v3210, 7
      %v3212 = vsub.s32 0, %v3211
      %v3213 = vrot.slane %v3208, %v3212
      %v3231 = vunpack.c.l.b16 %v3192
      %v3232 = vunpack.c.l.b16 %v3193
      %v3233 = vunpack.c.l.b16 %v3194
      %v3234 = vunpack.c.l.b16 %v3195
      %v3235 = vunpack.c.l.b16 %v3196
      %v3236 = vunpack.c.l.b16 %v3197
      %v3237 = vunpack.c.l.b16 %v3198
      %v3238 = vunpack.c.l.b16 %v3199
      %v3239 = vunpack.c.l.b16 %v3200
      %v3240 = vunpack.c.l.b16 %v3201
      %v3241 = vunpack.c.l.b16 %v3202
      %v3242 = vunpack.c.l.b16 %v3203
      %v3243 = vunpack.c.l.b16 %v3204
      %v3244 = vunpack.c.l.b16 %v3205
      %v3245 = vunpack.c.l.b16 %v3206
      %v3246 = vunpack.c.l.b16 %v3207
      %v3247 = vpack.c.b16 %v3232, %v3231
      %v3248 = vpack.c.b16 %v3234, %v3233
      %v3249 = vpack.c.b16 %v3236, %v3235
      %v3250 = vpack.c.b16 %v3238, %v3237
      %v3251 = vpack.c.b16 %v3240, %v3239
      %v3252 = vpack.c.b16 %v3242, %v3241
      %v3253 = vpack.c.b16 %v3244, %v3243
      %v3254 = vpack.c.b16 %v3246, %v3245
      %3263 = vmatprep.subr.bf16.mxu0 0
      %3264 = vmatpush1.bf16.msra.mxu0 %v3247
      %3265 = vmatprep.subr.bf16.mxu0 0
      %3266 = vmatpush1.bf16.msra.mxu0 %v3248
      %3267 = vmatprep.subr.bf16.mxu0 0
      %3268 = vmatpush1.bf16.msra.mxu0 %v3249
      %3269 = vmatprep.subr.bf16.mxu0 0
      %3270 = vmatpush1.bf16.msra.mxu0 %v3250
      %3271 = vmatprep.subr.bf16.mxu0 0
      %3272 = vmatpush1.bf16.msra.mxu0 %v3251
      %3273 = vmatprep.subr.bf16.mxu0 0
      %3274 = vmatpush1.bf16.msra.mxu0 %v3252
      %3275 = vmatprep.subr.bf16.mxu0 0
      %3276 = vmatpush1.bf16.msra.mxu0 %v3253
      %3277 = vmatprep.subr.bf16.mxu0 0
      %3278 = vmatpush1.bf16.msra.mxu0 %v3254
      %3279 = vmatprep.subr.bf16.mxu0 0
      %3280 = vmatpush1.bf16.msra.mxu0 0
      %3281 = vmatprep.subr.bf16.mxu0 0
      %3282 = vmatpush1.bf16.msra.mxu0 0
      %3283 = vmatprep.subr.bf16.mxu0 0
      %3284 = vmatpush1.bf16.msra.mxu0 0
      %3285 = vmatprep.subr.bf16.mxu0 0
      %3286 = vmatpush1.bf16.msra.mxu0 0
      %3287 = vmatprep.subr.bf16.mxu0 0
      %3288 = vmatpush1.bf16.msra.mxu0 0
      %3289 = vmatprep.subr.bf16.mxu0 0
      %3290 = vmatpush1.bf16.msra.mxu0 0
      %3291 = vmatprep.subr.bf16.mxu0 0
      %3292 = vmatpush1.bf16.msra.mxu0 0
      %3293 = vmatprep.subr.bf16.mxu0 0
      %3294 = vmatpush1.bf16.msra.mxu0 0
      %3295 = vmatprep.mubr.bf16.mxu0 0
      %3296 = vmatmul.mubr.bf16.gmra.mrb[0].mxu0 %v3184
      %v3297 = vpop.f32.mrb[0].mxu0
      %v3298 = vadd.f32 %v3213, %v3297
      %v3299 = vpop.f32.mrb[0].mxu0
      %v3300 = vpop.f32.mrb[0].mxu0
      %v3301 = vadd.f32 %v3213, %v3300
      %v3302 = vpop.f32.mrb[0].mxu0
      %3303 = vmatprep.mubr.bf16.mxu0 0
      %3304 = vmatmul.mubr.bf16.gmra.mrb[0].mxu0 %v3185
      %v3305 = vpop.f32.mrb[0].mxu0
      %v3306 = vadd.f32 %v3213, %v3305
      %v3307 = vpop.f32.mrb[0].mxu0
      %v3308 = vpop.f32.mrb[0].mxu0
      %v3309 = vadd.f32 %v3213, %v3308
      %v3310 = vpop.f32.mrb[0].mxu0
      %3311 = vmatprep.mubr.bf16.mxu0 0
      %3312 = vmatmul.mubr.bf16.gmra.mrb[0].mxu0 %v3186
      %v3313 = vpop.f32.mrb[0].mxu0
      %v3314 = vadd.f32 %v3213, %v3313
      %v3315 = vpop.f32.mrb[0].mxu0
      %v3316 = vpop.f32.mrb[0].mxu0
      %v3317 = vadd.f32 %v3213, %v3316
      %v3318 = vpop.f32.mrb[0].mxu0
      %3319 = vmatprep.mubr.bf16.mxu0 0
      %3320 = vmatmul.mubr.bf16.gmra.mrb[0].mxu0 %v3187
      %v3321 = vpop.f32.mrb[0].mxu0
      %v3322 = vadd.f32 %v3213, %v3321
      %v3323 = vpop.f32.mrb[0].mxu0
      %v3324 = vpop.f32.mrb[0].mxu0
      %v3325 = vadd.f32 %v3213, %v3324
      %v3326 = vpop.f32.mrb[0].mxu0
      %3327 = vmatprep.mubr.bf16.mxu0 0
      %3328 = vmatmul.mubr.bf16.gmra.mrb[0].mxu0 %v3188
      %v3329 = vpop.f32.mrb[0].mxu0
      %v3330 = vadd.f32 %v3213, %v3329
      %v3331 = vpop.f32.mrb[0].mxu0
      %v3332 = vpop.f32.mrb[0].mxu0
      %v3333 = vadd.f32 %v3213, %v3332
      %v3334 = vpop.f32.mrb[0].mxu0
      %3335 = vmatprep.mubr.bf16.mxu0 0
      %3336 = vmatmul.mubr.bf16.gmra.mrb[0].mxu0 %v3189
      %v3337 = vpop.f32.mrb[0].mxu0
      %v3338 = vadd.f32 %v3213, %v3337
      %v3339 = vpop.f32.mrb[0].mxu0
      %v3340 = vpop.f32.mrb[0].mxu0
      %v3341 = vadd.f32 %v3213, %v3340
      %v3342 = vpop.f32.mrb[0].mxu0
      %3343 = vmatprep.mubr.bf16.mxu0 0
      %3344 = vmatmul.mubr.bf16.gmra.mrb[0].mxu0 %v3190
      %v3345 = vpop.f32.mrb[0].mxu0
      %v3346 = vadd.f32 %v3213, %v3345
      %v3347 = vpop.f32.mrb[0].mxu0
      %v3348 = vpop.f32.mrb[0].mxu0
      %v3349 = vadd.f32 %v3213, %v3348
      %v3350 = vpop.f32.mrb[0].mxu0
      %3351 = vmatprep.mubr.bf16.mxu0 0
      %3352 = vmatmul.mubr.bf16.gmra.mrb[0].mxu0 %v3191
      %v3353 = vpop.f32.mrb[0].mxu0
      %v3354 = vadd.f32 %v3213, %v3353
      %v3355 = vpop.f32.mrb[0].mxu0
      %v3356 = vpop.f32.mrb[0].mxu0
      %v3357 = vadd.f32 %v3213, %v3356
      %v3358 = vpop.f32.mrb[0].mxu0
      %3359 = vdwg.mxu0
      %v3360 = vlaneseq
      %v3361 = vand.u32 %v3360, 127
      %vm3362 = vcmp.lt.s32.totalorder %v3361, 3
      %v3363 = vsel %vm3362, %v3298, -1e+30
      %v3364 = vsel %vm3362, %v3301, -1e+30
      %v3365 = vsel %vm3362, %v3306, -1e+30
      %v3366 = vsel %vm3362, %v3309, -1e+30
      %v3367 = vsel %vm3362, %v3314, -1e+30
      %v3368 = vsel %vm3362, %v3317, -1e+30
      %v3369 = vsel %vm3362, %v3322, -1e+30
      %v3370 = vsel %vm3362, %v3325, -1e+30
      %v3371 = vsel %vm3362, %v3330, -1e+30
      %v3372 = vsel %vm3362, %v3333, -1e+30
      %v3373 = vsel %vm3362, %v3338, -1e+30
      %v3374 = vsel %vm3362, %v3341, -1e+30
      %v3375 = vsel %vm3362, %v3346, -1e+30
      %v3376 = vsel %vm3362, %v3349, -1e+30
      %v3377 = vsel %vm3362, %v3354, -1e+30
      %v3378 = vsel %vm3362, %v3357, -1e+30
      %3379 = vmax.xlane.f32.xlu0 %v3363
      %v3380 = vpop.xlane.xlu0 %3379
      %3381 = vmax.xlane.f32.xlu0 %v3364
      %v3382 = vpop.xlane.xlu0 %3381
      %3383 = vmax.xlane.f32.xlu0 %v3365
      %v3384 = vpop.xlane.xlu0 %3383
      %3385 = vmax.xlane.f32.xlu0 %v3366
      %v3386 = vpop.xlane.xlu0 %3385
      %3387 = vmax.xlane.f32.xlu0 %v3367
      %v3388 = vpop.xlane.xlu0 %3387
      %3389 = vmax.xlane.f32.xlu0 %v3368
      %v3390 = vpop.xlane.xlu0 %3389
      %3391 = vmax.xlane.f32.xlu0 %v3369
      %v3392 = vpop.xlane.xlu0 %3391
      %3393 = vmax.xlane.f32.xlu0 %v3370
      %v3394 = vpop.xlane.xlu0 %3393
      %3395 = vmax.xlane.f32.xlu0 %v3371
      %v3396 = vpop.xlane.xlu0 %3395
      %3397 = vmax.xlane.f32.xlu0 %v3372
      %v3398 = vpop.xlane.xlu0 %3397
      %3399 = vmax.xlane.f32.xlu0 %v3373
      %v3400 = vpop.xlane.xlu0 %3399
      %3401 = vmax.xlane.f32.xlu0 %v3374
      %v3402 = vpop.xlane.xlu0 %3401
      %3403 = vmax.xlane.f32.xlu0 %v3375
      %v3404 = vpop.xlane.xlu0 %3403
      %3405 = vmax.xlane.f32.xlu0 %v3376
      %v3406 = vpop.xlane.xlu0 %3405
      %3407 = vmax.xlane.f32.xlu0 %v3377
      %v3408 = vpop.xlane.xlu0 %3407
      %3409 = vmax.xlane.f32.xlu0 %v3378
      %v3410 = vpop.xlane.xlu0 %3409
      %v3411 = vsub.f32 %v3363, %v3380
      %v3412 = vsub.f32 %v3364, %v3382
      %v3413 = vsub.f32 %v3365, %v3384
      %v3414 = vsub.f32 %v3366, %v3386
      %v3415 = vsub.f32 %v3367, %v3388
      %v3416 = vsub.f32 %v3368, %v3390
      %v3417 = vsub.f32 %v3369, %v3392
      %v3418 = vsub.f32 %v3370, %v3394
      %v3419 = vsub.f32 %v3371, %v3396
      %v3420 = vsub.f32 %v3372, %v3398
      %v3421 = vsub.f32 %v3373, %v3400
      %v3422 = vsub.f32 %v3374, %v3402
      %v3423 = vsub.f32 %v3375, %v3404
      %v3424 = vsub.f32 %v3376, %v3406
      %v3425 = vsub.f32 %v3377, %v3408
      %v3426 = vsub.f32 %v3378, %v3410
      %v3427 = vmul.f32 %v3411, 1.442695
      %v3428 = vpow.pop %v3427
      %v3429 = vmul.f32 %v3412, 1.442695
      %v3430 = vpow.pop %v3429
      %v3431 = vmul.f32 %v3413, 1.442695
      %v3432 = vpow.pop %v3431
      %v3433 = vmul.f32 %v3414, 1.442695
      %v3434 = vpow.pop %v3433
      %v3435 = vmul.f32 %v3415, 1.442695
      %v3436 = vpow.pop %v3435
      %v3437 = vmul.f32 %v3416, 1.442695
      %v3438 = vpow.pop %v3437
      %v3439 = vmul.f32 %v3417, 1.442695
      %v3440 = vpow.pop %v3439
      %v3441 = vmul.f32 %v3418, 1.442695
      %v3442 = vpow.pop %v3441
      %v3443 = vmul.f32 %v3419, 1.442695
      %v3444 = vpow.pop %v3443
      %v3445 = vmul.f32 %v3420, 1.442695
      %v3446 = vpow.pop %v3445
      %v3447 = vmul.f32 %v3421, 1.442695
      %v3448 = vpow.pop %v3447
      %v3449 = vmul.f32 %v3422, 1.442695
      %v3450 = vpow.pop %v3449
      %v3451 = vmul.f32 %v3423, 1.442695
      %v3452 = vpow.pop %v3451
      %v3453 = vmul.f32 %v3424, 1.442695
      %v3454 = vpow.pop %v3453
      %v3455 = vmul.f32 %v3425, 1.442695
      %v3456 = vpow.pop %v3455
      %v3457 = vmul.f32 %v3426, 1.442695
      %v3458 = vpow.pop %v3457
      %v3459 = vsel %vm3362, %v3428, 0.0
      %v3460 = vsel %vm3362, %v3430, 0.0
      %v3461 = vsel %vm3362, %v3432, 0.0
      %v3462 = vsel %vm3362, %v3434, 0.0
      %v3463 = vsel %vm3362, %v3436, 0.0
      %v3464 = vsel %vm3362, %v3438, 0.0
      %v3465 = vsel %vm3362, %v3440, 0.0
      %v3466 = vsel %vm3362, %v3442, 0.0
      %v3467 = vsel %vm3362, %v3444, 0.0
      %v3468 = vsel %vm3362, %v3446, 0.0
      %v3469 = vsel %vm3362, %v3448, 0.0
      %v3470 = vsel %vm3362, %v3450, 0.0
      %v3471 = vsel %vm3362, %v3452, 0.0
      %v3472 = vsel %vm3362, %v3454, 0.0
      %v3473 = vsel %vm3362, %v3456, 0.0
      %v3474 = vsel %vm3362, %v3458, 0.0
      %3475 = vadd.xlane.f32.xlu0 %v3459
      %v3476 = vpop.xlane.xlu0 %3475
      %3477 = vadd.xlane.f32.xlu0 %v3460
      %v3478 = vpop.xlane.xlu0 %3477
      %3479 = vadd.xlane.f32.xlu0 %v3461
      %v3480 = vpop.xlane.xlu0 %3479
      %3481 = vadd.xlane.f32.xlu0 %v3462
      %v3482 = vpop.xlane.xlu0 %3481
      %3483 = vadd.xlane.f32.xlu0 %v3463
      %v3484 = vpop.xlane.xlu0 %3483
      %3485 = vadd.xlane.f32.xlu0 %v3464
      %v3486 = vpop.xlane.xlu0 %3485
      %3487 = vadd.xlane.f32.xlu0 %v3465
      %v3488 = vpop.xlane.xlu0 %3487
      %3489 = vadd.xlane.f32.xlu0 %v3466
      %v3490 = vpop.xlane.xlu0 %3489
      %3491 = vadd.xlane.f32.xlu0 %v3467
      %v3492 = vpop.xlane.xlu0 %3491
      %3493 = vadd.xlane.f32.xlu0 %v3468
      %v3494 = vpop.xlane.xlu0 %3493
      %3495 = vadd.xlane.f32.xlu0 %v3469
      %v3496 = vpop.xlane.xlu0 %3495
      %3497 = vadd.xlane.f32.xlu0 %v3470
      %v3498 = vpop.xlane.xlu0 %3497
      %3499 = vadd.xlane.f32.xlu0 %v3471
      %v3500 = vpop.xlane.xlu0 %3499
      %3501 = vadd.xlane.f32.xlu0 %v3472
      %v3502 = vpop.xlane.xlu0 %3501
      %3503 = vadd.xlane.f32.xlu0 %v3473
      %v3504 = vpop.xlane.xlu0 %3503
      %3505 = vadd.xlane.f32.xlu0 %v3474
      %v3506 = vpop.xlane.xlu0 %3505
      %v3507 = vlog2.pop %v3476
      %v3508 = vmul.f32 %v3507, 0.6931472
      %v3509 = vlog2.pop %v3478
      %v3510 = vmul.f32 %v3509, 0.6931472
      %v3511 = vlog2.pop %v3480
      %v3512 = vmul.f32 %v3511, 0.6931472
      %v3513 = vlog2.pop %v3482
      %v3514 = vmul.f32 %v3513, 0.6931472
      %v3515 = vlog2.pop %v3484
      %v3516 = vmul.f32 %v3515, 0.6931472
      %v3517 = vlog2.pop %v3486
      %v3518 = vmul.f32 %v3517, 0.6931472
      %v3519 = vlog2.pop %v3488
      %v3520 = vmul.f32 %v3519, 0.6931472
      %v3521 = vlog2.pop %v3490
      %v3522 = vmul.f32 %v3521, 0.6931472
      %v3523 = vlog2.pop %v3492
      %v3524 = vmul.f32 %v3523, 0.6931472
      %v3525 = vlog2.pop %v3494
      %v3526 = vmul.f32 %v3525, 0.6931472
      %v3527 = vlog2.pop %v3496
      %v3528 = vmul.f32 %v3527, 0.6931472
      %v3529 = vlog2.pop %v3498
      %v3530 = vmul.f32 %v3529, 0.6931472
      %v3531 = vlog2.pop %v3500
      %v3532 = vmul.f32 %v3531, 0.6931472
      %v3533 = vlog2.pop %v3502
      %v3534 = vmul.f32 %v3533, 0.6931472
      %v3535 = vlog2.pop %v3504
      %v3536 = vmul.f32 %v3535, 0.6931472
      %v3537 = vlog2.pop %v3506
      %v3538 = vmul.f32 %v3537, 0.6931472
      %v3539 = vsub.f32 %v3411, %v3508
      %v3540 = vsub.f32 %v3412, %v3510
      %v3541 = vsub.f32 %v3413, %v3512
      %v3542 = vsub.f32 %v3414, %v3514
      %v3543 = vsub.f32 %v3415, %v3516
      %v3544 = vsub.f32 %v3416, %v3518
      %v3545 = vsub.f32 %v3417, %v3520
      %v3546 = vsub.f32 %v3418, %v3522
      %v3547 = vsub.f32 %v3419, %v3524
      %v3548 = vsub.f32 %v3420, %v3526
      %v3549 = vsub.f32 %v3421, %v3528
      %v3550 = vsub.f32 %v3422, %v3530
      %v3551 = vsub.f32 %v3423, %v3532
      %v3552 = vsub.f32 %v3424, %v3534
      %v3553 = vsub.f32 %v3425, %v3536
      %v3554 = vsub.f32 %v3426, %v3538
      %v3555 = vsel %vm3362, %v3539, 0.0
      %v3556 = vsel %vm3362, %v3540, 0.0
      %v3557 = vsel %vm3362, %v3541, 0.0
      %v3558 = vsel %vm3362, %v3542, 0.0
      %v3559 = vsel %vm3362, %v3543, 0.0
      %v3560 = vsel %vm3362, %v3544, 0.0
      %v3561 = vsel %vm3362, %v3545, 0.0
      %v3562 = vsel %vm3362, %v3546, 0.0
      %v3563 = vsel %vm3362, %v3547, 0.0
      %v3564 = vsel %vm3362, %v3548, 0.0
      %v3565 = vsel %vm3362, %v3549, 0.0
      %v3566 = vsel %vm3362, %v3550, 0.0
      %v3567 = vsel %vm3362, %v3551, 0.0
      %v3568 = vsel %vm3362, %v3552, 0.0
      %v3569 = vsel %vm3362, %v3553, 0.0
      %v3570 = vsel %vm3362, %v3554, 0.0
      %3571 = vst [vmem:[%s256] sm:$0xff] %v3555
      %3572 = vst [vmem:[%s256 + $0x8] sm:$0xff] %v3556
      %3573 = vst [vmem:[%s256 + $0x10] sm:$0xff] %v3557
      %3574 = vst [vmem:[%s256 + $0x18] sm:$0xff] %v3558
      %3575 = vst [vmem:[%s256 + $0x20] sm:$0xff] %v3559
      %3576 = vst [vmem:[%s256 + $0x28] sm:$0xff] %v3560
      %3577 = vst [vmem:[%s256 + $0x30] sm:$0xff] %v3561
      %3578 = vst [vmem:[%s256 + $0x38] sm:$0xff] %v3562
      %3579 = vst [vmem:[%s256 + $0x40] sm:$0xff] %v3563
      %3580 = vst [vmem:[%s256 + $0x48] sm:$0xff] %v3564
      %3581 = vst [vmem:[%s256 + $0x50] sm:$0xff] %v3565
      %3582 = vst [vmem:[%s256 + $0x58] sm:$0xff] %v3566
      %3583 = vst [vmem:[%s256 + $0x60] sm:$0xff] %v3567
      %3584 = vst [vmem:[%s256 + $0x68] sm:$0xff] %v3568
      %3585 = vst [vmem:[%s256 + $0x70] sm:$0xff] %v3569
      %3586 = vst [vmem:[%s256 + $0x78] sm:$0xff] %v3570
      %s3587 = smul.u32 16, %s17
      %p3588 = scmp.lt.s32.totalorder %s3587, 31
      %s3589 = scalar_select %p3588, %s3587, 31
      %s3590 = smul.addr %s3589, 8
      %s3591 = scalar_lea.vmem %s6, %s3590
      // Predicated region
      $region45: #{ffnn_forward.1} parent=43 // pred_check
        %p3592 = pneg %p166
      $region46: #{ffnn_forward.1} parent=43 // pred_check_branch
        %3594 = sbr.rel (%p3592) target = $region48
      $region47: #{ffnn_forward.1} parent=43 // pred_region
        %s3595 = smul.u32 16, %s17
      $region48: #{ffnn_forward.1} parent=43 // pred_fallthru
        _
    $region44: #{ffnn_forward.1} parent=5 // pred_fallthru
      _
    %p3596 = scmp.le.s32.totalorder 2, %s12
    // Predicated region
    $region49: #{ffnn_forward.1} parent=5 // pred_check
      %p3597 = pneg %p3596
    $region50: #{ffnn_forward.1} parent=5 // pred_check_branch
      %3599 = sbr.rel (%p3597) target = $region52
    $region51: #{ffnn_forward.1} parent=5 // pred_region
      %s3600 = ssub.s32 %s12, 2
      // Predicated region
      $region53: #{ffnn_forward.1} parent=51 // pred_check
        %p3601 = pneg %p172
      $region54: #{ffnn_forward.1} parent=51 // pred_check_branch
        %3603 = sbr.rel (%p3601) target = $region56
      $region55: #{ffnn_forward.1} parent=51 // pred_region
        %s3604 = smul.u32 16, %s18
        %p3605 = scmp.lt.s32.totalorder %s3604, 31
        %s3606 = scalar_select %p3605, %s3604, 31
        %s3607 = smul.addr %s3606, 8
        %s3608 = scalar_lea.vmem %s6, %s3607
      $region56: #{ffnn_forward.1} parent=51 // pred_fallthru
        _
    $region52: #{ffnn_forward.1} parent=5 // pred_fallthru
      _
  $region6: #{ffnn_forward.1} parent=0 // loop_footer
    %s16 = sadd.s32 1, %s12
  $region7: #{ffnn_forward.1} parent=0 // loop_footer_branch
    %11 = sbr.rel target = $region3
  $region8: #{ffnn_forward.1} parent=0 // loop_exit
    _

</llo_original>
